<compile_context>
chip_gen: v6e
topology: v6e:2x2x1
jax: 0.10.0
libtpu: 0.0.40
codegen_flags: <defaults>
</compile_context>

<pallas_src>
import functools

import jax
import jax.numpy as jnp
from jax.experimental import pallas as pl
from jax.experimental.pallas import tpu as pltpu

# ---------------- tiny synthetic config ----------------
VOCAB = 256
D_MODEL = 128
N_HEADS = 4
HEAD_DIM = D_MODEL // N_HEADS   # 32
D_FF = 256
N_LAYERS = 2
SEQ = 8
BATCH = 2
EPS = 1e-6
DTYPE = jnp.bfloat16


# ---------------- Pallas kernel ----------------
def _rms_normalize(x_f32, w_ref):
    """RMSNorm prologue: x is f32 (N, D), w_ref is a (1, D) ref."""
    var = jnp.mean(x_f32 * x_f32, axis=-1, keepdims=True)
    return x_f32 * jax.lax.rsqrt(var + EPS) * w_ref[...].astype(jnp.float32)


def yi_stack_kernel(x0_ref, cos_ref, sin_ref, bias_ref,
                    an_ref, wqkv_ref, wo_ref, mn_ref, wgu_ref, wd_ref,
                    fn_ref, lmw_ref,
                    o_ref,
                    x_res,
                    *, B, S, H, Dh, F):
    """One grid step == one decoder layer; last step also emits logits."""
    l = pl.program_id(0)
    D = H * Dh

    @pl.when(l == 0)
    def _():
        # Load the embedded tokens into the resident f32 residual stream.
        x_res[...] = x0_ref[...].astype(jnp.float32)

    x = x_res[...]                                            # (N, D) f32

    # ---- attention block: fused RMSNorm prologue + QKV(+rot) matmul ----
    hn = _rms_normalize(x, an_ref).astype(jnp.bfloat16)
    qkv = jnp.dot(hn, wqkv_ref[...],
                  preferred_element_type=jnp.float32)         # (N, 5D) f32

    cos = cos_ref[...]                                        # (N, D) f32
    sin = sin_ref[...]
    # RoPE as pure VPU FMA: rotate-half (and 1/sqrt(Dh) on Q) pre-folded into
    # the wqkv columns, so no cross-lane shuffles here.
    q = qkv[:, 0 * D:1 * D] * cos + qkv[:, 3 * D:4 * D] * sin
    k = qkv[:, 1 * D:2 * D] * cos + qkv[:, 4 * D:5 * D] * sin
    v = qkv[:, 2 * D:3 * D]

    bias = bias_ref[...]                                      # (S, S) additive causal bias
    head_outs = []
    for hh in range(H):                                       # static unroll over heads
        c0 = hh * Dh
        q3 = q[:, c0:c0 + Dh].reshape(B, S, Dh)               # leading-dim split: free
        k3 = k[:, c0:c0 + Dh].reshape(B, S, Dh)
        v3 = v[:, c0:c0 + Dh].reshape(B, S, Dh)
        s = jnp.einsum('bqd,bkd->bqk', q3, k3,
                       preferred_element_type=jnp.float32) + bias
        s = s - jnp.max(s, axis=-1, keepdims=True)
        p = jnp.exp(s)
        p = p * pl.reciprocal(jnp.sum(p, axis=-1, keepdims=True), approx=True)
        o3 = jnp.einsum('bqk,bkd->bqd', p, v3,
                        preferred_element_type=jnp.float32)
        head_outs.append(o3.reshape(B * S, Dh))
    attn = jnp.concatenate(head_outs, axis=-1)                # (N, D) f32

    x = x + jnp.dot(attn.astype(jnp.bfloat16), wo_ref[...],
                    preferred_element_type=jnp.float32)       # residual 1

    # ---- MLP block: fused RMSNorm prologue + gate|up matmul + SwiGLU ----
    hn2 = _rms_normalize(x, mn_ref).astype(jnp.bfloat16)
    gu = jnp.dot(hn2, wgu_ref[...],
                 preferred_element_type=jnp.float32)          # (N, 2F) f32
    g = gu[:, :F]
    u = gu[:, F:]
    act = (g * jax.nn.sigmoid(g)) * u                         # SiLU(gate) * up, f32
    x = x + jnp.dot(act.astype(jnp.bfloat16), wd_ref[...],
                    preferred_element_type=jnp.float32)       # residual 2

    x_res[...] = x                                            # carry to next layer

    # ---- fused final RMSNorm + lm_head, only on the last layer ----
    @pl.when(l == pl.num_programs(0) - 1)
    def _():
        hf = _rms_normalize(x, fn_ref).astype(jnp.bfloat16)
        o_ref[...] = jnp.dot(hf, lmw_ref[...],
                             preferred_element_type=jnp.float32)


# ---------------- pallas_call wrapper ----------------
def yi_decoder_stack(x, p, cos_nd, sin_nd, bias):
    N, D = x.shape
    V = p["lm_head"].shape[1]
    L = p["wqkv"].shape[0]

    def const(shape):
        return pl.BlockSpec(shape, lambda l: (0,) * len(shape))

    def per_layer(*dims):
        return pl.BlockSpec((None,) + dims, lambda l: (l,) + (0,) * len(dims))

    kernel = functools.partial(yi_stack_kernel, B=BATCH, S=SEQ,
                               H=N_HEADS, Dh=HEAD_DIM, F=D_FF)
    return pl.pallas_call(
        kernel,
        out_shape=jax.ShapeDtypeStruct((N, V), jnp.float32),
        grid=(L,),
        in_specs=[
            const((N, D)),                # x0 (embedded tokens)  (16,128) bf16
            const((N, D)),                # cos                    (16,128) f32
            const((N, D)),                # sin
            const((SEQ, SEQ)),            # causal additive bias   (8,8)   f32
            per_layer(1, D),              # attn_norm  (L,1,D)
            per_layer(D, 5 * D),          # wqkv       (L,128,640) bf16
            per_layer(D, D),              # wo         (L,128,128)
            per_layer(1, D),              # mlp_norm   (L,1,D)
            per_layer(D, 2 * D_FF),       # wgu        (L,128,512)
            per_layer(D_FF, D),           # wd         (L,256,128)
            const((1, D)),                # final_norm
            const((D, V)),                # lm_head    (128,256)
        ],
        out_specs=const((N, V)),          # logits written only at the last step
        scratch_shapes=[pltpu.VMEM((N, D), jnp.float32)],   # resident residual
        compiler_params=pltpu.CompilerParams(
            dimension_semantics=("arbitrary",)),            # layers are sequential
    )(x, cos_nd, sin_nd, bias,
      p["attn_norm"], p["wqkv"], p["wo"], p["mlp_norm"], p["wgu"], p["wd"],
      p["final_norm"], p["lm_head"])


# ---------------- model glue (plain JAX) ----------------
def rope_tables(batch, seq, n_heads, head_dim, base=10000.0):
    """cos/sin pre-tiled to the flattened lane-dense layout (B*S, H*Dh)."""
    half = head_dim // 2
    inv_freq = 1.0 / (base ** (jnp.arange(half, dtype=jnp.float32) / half))
    t = jnp.arange(seq, dtype=jnp.float32)
    freqs = jnp.outer(t, inv_freq)                    # (S, half)
    emb = jnp.concatenate([freqs, freqs], axis=-1)    # (S, head_dim)
    cos = jnp.tile(jnp.cos(emb), (batch, n_heads))    # (B*S, H*Dh)
    sin = jnp.tile(jnp.sin(emb), (batch, n_heads))
    return cos, sin


def causal_bias(seq):
    row = jnp.arange(seq)[:, None]
    col = jnp.arange(seq)[None, :]
    return jnp.where(row >= col, 0.0, -1e30).astype(jnp.float32)


def init_params(key):
    """Random-init tiny Yi-style decoder with layer weights stacked on axis 0."""
    def rnd(k, shape, scale=0.02):
        return scale * jax.random.normal(k, shape, jnp.float32)

    half = HEAD_DIM // 2
    q_scale = 1.0 / (HEAD_DIM ** 0.5)

    def rotate_cols(w):
        # Column permutation/negation so that  x @ rotate_cols(W) == rotate_half(x @ W).
        w3 = w.reshape(D_MODEL, N_HEADS, HEAD_DIM)
        rot = jnp.concatenate([-w3[..., half:], w3[..., :half]], axis=-1)
        return rot.reshape(D_MODEL, N_HEADS * HEAD_DIM)

    keys = jax.random.split(key, 2 + N_LAYERS)
    embed = rnd(keys[0], (VOCAB, D_MODEL)).astype(DTYPE)
    lm_head_w = rnd(keys[1], (D_MODEL, VOCAB)).astype(DTYPE)

    wqkv_l, wo_l, wgu_l, wd_l = [], [], [], []
    for i in range(N_LAYERS):
        lk = jax.random.split(keys[2 + i], 6)
        wq = rnd(lk[0], (D_MODEL, D_MODEL)) * q_scale   # fold 1/sqrt(Dh) into Q
        wk = rnd(lk[1], (D_MODEL, D_MODEL))
        wv = rnd(lk[2], (D_MODEL, D_MODEL))
        wqkv_l.append(jnp.concatenate(
            [wq, wk, wv, rotate_cols(wq), rotate_cols(wk)],
            axis=-1).astype(DTYPE))                     # (D, 5D)
        wo_l.append(rnd(lk[3], (D_MODEL, D_MODEL)).astype(DTYPE))
        wgu_l.append(jnp.concatenate(
            [rnd(lk[4], (D_MODEL, D_FF)), rnd(lk[5], (D_MODEL, D_FF))],
            axis=-1).astype(DTYPE))                     # (D, 2F)
        wd_l.append(rnd(jax.random.fold_in(lk[5], 7),
                        (D_FF, D_MODEL)).astype(DTYPE))

    return {
        "embed": embed,
        "lm_head": lm_head_w,
        "final_norm": jnp.ones((1, D_MODEL), DTYPE),
        "attn_norm": jnp.ones((N_LAYERS, 1, D_MODEL), DTYPE),
        "mlp_norm": jnp.ones((N_LAYERS, 1, D_MODEL), DTYPE),
        "wqkv": jnp.stack(wqkv_l),      # (L, D, 5D)
        "wo": jnp.stack(wo_l),          # (L, D, D)
        "wgu": jnp.stack(wgu_l),        # (L, D, 2F)
        "wd": jnp.stack(wd_l),          # (L, F, D)
    }


def forward(params, input_ids, cos_nd, sin_nd, bias):
    B, S = input_ids.shape
    # Embedding gather stays in plain JAX (tiny table; a Pallas DMA gather is
    # not worth it at this size).
    x = jnp.take(params["embed"], input_ids, axis=0).reshape(B * S, D_MODEL)
    logits = yi_decoder_stack(x, params, cos_nd, sin_nd, bias)
    return logits.reshape(B, S, VOCAB)


def simple_tokenize(texts, seq_len=SEQ, vocab=VOCAB):
    # TODO(synk): the HF AutoTokenizer has no Pallas/JAX equivalent; this is a
    # deterministic byte-level stand-in producing (B, S) int32 input_ids.
    if isinstance(texts, str):
        texts = [texts]
    ids = []
    for t in texts:
        toks = [ord(c) % vocab for c in t][:seq_len]
        toks = toks + [0] * (seq_len - len(toks))
        ids.append(toks)
    return jnp.array(ids, dtype=jnp.int32)


if __name__ == "__main__":
    key = jax.random.PRNGKey(0)
    params = init_params(key)
    cos_nd, sin_nd = rope_tables(BATCH, SEQ, N_HEADS, HEAD_DIM)
    bias = causal_bias(SEQ)

    texts = ["Hello Yi model!", "Pallas on TPU."]
    input_ids = simple_tokenize(texts)                        # (2, 8)

    logits = jax.jit(forward)(params, input_ids, cos_nd, sin_nd, bias)
    logits = jax.block_until_ready(logits)

    assert logits.shape == (BATCH, SEQ, VOCAB)
    assert logits.dtype == jnp.float32
    assert bool(jnp.all(jnp.isfinite(logits)))
    print("KERNEL_OK")
</pallas_src>

<mosaic_0001>
module attributes {stable_mosaic.version = 11 : i64} {
  func.func @yi_stack_kernel(%arg0: i32, %arg1: memref<16x128xbf16, #tpu.memory_space<vmem>>, %arg2: memref<16x128xf32, #tpu.memory_space<vmem>>, %arg3: memref<16x128xf32, #tpu.memory_space<vmem>>, %arg4: memref<8x8xf32, #tpu.memory_space<vmem>>, %arg5: memref<1x1x128xbf16, #tpu.memory_space<vmem>>, %arg6: memref<1x128x640xbf16, #tpu.memory_space<vmem>>, %arg7: memref<1x128x128xbf16, #tpu.memory_space<vmem>>, %arg8: memref<1x1x128xbf16, #tpu.memory_space<vmem>>, %arg9: memref<1x128x512xbf16, #tpu.memory_space<vmem>>, %arg10: memref<1x256x128xbf16, #tpu.memory_space<vmem>>, %arg11: memref<1x128xbf16, #tpu.memory_space<vmem>>, %arg12: memref<128x256xbf16, #tpu.memory_space<vmem>>, %arg13: memref<16x256xf32, #tpu.memory_space<vmem>>, %arg14: memref<16x128xf32, #tpu.memory_space<vmem>>) attributes {dimension_semantics = [#tpu.dimension_semantics<arbitrary>], iteration_bounds = array<i64: 2>, scalar_prefetch = 0 : i64, scratch_operands = 1 : i64, tpu.core_type = #tpu.core_type<tc>, window_params = [{pipeline_mode = #tpu.pipeline_mode<synchronous>, transform_indices = @transform_0, window_bounds = array<i64: 16, 128>}, {pipeline_mode = #tpu.pipeline_mode<synchronous>, transform_indices = @transform_1, window_bounds = array<i64: 16, 128>}, {pipeline_mode = #tpu.pipeline_mode<synchronous>, transform_indices = @transform_2, window_bounds = array<i64: 16, 128>}, {pipeline_mode = #tpu.pipeline_mode<synchronous>, transform_indices = @transform_3, window_bounds = array<i64: 8, 8>}, {transform_indices = @transform_4, window_bounds = array<i64: 1, 1, 128>}, {transform_indices = @transform_5, window_bounds = array<i64: 1, 128, 640>}, {transform_indices = @transform_6, window_bounds = array<i64: 1, 128, 128>}, {transform_indices = @transform_7, window_bounds = array<i64: 1, 1, 128>}, {transform_indices = @transform_8, window_bounds = array<i64: 1, 128, 512>}, {transform_indices = @transform_9, window_bounds = array<i64: 1, 256, 128>}, {pipeline_mode = #tpu.pipeline_mode<synchronous>, transform_indices = @transform_10, window_bounds = array<i64: 1, 128>}, {pipeline_mode = #tpu.pipeline_mode<synchronous>, transform_indices = @transform_11, window_bounds = array<i64: 128, 256>}, {pipeline_mode = #tpu.pipeline_mode<synchronous>, transform_indices = @transform_12, window_bounds = array<i64: 16, 256>}]} {
    %c0_i32 = arith.constant 0 : i32
    %0 = arith.cmpi eq, %arg0, %c0_i32 : i32
    %1 = arith.extui %0 : i1 to i32
    %c0_i32_0 = arith.constant 0 : i32
    %2 = arith.cmpi ne, %1, %c0_i32_0 : i32
    scf.if %2 {
      %c0_55 = arith.constant 0 : index
      %c0_56 = arith.constant 0 : index
      %168 = vector.load %arg1[%c0_55, %c0_56] : memref<16x128xbf16, #tpu.memory_space<vmem>>, vector<16x128xbf16>
      %169 = arith.extf %168 : vector<16x128xbf16> to vector<16x128xf32>
      %c0_57 = arith.constant 0 : index
      %c0_58 = arith.constant 0 : index
      %170 = vector.load %arg14[%c0_57, %c0_58] : memref<16x128xf32, #tpu.memory_space<vmem>>, vector<16x128xf32>
      tpu.vector_store %arg14[%c0_57, %c0_58], %169 {strides = array<i32>} : memref<16x128xf32, #tpu.memory_space<vmem>>, vector<16x128xf32>,
    } else {
    }
    %c0 = arith.constant 0 : index
    %c0_1 = arith.constant 0 : index
    %3 = vector.load %arg14[%c0, %c0_1] : memref<16x128xf32, #tpu.memory_space<vmem>>, vector<16x128xf32>
    %4 = arith.mulf %3, %3 : vector<16x128xf32>
    %cst = arith.constant dense<0.000000e+00> : vector<16xf32>
    %5 = vector.multi_reduction <add>, %4, %cst [1] : vector<16x128xf32> to vector<16xf32>
    %6 = vector.shape_cast %5 : vector<16xf32> to vector<16x1xf32>
    %cst_2 = arith.constant 1.280000e+02 : f32
    %7 = vector.broadcast %cst_2 : f32 to vector<16x1xf32>
    %8 = arith.divf %6, %7 : vector<16x1xf32>
    %cst_3 = arith.constant 9.99999997E-7 : f32
    %9 = vector.broadcast %cst_3 : f32 to vector<16x1xf32>
    %10 = arith.addf %8, %9 : vector<16x1xf32>
    %11 = math.rsqrt %10 : vector<16x1xf32>
    %12 = vector.broadcast %11 : vector<16x1xf32> to vector<16x128xf32>
    %13 = arith.mulf %3, %12 : vector<16x128xf32>
    %c0_4 = arith.constant 0 : index
    %c0_5 = arith.constant 0 : index
    %c0_6 = arith.constant 0 : index
    %14 = vector.load %arg5[%c0_4, %c0_5, %c0_6] : memref<1x1x128xbf16, #tpu.memory_space<vmem>>, vector<1x1x128xbf16>
    %15 = vector.shape_cast %14 : vector<1x1x128xbf16> to vector<1x128xbf16>
    %16 = arith.extf %15 : vector<1x128xbf16> to vector<1x128xf32>
    %17 = vector.broadcast %16 : vector<1x128xf32> to vector<16x128xf32>
    %18 = arith.mulf %13, %17 : vector<16x128xf32>
    %19 = arith.truncf %18 : vector<16x128xf32> to vector<16x128xbf16>
    %c0_7 = arith.constant 0 : index
    %c0_8 = arith.constant 0 : index
    %c0_9 = arith.constant 0 : index
    %20 = vector.load %arg6[%c0_7, %c0_8, %c0_9] : memref<1x128x640xbf16, #tpu.memory_space<vmem>>, vector<1x128x640xbf16>
    %21 = vector.shape_cast %20 : vector<1x128x640xbf16> to vector<128x640xbf16>
    %cst_10 = arith.constant dense<0.000000e+00> : vector<16x640xf32>
    %22 = tpu.matmul %19, %21, %cst_10 {dimension_numbers = #tpu.dot_dimension_numbers<[1], [0], [0], [1], [0, 0, 1, 1], [], []>} : vector<16x128xbf16>, vector<128x640xbf16>, vector<16x640xf32> -> vector<16x640xf32>
    %c0_11 = arith.constant 0 : index
    %c0_12 = arith.constant 0 : index
    %23 = vector.load %arg2[%c0_11, %c0_12] : memref<16x128xf32, #tpu.memory_space<vmem>>, vector<16x128xf32>
    %c0_13 = arith.constant 0 : index
    %c0_14 = arith.constant 0 : index
    %24 = vector.load %arg3[%c0_13, %c0_14] : memref<16x128xf32, #tpu.memory_space<vmem>>, vector<16x128xf32>
    %25 = vector.extract_strided_slice %22 {offsets = [0, 0], sizes = [16, 128], strides = [1, 1]} : vector<16x640xf32> to vector<16x128xf32>
    %26 = arith.mulf %25, %23 : vector<16x128xf32>
    %27 = vector.extract_strided_slice %22 {offsets = [0, 384], sizes = [16, 128], strides = [1, 1]} : vector<16x640xf32> to vector<16x128xf32>
    %28 = arith.mulf %27, %24 : vector<16x128xf32>
    %29 = arith.addf %26, %28 : vector<16x128xf32>
    %30 = vector.extract_strided_slice %22 {offsets = [0, 128], sizes = [16, 128], strides = [1, 1]} : vector<16x640xf32> to vector<16x128xf32>
    %31 = arith.mulf %30, %23 : vector<16x128xf32>
    %32 = vector.extract_strided_slice %22 {offsets = [0, 512], sizes = [16, 128], strides = [1, 1]} : vector<16x640xf32> to vector<16x128xf32>
    %33 = arith.mulf %32, %24 : vector<16x128xf32>
    %34 = arith.addf %31, %33 : vector<16x128xf32>
    %35 = vector.extract_strided_slice %22 {offsets = [0, 256], sizes = [16, 128], strides = [1, 1]} : vector<16x640xf32> to vector<16x128xf32>
    %c0_15 = arith.constant 0 : index
    %c0_16 = arith.constant 0 : index
    %36 = vector.load %arg4[%c0_15, %c0_16] : memref<8x8xf32, #tpu.memory_space<vmem>>, vector<8x8xf32>
    %37 = vector.extract_strided_slice %29 {offsets = [0, 0], sizes = [16, 32], strides = [1, 1]} : vector<16x128xf32> to vector<16x32xf32>
    %38 = vector.shape_cast %37 : vector<16x32xf32> to vector<2x8x32xf32>
    %39 = vector.extract_strided_slice %34 {offsets = [0, 0], sizes = [16, 32], strides = [1, 1]} : vector<16x128xf32> to vector<16x32xf32>
    %40 = vector.shape_cast %39 : vector<16x32xf32> to vector<2x8x32xf32>
    %41 = vector.extract_strided_slice %35 {offsets = [0, 0], sizes = [16, 32], strides = [1, 1]} : vector<16x128xf32> to vector<16x32xf32>
    %42 = vector.shape_cast %41 : vector<16x32xf32> to vector<2x8x32xf32>
    "tpu.trace_start"() <{level = 10 : i32, message = "bqd,bkd->bqk"}> : () -> ()
    %cst_17 = arith.constant dense<0.000000e+00> : vector<2x8x8xf32>
    %43 = tpu.matmul %38, %40, %cst_17 {dimension_numbers = #tpu.dot_dimension_numbers<[2], [2], [1], [1], [0, 0, 0, 1, 1, 1], [0], [0]>} : vector<2x8x32xf32>, vector<2x8x32xf32>, vector<2x8x8xf32> -> vector<2x8x8xf32>
    "tpu.trace_stop"() : () -> ()
    %44 = vector.shape_cast %36 : vector<8x8xf32> to vector<1x8x8xf32>
    %45 = vector.broadcast %44 : vector<1x8x8xf32> to vector<2x8x8xf32>
    %46 = arith.addf %43, %45 : vector<2x8x8xf32>
    %cst_18 = arith.constant dense<0xFF800000> : vector<2x8xf32>
    %47 = vector.multi_reduction <maximumf>, %46, %cst_18 [2] : vector<2x8x8xf32> to vector<2x8xf32>
    %48 = vector.shape_cast %47 : vector<2x8xf32> to vector<2x8x1xf32>
    %49 = vector.broadcast %48 : vector<2x8x1xf32> to vector<2x8x8xf32>
    %50 = arith.subf %46, %49 : vector<2x8x8xf32>
    %51 = math.exp %50 : vector<2x8x8xf32>
    %cst_19 = arith.constant dense<0.000000e+00> : vector<2x8xf32>
    %52 = vector.multi_reduction <add>, %51, %cst_19 [2] : vector<2x8x8xf32> to vector<2x8xf32>
    %53 = vector.shape_cast %52 : vector<2x8xf32> to vector<2x8x1xf32>
    %54 = tpu.reciprocal %53 {approx = true} : vector<2x8x1xf32> -> vector<2x8x1xf32>
    %55 = vector.broadcast %54 : vector<2x8x1xf32> to vector<2x8x8xf32>
    %56 = arith.mulf %51, %55 : vector<2x8x8xf32>
    "tpu.trace_start"() <{level = 10 : i32, message = "bqk,bkd->bqd"}> : () -> ()
    %cst_20 = arith.constant dense<0.000000e+00> : vector<2x8x32xf32>
    %57 = tpu.matmul %56, %42, %cst_20 {dimension_numbers = #tpu.dot_dimension_numbers<[2], [1], [1], [2], [0, 0, 0, 1, 1, 2], [0], [0]>} : vector<2x8x8xf32>, vector<2x8x32xf32>, vector<2x8x32xf32> -> vector<2x8x32xf32>
    "tpu.trace_stop"() : () -> ()
    %58 = vector.shape_cast %57 : vector<2x8x32xf32> to vector<16x32xf32>
    %59 = vector.extract_strided_slice %29 {offsets = [0, 32], sizes = [16, 32], strides = [1, 1]} : vector<16x128xf32> to vector<16x32xf32>
    %60 = vector.shape_cast %59 : vector<16x32xf32> to vector<2x8x32xf32>
    %61 = vector.extract_strided_slice %34 {offsets = [0, 32], sizes = [16, 32], strides = [1, 1]} : vector<16x128xf32> to vector<16x32xf32>
    %62 = vector.shape_cast %61 : vector<16x32xf32> to vector<2x8x32xf32>
    %63 = vector.extract_strided_slice %35 {offsets = [0, 32], sizes = [16, 32], strides = [1, 1]} : vector<16x128xf32> to vector<16x32xf32>
    %64 = vector.shape_cast %63 : vector<16x32xf32> to vector<2x8x32xf32>
    "tpu.trace_start"() <{level = 10 : i32, message = "bqd,bkd->bqk"}> : () -> ()
    %cst_21 = arith.constant dense<0.000000e+00> : vector<2x8x8xf32>
    %65 = tpu.matmul %60, %62, %cst_21 {dimension_numbers = #tpu.dot_dimension_numbers<[2], [2], [1], [1], [0, 0, 0, 1, 1, 1], [0], [0]>} : vector<2x8x32xf32>, vector<2x8x32xf32>, vector<2x8x8xf32> -> vector<2x8x8xf32>
    "tpu.trace_stop"() : () -> ()
    %66 = vector.shape_cast %36 : vector<8x8xf32> to vector<1x8x8xf32>
    %67 = vector.broadcast %66 : vector<1x8x8xf32> to vector<2x8x8xf32>
    %68 = arith.addf %65, %67 : vector<2x8x8xf32>
    %cst_22 = arith.constant dense<0xFF800000> : vector<2x8xf32>
    %69 = vector.multi_reduction <maximumf>, %68, %cst_22 [2] : vector<2x8x8xf32> to vector<2x8xf32>
    %70 = vector.shape_cast %69 : vector<2x8xf32> to vector<2x8x1xf32>
    %71 = vector.broadcast %70 : vector<2x8x1xf32> to vector<2x8x8xf32>
    %72 = arith.subf %68, %71 : vector<2x8x8xf32>
    %73 = math.exp %72 : vector<2x8x8xf32>
    %cst_23 = arith.constant dense<0.000000e+00> : vector<2x8xf32>
    %74 = vector.multi_reduction <add>, %73, %cst_23 [2] : vector<2x8x8xf32> to vector<2x8xf32>
    %75 = vector.shape_cast %74 : vector<2x8xf32> to vector<2x8x1xf32>
    %76 = tpu.reciprocal %75 {approx = true} : vector<2x8x1xf32> -> vector<2x8x1xf32>
    %77 = vector.broadcast %76 : vector<2x8x1xf32> to vector<2x8x8xf32>
    %78 = arith.mulf %73, %77 : vector<2x8x8xf32>
    "tpu.trace_start"() <{level = 10 : i32, message = "bqk,bkd->bqd"}> : () -> ()
    %cst_24 = arith.constant dense<0.000000e+00> : vector<2x8x32xf32>
    %79 = tpu.matmul %78, %64, %cst_24 {dimension_numbers = #tpu.dot_dimension_numbers<[2], [1], [1], [2], [0, 0, 0, 1, 1, 2], [0], [0]>} : vector<2x8x8xf32>, vector<2x8x32xf32>, vector<2x8x32xf32> -> vector<2x8x32xf32>
    "tpu.trace_stop"() : () -> ()
    %80 = vector.shape_cast %79 : vector<2x8x32xf32> to vector<16x32xf32>
    %81 = vector.extract_strided_slice %29 {offsets = [0, 64], sizes = [16, 32], strides = [1, 1]} : vector<16x128xf32> to vector<16x32xf32>
    %82 = vector.shape_cast %81 : vector<16x32xf32> to vector<2x8x32xf32>
    %83 = vector.extract_strided_slice %34 {offsets = [0, 64], sizes = [16, 32], strides = [1, 1]} : vector<16x128xf32> to vector<16x32xf32>
    %84 = vector.shape_cast %83 : vector<16x32xf32> to vector<2x8x32xf32>
    %85 = vector.extract_strided_slice %35 {offsets = [0, 64], sizes = [16, 32], strides = [1, 1]} : vector<16x128xf32> to vector<16x32xf32>
    %86 = vector.shape_cast %85 : vector<16x32xf32> to vector<2x8x32xf32>
    "tpu.trace_start"() <{level = 10 : i32, message = "bqd,bkd->bqk"}> : () -> ()
    %cst_25 = arith.constant dense<0.000000e+00> : vector<2x8x8xf32>
    %87 = tpu.matmul %82, %84, %cst_25 {dimension_numbers = #tpu.dot_dimension_numbers<[2], [2], [1], [1], [0, 0, 0, 1, 1, 1], [0], [0]>} : vector<2x8x32xf32>, vector<2x8x32xf32>, vector<2x8x8xf32> -> vector<2x8x8xf32>
    "tpu.trace_stop"() : () -> ()
    %88 = vector.shape_cast %36 : vector<8x8xf32> to vector<1x8x8xf32>
    %89 = vector.broadcast %88 : vector<1x8x8xf32> to vector<2x8x8xf32>
    %90 = arith.addf %87, %89 : vector<2x8x8xf32>
    %cst_26 = arith.constant dense<0xFF800000> : vector<2x8xf32>
    %91 = vector.multi_reduction <maximumf>, %90, %cst_26 [2] : vector<2x8x8xf32> to vector<2x8xf32>
    %92 = vector.shape_cast %91 : vector<2x8xf32> to vector<2x8x1xf32>
    %93 = vector.broadcast %92 : vector<2x8x1xf32> to vector<2x8x8xf32>
    %94 = arith.subf %90, %93 : vector<2x8x8xf32>
    %95 = math.exp %94 : vector<2x8x8xf32>
    %cst_27 = arith.constant dense<0.000000e+00> : vector<2x8xf32>
    %96 = vector.multi_reduction <add>, %95, %cst_27 [2] : vector<2x8x8xf32> to vector<2x8xf32>
    %97 = vector.shape_cast %96 : vector<2x8xf32> to vector<2x8x1xf32>
    %98 = tpu.reciprocal %97 {approx = true} : vector<2x8x1xf32> -> vector<2x8x1xf32>
    %99 = vector.broadcast %98 : vector<2x8x1xf32> to vector<2x8x8xf32>
    %100 = arith.mulf %95, %99 : vector<2x8x8xf32>
    "tpu.trace_start"() <{level = 10 : i32, message = "bqk,bkd->bqd"}> : () -> ()
    %cst_28 = arith.constant dense<0.000000e+00> : vector<2x8x32xf32>
    %101 = tpu.matmul %100, %86, %cst_28 {dimension_numbers = #tpu.dot_dimension_numbers<[2], [1], [1], [2], [0, 0, 0, 1, 1, 2], [0], [0]>} : vector<2x8x8xf32>, vector<2x8x32xf32>, vector<2x8x32xf32> -> vector<2x8x32xf32>
    "tpu.trace_stop"() : () -> ()
    %102 = vector.shape_cast %101 : vector<2x8x32xf32> to vector<16x32xf32>
    %103 = vector.extract_strided_slice %29 {offsets = [0, 96], sizes = [16, 32], strides = [1, 1]} : vector<16x128xf32> to vector<16x32xf32>
    %104 = vector.shape_cast %103 : vector<16x32xf32> to vector<2x8x32xf32>
    %105 = vector.extract_strided_slice %34 {offsets = [0, 96], sizes = [16, 32], strides = [1, 1]} : vector<16x128xf32> to vector<16x32xf32>
    %106 = vector.shape_cast %105 : vector<16x32xf32> to vector<2x8x32xf32>
    %107 = vector.extract_strided_slice %35 {offsets = [0, 96], sizes = [16, 32], strides = [1, 1]} : vector<16x128xf32> to vector<16x32xf32>
    %108 = vector.shape_cast %107 : vector<16x32xf32> to vector<2x8x32xf32>
    "tpu.trace_start"() <{level = 10 : i32, message = "bqd,bkd->bqk"}> : () -> ()
    %cst_29 = arith.constant dense<0.000000e+00> : vector<2x8x8xf32>
    %109 = tpu.matmul %104, %106, %cst_29 {dimension_numbers = #tpu.dot_dimension_numbers<[2], [2], [1], [1], [0, 0, 0, 1, 1, 1], [0], [0]>} : vector<2x8x32xf32>, vector<2x8x32xf32>, vector<2x8x8xf32> -> vector<2x8x8xf32>
    "tpu.trace_stop"() : () -> ()
    %110 = vector.shape_cast %36 : vector<8x8xf32> to vector<1x8x8xf32>
    %111 = vector.broadcast %110 : vector<1x8x8xf32> to vector<2x8x8xf32>
    %112 = arith.addf %109, %111 : vector<2x8x8xf32>
    %cst_30 = arith.constant dense<0xFF800000> : vector<2x8xf32>
    %113 = vector.multi_reduction <maximumf>, %112, %cst_30 [2] : vector<2x8x8xf32> to vector<2x8xf32>
    %114 = vector.shape_cast %113 : vector<2x8xf32> to vector<2x8x1xf32>
    %115 = vector.broadcast %114 : vector<2x8x1xf32> to vector<2x8x8xf32>
    %116 = arith.subf %112, %115 : vector<2x8x8xf32>
    %117 = math.exp %116 : vector<2x8x8xf32>
    %cst_31 = arith.constant dense<0.000000e+00> : vector<2x8xf32>
    %118 = vector.multi_reduction <add>, %117, %cst_31 [2] : vector<2x8x8xf32> to vector<2x8xf32>
    %119 = vector.shape_cast %118 : vector<2x8xf32> to vector<2x8x1xf32>
    %120 = tpu.reciprocal %119 {approx = true} : vector<2x8x1xf32> -> vector<2x8x1xf32>
    %121 = vector.broadcast %120 : vector<2x8x1xf32> to vector<2x8x8xf32>
    %122 = arith.mulf %117, %121 : vector<2x8x8xf32>
    "tpu.trace_start"() <{level = 10 : i32, message = "bqk,bkd->bqd"}> : () -> ()
    %cst_32 = arith.constant dense<0.000000e+00> : vector<2x8x32xf32>
    %123 = tpu.matmul %122, %108, %cst_32 {dimension_numbers = #tpu.dot_dimension_numbers<[2], [1], [1], [2], [0, 0, 0, 1, 1, 2], [0], [0]>} : vector<2x8x8xf32>, vector<2x8x32xf32>, vector<2x8x32xf32> -> vector<2x8x32xf32>
    "tpu.trace_stop"() : () -> ()
    %124 = vector.shape_cast %123 : vector<2x8x32xf32> to vector<16x32xf32>
    %125 = tpu.concatenate %58, %80, %102, %124 in 1 : vector<16x32xf32>, vector<16x32xf32>, vector<16x32xf32>, vector<16x32xf32> -> vector<16x128xf32>
    %126 = arith.truncf %125 : vector<16x128xf32> to vector<16x128xbf16>
    %c0_33 = arith.constant 0 : index
    %c0_34 = arith.constant 0 : index
    %c0_35 = arith.constant 0 : index
    %127 = vector.load %arg7[%c0_33, %c0_34, %c0_35] : memref<1x128x128xbf16, #tpu.memory_space<vmem>>, vector<1x128x128xbf16>
    %128 = vector.shape_cast %127 : vector<1x128x128xbf16> to vector<128x128xbf16>
    %cst_36 = arith.constant dense<0.000000e+00> : vector<16x128xf32>
    %129 = tpu.matmul %126, %128, %cst_36 {dimension_numbers = #tpu.dot_dimension_numbers<[1], [0], [0], [1], [0, 0, 1, 1], [], []>} : vector<16x128xbf16>, vector<128x128xbf16>, vector<16x128xf32> -> vector<16x128xf32>
    %130 = arith.addf %3, %129 : vector<16x128xf32>
    %131 = arith.mulf %130, %130 : vector<16x128xf32>
    %cst_37 = arith.constant dense<0.000000e+00> : vector<16xf32>
    %132 = vector.multi_reduction <add>, %131, %cst_37 [1] : vector<16x128xf32> to vector<16xf32>
    %133 = vector.shape_cast %132 : vector<16xf32> to vector<16x1xf32>
    %cst_38 = arith.constant 1.280000e+02 : f32
    %134 = vector.broadcast %cst_38 : f32 to vector<16x1xf32>
    %135 = arith.divf %133, %134 : vector<16x1xf32>
    %cst_39 = arith.constant 9.99999997E-7 : f32
    %136 = vector.broadcast %cst_39 : f32 to vector<16x1xf32>
    %137 = arith.addf %135, %136 : vector<16x1xf32>
    %138 = math.rsqrt %137 : vector<16x1xf32>
    %139 = vector.broadcast %138 : vector<16x1xf32> to vector<16x128xf32>
    %140 = arith.mulf %130, %139 : vector<16x128xf32>
    %c0_40 = arith.constant 0 : index
    %c0_41 = arith.constant 0 : index
    %c0_42 = arith.constant 0 : index
    %141 = vector.load %arg8[%c0_40, %c0_41, %c0_42] : memref<1x1x128xbf16, #tpu.memory_space<vmem>>, vector<1x1x128xbf16>
    %142 = vector.shape_cast %141 : vector<1x1x128xbf16> to vector<1x128xbf16>
    %143 = arith.extf %142 : vector<1x128xbf16> to vector<1x128xf32>
    %144 = vector.broadcast %143 : vector<1x128xf32> to vector<16x128xf32>
    %145 = arith.mulf %140, %144 : vector<16x128xf32>
    %146 = arith.truncf %145 : vector<16x128xf32> to vector<16x128xbf16>
    %c0_43 = arith.constant 0 : index
    %c0_44 = arith.constant 0 : index
    %c0_45 = arith.constant 0 : index
    %147 = vector.load %arg9[%c0_43, %c0_44, %c0_45] : memref<1x128x512xbf16, #tpu.memory_space<vmem>>, vector<1x128x512xbf16>
    %148 = vector.shape_cast %147 : vector<1x128x512xbf16> to vector<128x512xbf16>
    %cst_46 = arith.constant dense<0.000000e+00> : vector<16x512xf32>
    %149 = tpu.matmul %146, %148, %cst_46 {dimension_numbers = #tpu.dot_dimension_numbers<[1], [0], [0], [1], [0, 0, 1, 1], [], []>} : vector<16x128xbf16>, vector<128x512xbf16>, vector<16x512xf32> -> vector<16x512xf32>
    %150 = vector.extract_strided_slice %149 {offsets = [0, 0], sizes = [16, 256], strides = [1, 1]} : vector<16x512xf32> to vector<16x256xf32>
    %151 = vector.extract_strided_slice %149 {offsets = [0, 256], sizes = [16, 256], strides = [1, 1]} : vector<16x512xf32> to vector<16x256xf32>
    %152 = arith.negf %150 : vector<16x256xf32>
    %153 = math.exp %152 : vector<16x256xf32>
    %cst_47 = arith.constant 1.000000e+00 : f32
    %154 = vector.broadcast %cst_47 : f32 to vector<16x256xf32>
    %155 = arith.addf %154, %153 : vector<16x256xf32>
    %156 = arith.divf %154, %155 : vector<16x256xf32>
    %157 = arith.mulf %150, %156 : vector<16x256xf32>
    %158 = arith.mulf %157, %151 : vector<16x256xf32>
    %159 = arith.truncf %158 : vector<16x256xf32> to vector<16x256xbf16>
    %c0_48 = arith.constant 0 : index
    %c0_49 = arith.constant 0 : index
    %c0_50 = arith.constant 0 : index
    %160 = vector.load %arg10[%c0_48, %c0_49, %c0_50] : memref<1x256x128xbf16, #tpu.memory_space<vmem>>, vector<1x256x128xbf16>
    %161 = vector.shape_cast %160 : vector<1x256x128xbf16> to vector<256x128xbf16>
    %cst_51 = arith.constant dense<0.000000e+00> : vector<16x128xf32>
    %162 = tpu.matmul %159, %161, %cst_51 {dimension_numbers = #tpu.dot_dimension_numbers<[1], [0], [0], [1], [0, 0, 1, 1], [], []>} : vector<16x256xbf16>, vector<256x128xbf16>, vector<16x128xf32> -> vector<16x128xf32>
    %163 = arith.addf %130, %162 : vector<16x128xf32>
    %c0_52 = arith.constant 0 : index
    %c0_53 = arith.constant 0 : index
    %164 = vector.load %arg14[%c0_52, %c0_53] : memref<16x128xf32, #tpu.memory_space<vmem>>, vector<16x128xf32>
    tpu.vector_store %arg14[%c0_52, %c0_53], %163 {strides = array<i32>} : memref<16x128xf32, #tpu.memory_space<vmem>>, vector<16x128xf32>,
    %c1_i32 = arith.constant 1 : i32
    %165 = arith.cmpi eq, %arg0, %c1_i32 : i32
    %166 = arith.extui %165 : i1 to i32
    %c0_i32_54 = arith.constant 0 : i32
    %167 = arith.cmpi ne, %166, %c0_i32_54 : i32
    scf.if %167 {
      %168 = arith.mulf %163, %163 : vector<16x128xf32>
      %cst_55 = arith.constant dense<0.000000e+00> : vector<16xf32>
      %169 = vector.multi_reduction <add>, %168, %cst_55 [1] : vector<16x128xf32> to vector<16xf32>
      %170 = vector.shape_cast %169 : vector<16xf32> to vector<16x1xf32>
      %cst_56 = arith.constant 1.280000e+02 : f32
      %171 = vector.broadcast %cst_56 : f32 to vector<16x1xf32>
      %172 = arith.divf %170, %171 : vector<16x1xf32>
      %cst_57 = arith.constant 9.99999997E-7 : f32
      %173 = vector.broadcast %cst_57 : f32 to vector<16x1xf32>
      %174 = arith.addf %172, %173 : vector<16x1xf32>
      %175 = math.rsqrt %174 : vector<16x1xf32>
      %176 = vector.broadcast %175 : vector<16x1xf32> to vector<16x128xf32>
      %177 = arith.mulf %163, %176 : vector<16x128xf32>
      %c0_58 = arith.constant 0 : index
      %c0_59 = arith.constant 0 : index
      %178 = vector.load %arg11[%c0_58, %c0_59] : memref<1x128xbf16, #tpu.memory_space<vmem>>, vector<1x128xbf16>
      %179 = arith.extf %178 : vector<1x128xbf16> to vector<1x128xf32>
      %180 = vector.broadcast %179 : vector<1x128xf32> to vector<16x128xf32>
      %181 = arith.mulf %177, %180 : vector<16x128xf32>
      %182 = arith.truncf %181 : vector<16x128xf32> to vector<16x128xbf16>
      %c0_60 = arith.constant 0 : index
      %c0_61 = arith.constant 0 : index
      %183 = vector.load %arg12[%c0_60, %c0_61] : memref<128x256xbf16, #tpu.memory_space<vmem>>, vector<128x256xbf16>
      %cst_62 = arith.constant dense<0.000000e+00> : vector<16x256xf32>
      %184 = tpu.matmul %182, %183, %cst_62 {dimension_numbers = #tpu.dot_dimension_numbers<[1], [0], [0], [1], [0, 0, 1, 1], [], []>} : vector<16x128xbf16>, vector<128x256xbf16>, vector<16x256xf32> -> vector<16x256xf32>
      %c0_63 = arith.constant 0 : index
      %c0_64 = arith.constant 0 : index
      %185 = vector.load %arg13[%c0_63, %c0_64] : memref<16x256xf32, #tpu.memory_space<vmem>>, vector<16x256xf32>
      tpu.vector_store %arg13[%c0_63, %c0_64], %184 {strides = array<i32>} : memref<16x256xf32, #tpu.memory_space<vmem>>, vector<16x256xf32>,
    } else {
    }
    return
  }
  func.func @transform_0(%arg0: i32) -> (i32, i32) {
    %c0_i32 = arith.constant 0 : i32
    %c0_i32_0 = arith.constant 0 : i32
    %c0_i32_1 = arith.constant 0 : i32
    return %c0_i32, %c0_i32_0 : i32, i32
  }
  func.func @transform_1(%arg0: i32) -> (i32, i32) {
    %c0_i32 = arith.constant 0 : i32
    %c0_i32_0 = arith.constant 0 : i32
    %c0_i32_1 = arith.constant 0 : i32
    return %c0_i32, %c0_i32_0 : i32, i32
  }
  func.func @transform_2(%arg0: i32) -> (i32, i32) {
    %c0_i32 = arith.constant 0 : i32
    %c0_i32_0 = arith.constant 0 : i32
    %c0_i32_1 = arith.constant 0 : i32
    return %c0_i32, %c0_i32_0 : i32, i32
  }
  func.func @transform_3(%arg0: i32) -> (i32, i32) {
    %c0_i32 = arith.constant 0 : i32
    %c0_i32_0 = arith.constant 0 : i32
    %c0_i32_1 = arith.constant 0 : i32
    return %c0_i32, %c0_i32_0 : i32, i32
  }
  func.func @transform_4(%arg0: i32) -> (i32, i32, i32) {
    %c0_i32 = arith.constant 0 : i32
    %c0_i32_0 = arith.constant 0 : i32
    %c0_i32_1 = arith.constant 0 : i32
    return %arg0, %c0_i32, %c0_i32_0 : i32, i32, i32
  }
  func.func @transform_5(%arg0: i32) -> (i32, i32, i32) {
    %c0_i32 = arith.constant 0 : i32
    %c0_i32_0 = arith.constant 0 : i32
    %c0_i32_1 = arith.constant 0 : i32
    return %arg0, %c0_i32, %c0_i32_0 : i32, i32, i32
  }
  func.func @transform_6(%arg0: i32) -> (i32, i32, i32) {
    %c0_i32 = arith.constant 0 : i32
    %c0_i32_0 = arith.constant 0 : i32
    %c0_i32_1 = arith.constant 0 : i32
    return %arg0, %c0_i32, %c0_i32_0 : i32, i32, i32
  }
  func.func @transform_7(%arg0: i32) -> (i32, i32, i32) {
    %c0_i32 = arith.constant 0 : i32
    %c0_i32_0 = arith.constant 0 : i32
    %c0_i32_1 = arith.constant 0 : i32
    return %arg0, %c0_i32, %c0_i32_0 : i32, i32, i32
  }
  func.func @transform_8(%arg0: i32) -> (i32, i32, i32) {
    %c0_i32 = arith.constant 0 : i32
    %c0_i32_0 = arith.constant 0 : i32
    %c0_i32_1 = arith.constant 0 : i32
    return %arg0, %c0_i32, %c0_i32_0 : i32, i32, i32
  }
  func.func @transform_9(%arg0: i32) -> (i32, i32, i32) {
    %c0_i32 = arith.constant 0 : i32
    %c0_i32_0 = arith.constant 0 : i32
    %c0_i32_1 = arith.constant 0 : i32
    return %arg0, %c0_i32, %c0_i32_0 : i32, i32, i32
  }
  func.func @transform_10(%arg0: i32) -> (i32, i32) {
    %c0_i32 = arith.constant 0 : i32
    %c0_i32_0 = arith.constant 0 : i32
    %c0_i32_1 = arith.constant 0 : i32
    return %c0_i32, %c0_i32_0 : i32, i32
  }
  func.func @transform_11(%arg0: i32) -> (i32, i32) {
    %c0_i32 = arith.constant 0 : i32
    %c0_i32_0 = arith.constant 0 : i32
    %c0_i32_1 = arith.constant 0 : i32
    return %c0_i32, %c0_i32_0 : i32, i32
  }
  func.func @transform_12(%arg0: i32) -> (i32, i32) {
    %c0_i32 = arith.constant 0 : i32
    %c0_i32_0 = arith.constant 0 : i32
    %c0_i32_1 = arith.constant 0 : i32
    return %c0_i32, %c0_i32_0 : i32, i32
  }
}

</mosaic_0001>

<llo_original>
// kernel: forward.1
$region0: #{forward.1}
  #allocation0 [shape = 'u32[]', space=smem, size = 0x4, offset = 0x4, fixed_abs, tag = 'smem constant byte address 0x4 - core index']
  #allocation1 [shape = 'u32[144,128]{1,0:T(1,128)}', space=vmem, size = 0x12000, scoped, tag = 'internal scratch']
  #allocation2 [shape = 'f32[16,128]{1,0:T(8,128)}', space=vmem, size = 0x2000, scoped, tag = 'scratch operand']
  %s0 = inlined_call_operand.vmem [shape: bf16[16,128], index: 0, kind: input, shape index: {}]
  %s1 = inlined_call_operand.hbm [shape: f32[16,128], index: 1, kind: input, shape index: {}]
  %s2 = inlined_call_operand.hbm [shape: f32[16,128], index: 2, kind: input, shape index: {}]
  %s3 = inlined_call_operand.vmem [shape: f32[8,8], index: 3, kind: input, shape index: {}]
  %s4 = inlined_call_operand.vmem [shape: bf16[2,1,128], index: 4, kind: input, shape index: {}]
  %s5 = inlined_call_operand.hbm [shape: bf16[2,128,640], index: 5, kind: input, shape index: {}]
  %s6 = inlined_call_operand.vmem [shape: bf16[2,128,128], index: 6, kind: input, shape index: {}]
  %s7 = inlined_call_operand.vmem [shape: bf16[2,1,128], index: 7, kind: input, shape index: {}]
  %s8 = inlined_call_operand.hbm [shape: bf16[2,128,512], index: 8, kind: input, shape index: {}]
  %s9 = inlined_call_operand.hbm [shape: bf16[2,256,128], index: 9, kind: input, shape index: {}]
  %s10 = inlined_call_operand.hbm [shape: bf16[1,128], index: 10, kind: input, shape index: {}]
  %s11 = inlined_call_operand.hbm [shape: bf16[128,256], index: 11, kind: input, shape index: {}]
  %s12 = inlined_call_operand.hbm [shape: f32[16,256], index: 12, kind: output, shape index: {}]
  %s13 = sld [smem:[#allocation0]]
  $region117: #{forward.1} parent=0
    _
  %s15 = ssub.s32 1, %s13
  %s16 = scalar_select 0, %s15, %s13
  $region1: #{forward.1} parent=0
    #allocation3 [shape = 'u8[8192]{0}', space=vmem, size = 0x2000, scoped, tag = 'input window, operand 1, single buffered']
    #allocation4 [shape = 's32[2]{0}', space=sflag, size = 0x8, scoped, tag = 'scoped memory for forward.1']
    #allocation5 [shape = 's32[2]{0}', space=sflag, size = 0x8, scoped, tag = 'scoped memory for forward.1']
    #allocation6 [shape = 'u8[8192]{0}', space=vmem, size = 0x2000, scoped, tag = 'input window, operand 2, single buffered']
    #allocation7 [shape = 's32[1]{0}', space=sflag, size = 0x4, scoped, tag = 'scoped memory for forward.1']
    #allocation8 [shape = 'u8[327680]{0}', space=vmem, size = 0x50000, scoped, tag = 'input window, operand 5']
    #allocation9 [shape = 'u8[262144]{0}', space=vmem, size = 0x40000, scoped, tag = 'input window, operand 8']
    #allocation10 [shape = 'u8[131072]{0}', space=vmem, size = 0x20000, scoped, tag = 'input window, operand 9']
    #allocation11 [shape = 'u8[512]{0}', space=vmem, size = 0x400, scoped, tag = 'input window, operand 10, single buffered']
    #allocation12 [shape = 'u8[65536]{0}', space=vmem, size = 0x10000, scoped, tag = 'input window, operand 11, single buffered']
    #allocation13 [shape = 's32[1]{0}', space=sflag, size = 0x4, scoped, tag = 'scoped memory for forward.1']
    #allocation14 [shape = 'u8[16384]{0}', space=vmem, size = 0x4000, scoped, tag = 'output window, operand 0, single buffered']
    %17 = vsyncpa [#allocation4], 0
    %18 = vsyncpa [#allocation7], 0
    %19 = vsyncpa [#allocation13], 0
    %20 = vsyncpa [#allocation5], 0
    loop: start=0, step=1, limit=4
    $region2: #{forward.1} parent=1 // loop_pre_header
      _
    $region3: #{forward.1} parent=1 // loop_header
      %s22 = sphi 0, %s26
      %p23 = scmp.ge.s32.totalorder %s22, 4
      %s30 = sphi 0, %s30
      %s32 = sphi 0, %s30
      %s33 = sphi 0, %s32
      %s47 = sphi 0, %s33
      %s51 = sphi 0, %s51
      %s53 = sphi 0, %s51
      %s54 = sphi 0, %s53
      %s68 = sphi 0, %s54
      %s72 = sphi 0, %s72
      %s74 = sphi 0, %s72
      %s75 = sphi 0, %s74
      %s89 = sphi 0, %s75
      %s93 = sphi 0, %s93
      %s95 = sphi 0, %s93
      %s96 = sphi 0, %s95
      %s110 = sphi 0, %s96
      %s116 = sphi 0, %s118
      %s119 = sphi 0, %s116
      %s120 = sphi 0, %s119
      %s136 = sphi 0, %s120
      %s142 = sphi 0, %s144
      %s145 = sphi 0, %s142
      %s146 = sphi 0, %s145
      %s162 = sphi 0, %s146
      %s168 = sphi 0, %s170
      %s171 = sphi 0, %s168
      %s172 = sphi 0, %s171
      %s188 = sphi 0, %s172
      %s194 = sphi 0, %s196
      %s197 = sphi 0, %s194
      %s198 = sphi 0, %s197
      %s214 = sphi 0, %s198
      %s220 = sphi 0, %s222
      %s223 = sphi 0, %s220
      %s224 = sphi 0, %s223
      %s240 = sphi 0, %s224
      %s246 = sphi 0, %s248
      %s249 = sphi 0, %s246
      %s250 = sphi 0, %s249
      %s266 = sphi 0, %s250
      %s270 = sphi 0, %s270
      %s272 = sphi 0, %s270
      %s273 = sphi 0, %s272
      %s287 = sphi 0, %s273
      %s291 = sphi 0, %s291
      %s293 = sphi 0, %s291
      %s294 = sphi 0, %s293
      %s308 = sphi 0, %s294
      %s312 = sphi 0, %s312
      %s314 = sphi 0, %s312
      %s315 = sphi 0, %s314
      %s329 = sphi 0, %s315
    $region4: #{forward.1} parent=1 // loop_header_branch
      %25 = sbr.rel (%p23) target = $region8
    $region5: #{forward.1} parent=1 // loop_body
      %s27 = ssub.s32 %s22, 1
      %s28 = ssub.s32 %s22, 2
      %s29 = sadd.s32 %s22, 1
      %s31 = sadd.s32 %s30, 1
      %p34 = scmp.eq.s32.totalorder %s22, 1
      %p35 = scmp.ne.s32.totalorder %s30, %s32
      %p36 = scmp.eq.s32.totalorder %s22, 0
      %p37 = por %p35, %p36
      %p38 = scmp.ne.s32.totalorder %s30, %s32
      %p39 = scmp.eq.s32.totalorder %s27, 1
      %p40 = por %p38, %p39
      %p41 = scmp.ne.s32.totalorder %s32, %s33
      %p42 = scmp.eq.s32.totalorder %s27, 0
      %p43 = por %p41, %p42
      %p44 = scmp.ne.s32.totalorder %s32, %s33
      %p45 = scmp.eq.s32.totalorder %s28, 1
      %p46 = por %p44, %p45
      %p48 = scmp.ne.s32.totalorder %s33, %s47
      %p49 = scmp.eq.s32.totalorder %s28, 0
      %p50 = por %p48, %p49
      %s52 = sadd.s32 %s51, 1
      %p55 = scmp.eq.s32.totalorder %s22, 1
      %p56 = scmp.ne.s32.totalorder %s51, %s53
      %p57 = scmp.eq.s32.totalorder %s22, 0
      %p58 = por %p56, %p57
      %p59 = scmp.ne.s32.totalorder %s51, %s53
      %p60 = scmp.eq.s32.totalorder %s27, 1
      %p61 = por %p59, %p60
      %p62 = scmp.ne.s32.totalorder %s53, %s54
      %p63 = scmp.eq.s32.totalorder %s27, 0
      %p64 = por %p62, %p63
      %p65 = scmp.ne.s32.totalorder %s53, %s54
      %p66 = scmp.eq.s32.totalorder %s28, 1
      %p67 = por %p65, %p66
      %p69 = scmp.ne.s32.totalorder %s54, %s68
      %p70 = scmp.eq.s32.totalorder %s28, 0
      %p71 = por %p69, %p70
      %s73 = sadd.s32 %s72, 1
      %p76 = scmp.eq.s32.totalorder %s22, 1
      %p77 = scmp.ne.s32.totalorder %s72, %s74
      %p78 = scmp.eq.s32.totalorder %s22, 0
      %p79 = por %p77, %p78
      %p80 = scmp.ne.s32.totalorder %s72, %s74
      %p81 = scmp.eq.s32.totalorder %s27, 1
      %p82 = por %p80, %p81
      %p83 = scmp.ne.s32.totalorder %s74, %s75
      %p84 = scmp.eq.s32.totalorder %s27, 0
      %p85 = por %p83, %p84
      %p86 = scmp.ne.s32.totalorder %s74, %s75
      %p87 = scmp.eq.s32.totalorder %s28, 1
      %p88 = por %p86, %p87
      %p90 = scmp.ne.s32.totalorder %s75, %s89
      %p91 = scmp.eq.s32.totalorder %s28, 0
      %p92 = por %p90, %p91
      %s94 = sadd.s32 %s93, 1
      %p97 = scmp.eq.s32.totalorder %s22, 1
      %p98 = scmp.ne.s32.totalorder %s93, %s95
      %p99 = scmp.eq.s32.totalorder %s22, 0
      %p100 = por %p98, %p99
      %p101 = scmp.ne.s32.totalorder %s93, %s95
      %p102 = scmp.eq.s32.totalorder %s27, 1
      %p103 = por %p101, %p102
      %p104 = scmp.ne.s32.totalorder %s95, %s96
      %p105 = scmp.eq.s32.totalorder %s27, 0
      %p106 = por %p104, %p105
      %p107 = scmp.ne.s32.totalorder %s95, %s96
      %p108 = scmp.eq.s32.totalorder %s28, 1
      %p109 = por %p107, %p108
      %p111 = scmp.ne.s32.totalorder %s96, %s110
      %p112 = scmp.eq.s32.totalorder %s28, 0
      %p113 = por %p111, %p112
      %s114 = ssub.s32 %s22, %s29
      %p115 = scmp.eq.s32.totalorder %s114, 0
      %s117 = sadd.s32 %s116, 1
      %s118 = scalar_select %p115, %s116, %s117
      %p121 = pneg %p115
      %p122 = scmp.eq.s32.totalorder %s22, 1
      %p123 = por %p121, %p122
      %p124 = scmp.ne.s32.totalorder %s116, %s119
      %p125 = scmp.eq.s32.totalorder %s22, 0
      %p126 = por %p124, %p125
      %p127 = scmp.ne.s32.totalorder %s116, %s119
      %p128 = scmp.eq.s32.totalorder %s27, 1
      %p129 = por %p127, %p128
      %p130 = scmp.ne.s32.totalorder %s119, %s120
      %p131 = scmp.eq.s32.totalorder %s27, 0
      %p132 = por %p130, %p131
      %p133 = scmp.ne.s32.totalorder %s119, %s120
      %p134 = scmp.eq.s32.totalorder %s28, 1
      %p135 = por %p133, %p134
      %p137 = scmp.ne.s32.totalorder %s120, %s136
      %p138 = scmp.eq.s32.totalorder %s28, 0
      %p139 = por %p137, %p138
      %s140 = ssub.s32 %s22, %s29
      %p141 = scmp.eq.s32.totalorder %s140, 0
      %s143 = sadd.s32 %s142, 1
      %s144 = scalar_select %p141, %s142, %s143
      %p147 = pneg %p141
      %p148 = scmp.eq.s32.totalorder %s22, 1
      %p149 = por %p147, %p148
      %p150 = scmp.ne.s32.totalorder %s142, %s145
      %p151 = scmp.eq.s32.totalorder %s22, 0
      %p152 = por %p150, %p151
      %p153 = scmp.ne.s32.totalorder %s142, %s145
      %p154 = scmp.eq.s32.totalorder %s27, 1
      %p155 = por %p153, %p154
      %p156 = scmp.ne.s32.totalorder %s145, %s146
      %p157 = scmp.eq.s32.totalorder %s27, 0
      %p158 = por %p156, %p157
      %p159 = scmp.ne.s32.totalorder %s145, %s146
      %p160 = scmp.eq.s32.totalorder %s28, 1
      %p161 = por %p159, %p160
      %p163 = scmp.ne.s32.totalorder %s146, %s162
      %p164 = scmp.eq.s32.totalorder %s28, 0
      %p165 = por %p163, %p164
      %s166 = ssub.s32 %s22, %s29
      %p167 = scmp.eq.s32.totalorder %s166, 0
      %s169 = sadd.s32 %s168, 1
      %s170 = scalar_select %p167, %s168, %s169
      %p173 = pneg %p167
      %p174 = scmp.eq.s32.totalorder %s22, 1
      %p175 = por %p173, %p174
      %p176 = scmp.ne.s32.totalorder %s168, %s171
      %p177 = scmp.eq.s32.totalorder %s22, 0
      %p178 = por %p176, %p177
      %p179 = scmp.ne.s32.totalorder %s168, %s171
      %p180 = scmp.eq.s32.totalorder %s27, 1
      %p181 = por %p179, %p180
      %p182 = scmp.ne.s32.totalorder %s171, %s172
      %p183 = scmp.eq.s32.totalorder %s27, 0
      %p184 = por %p182, %p183
      %p185 = scmp.ne.s32.totalorder %s171, %s172
      %p186 = scmp.eq.s32.totalorder %s28, 1
      %p187 = por %p185, %p186
      %p189 = scmp.ne.s32.totalorder %s172, %s188
      %p190 = scmp.eq.s32.totalorder %s28, 0
      %p191 = por %p189, %p190
      %s192 = ssub.s32 %s22, %s29
      %p193 = scmp.eq.s32.totalorder %s192, 0
      %s195 = sadd.s32 %s194, 1
      %s196 = scalar_select %p193, %s194, %s195
      %p199 = pneg %p193
      %p200 = scmp.eq.s32.totalorder %s22, 1
      %p201 = por %p199, %p200
      %p202 = scmp.ne.s32.totalorder %s194, %s197
      %p203 = scmp.eq.s32.totalorder %s22, 0
      %p204 = por %p202, %p203
      %p205 = scmp.ne.s32.totalorder %s194, %s197
      %p206 = scmp.eq.s32.totalorder %s27, 1
      %p207 = por %p205, %p206
      %p208 = scmp.ne.s32.totalorder %s197, %s198
      %p209 = scmp.eq.s32.totalorder %s27, 0
      %p210 = por %p208, %p209
      %p211 = scmp.ne.s32.totalorder %s197, %s198
      %p212 = scmp.eq.s32.totalorder %s28, 1
      %p213 = por %p211, %p212
      %p215 = scmp.ne.s32.totalorder %s198, %s214
      %p216 = scmp.eq.s32.totalorder %s28, 0
      %p217 = por %p215, %p216
      %s218 = ssub.s32 %s22, %s29
      %p219 = scmp.eq.s32.totalorder %s218, 0
      %s221 = sadd.s32 %s220, 1
      %s222 = scalar_select %p219, %s220, %s221
      %p225 = pneg %p219
      %p226 = scmp.eq.s32.totalorder %s22, 1
      %p227 = por %p225, %p226
      %p228 = scmp.ne.s32.totalorder %s220, %s223
      %p229 = scmp.eq.s32.totalorder %s22, 0
      %p230 = por %p228, %p229
      %p231 = scmp.ne.s32.totalorder %s220, %s223
      %p232 = scmp.eq.s32.totalorder %s27, 1
      %p233 = por %p231, %p232
      %p234 = scmp.ne.s32.totalorder %s223, %s224
      %p235 = scmp.eq.s32.totalorder %s27, 0
      %p236 = por %p234, %p235
      %p237 = scmp.ne.s32.totalorder %s223, %s224
      %p238 = scmp.eq.s32.totalorder %s28, 1
      %p239 = por %p237, %p238
      %p241 = scmp.ne.s32.totalorder %s224, %s240
      %p242 = scmp.eq.s32.totalorder %s28, 0
      %p243 = por %p241, %p242
      %s244 = ssub.s32 %s22, %s29
      %p245 = scmp.eq.s32.totalorder %s244, 0
      %s247 = sadd.s32 %s246, 1
      %s248 = scalar_select %p245, %s246, %s247
      %p251 = pneg %p245
      %p252 = scmp.eq.s32.totalorder %s22, 1
      %p253 = por %p251, %p252
      %p254 = scmp.ne.s32.totalorder %s246, %s249
      %p255 = scmp.eq.s32.totalorder %s22, 0
      %p256 = por %p254, %p255
      %p257 = scmp.ne.s32.totalorder %s246, %s249
      %p258 = scmp.eq.s32.totalorder %s27, 1
      %p259 = por %p257, %p258
      %p260 = scmp.ne.s32.totalorder %s249, %s250
      %p261 = scmp.eq.s32.totalorder %s27, 0
      %p262 = por %p260, %p261
      %p263 = scmp.ne.s32.totalorder %s249, %s250
      %p264 = scmp.eq.s32.totalorder %s28, 1
      %p265 = por %p263, %p264
      %p267 = scmp.ne.s32.totalorder %s250, %s266
      %p268 = scmp.eq.s32.totalorder %s28, 0
      %p269 = por %p267, %p268
      %s271 = sadd.s32 %s270, 1
      %p274 = scmp.eq.s32.totalorder %s22, 1
      %p275 = scmp.ne.s32.totalorder %s270, %s272
      %p276 = scmp.eq.s32.totalorder %s22, 0
      %p277 = por %p275, %p276
      %p278 = scmp.ne.s32.totalorder %s270, %s272
      %p279 = scmp.eq.s32.totalorder %s27, 1
      %p280 = por %p278, %p279
      %p281 = scmp.ne.s32.totalorder %s272, %s273
      %p282 = scmp.eq.s32.totalorder %s27, 0
      %p283 = por %p281, %p282
      %p284 = scmp.ne.s32.totalorder %s272, %s273
      %p285 = scmp.eq.s32.totalorder %s28, 1
      %p286 = por %p284, %p285
      %p288 = scmp.ne.s32.totalorder %s273, %s287
      %p289 = scmp.eq.s32.totalorder %s28, 0
      %p290 = por %p288, %p289
      %s292 = sadd.s32 %s291, 1
      %p295 = scmp.eq.s32.totalorder %s22, 1
      %p296 = scmp.ne.s32.totalorder %s291, %s293
      %p297 = scmp.eq.s32.totalorder %s22, 0
      %p298 = por %p296, %p297
      %p299 = scmp.ne.s32.totalorder %s291, %s293
      %p300 = scmp.eq.s32.totalorder %s27, 1
      %p301 = por %p299, %p300
      %p302 = scmp.ne.s32.totalorder %s293, %s294
      %p303 = scmp.eq.s32.totalorder %s27, 0
      %p304 = por %p302, %p303
      %p305 = scmp.ne.s32.totalorder %s293, %s294
      %p306 = scmp.eq.s32.totalorder %s28, 1
      %p307 = por %p305, %p306
      %p309 = scmp.ne.s32.totalorder %s294, %s308
      %p310 = scmp.eq.s32.totalorder %s28, 0
      %p311 = por %p309, %p310
      %s313 = sadd.s32 %s312, 1
      %p316 = scmp.eq.s32.totalorder %s22, 1
      %p317 = scmp.ne.s32.totalorder %s312, %s314
      %p318 = scmp.eq.s32.totalorder %s22, 0
      %p319 = por %p317, %p318
      %p320 = scmp.ne.s32.totalorder %s312, %s314
      %p321 = scmp.eq.s32.totalorder %s27, 1
      %p322 = por %p320, %p321
      %p323 = scmp.ne.s32.totalorder %s314, %s315
      %p324 = scmp.eq.s32.totalorder %s27, 0
      %p325 = por %p323, %p324
      %p326 = scmp.ne.s32.totalorder %s314, %s315
      %p327 = scmp.eq.s32.totalorder %s28, 1
      %p328 = por %p326, %p327
      %p330 = scmp.ne.s32.totalorder %s315, %s329
      %p331 = scmp.eq.s32.totalorder %s28, 0
      %p332 = por %p330, %p331
      %p333 = scmp.le.s32.totalorder 1, %s22
      %p334 = scmp.lt.s32.totalorder %s22, 3
      %p335 = pnand %p333, %p334
      %p336 = pneg %p335
      // Predicated region
      $region9: #{forward.1} parent=5 // pred_check
        _
      $region10: #{forward.1} parent=5 // pred_check_branch
        %338 = sbr.rel (%p335) target = $region12
      $region11: #{forward.1} parent=5 // pred_region
        %s339 = ssub.s32 %s22, 1
        // Predicated region
        $region13: #{forward.1} parent=11 // pred_check
          %p340 = pneg %p43
        $region14: #{forward.1} parent=11 // pred_check_branch
          %342 = sbr.rel (%p340) target = $region16
        $region15: #{forward.1} parent=11 // pred_region
          _
        $region16: #{forward.1} parent=11 // pred_fallthru
          _
        // Predicated region
        $region17: #{forward.1} parent=11 // pred_check
          %p343 = pneg %p64
        $region18: #{forward.1} parent=11 // pred_check_branch
          %345 = sbr.rel (%p343) target = $region20
        $region19: #{forward.1} parent=11 // pred_region
          %s347 = ssub.s32 256, 256
          %348 = vsyncadd [#allocation4], %s347
          %s349 = sshll.u32 [#allocation3], 4
          %s350 = int_to_ptr.vmem [resolvable:$true] %s349
          %355 = dma.hbm_to_vmem [thread:$0]  %s1, 256, %s350, [#allocation4], 128, 128, 8
        $region20: #{forward.1} parent=11 // pred_fallthru
          _
        // Predicated region
        $region21: #{forward.1} parent=11 // pred_check
          %p356 = pneg %p85
        $region22: #{forward.1} parent=11 // pred_check_branch
          %358 = sbr.rel (%p356) target = $region24
        $region23: #{forward.1} parent=11 // pred_region
          %s360 = ssub.s32 256, 256
          %361 = vsyncadd [#allocation7], %s360
          %s362 = sshll.u32 [#allocation6], 4
          %s363 = int_to_ptr.vmem [resolvable:$true] %s362
          %368 = dma.hbm_to_vmem [thread:$0]  %s2, 256, %s363, [#allocation7], 128, 128, 8
        $region24: #{forward.1} parent=11 // pred_fallthru
          _
        // Predicated region
        $region25: #{forward.1} parent=11 // pred_check
          %p369 = pneg %p106
        $region26: #{forward.1} parent=11 // pred_check_branch
          %371 = sbr.rel (%p369) target = $region28
        $region27: #{forward.1} parent=11 // pred_region
          _
        $region28: #{forward.1} parent=11 // pred_fallthru
          _
        // Predicated region
        $region29: #{forward.1} parent=11 // pred_check
          %p372 = pneg %p283
        $region30: #{forward.1} parent=11 // pred_check_branch
          %374 = sbr.rel (%p372) target = $region32
        $region31: #{forward.1} parent=11 // pred_region
          %s376 = ssub.s32 16, 16
          %377 = vsyncadd [#allocation7], %s376
          %s379 = sshll.u32 [#allocation11], 4
          %s380 = int_to_ptr.vmem [resolvable:$true] %s379
          %382 = dma.hbm_to_vmem [thread:$0]  %s10, 16, %s380, [#allocation7]
        $region32: #{forward.1} parent=11 // pred_fallthru
          _
        // Predicated region
        $region33: #{forward.1} parent=11 // pred_check
          %p383 = pneg %p304
        $region34: #{forward.1} parent=11 // pred_check_branch
          %385 = sbr.rel (%p383) target = $region36
        $region35: #{forward.1} parent=11 // pred_region
          %s387 = ssub.s32 2048, 2048
          %388 = vsyncadd [#allocation13], %s387
          %s389 = sshll.u32 [#allocation12], 4
          %s390 = int_to_ptr.vmem [resolvable:$true] %s389
          %395 = dma.hbm_to_vmem [thread:$0]  %s11, 2048, %s390, [#allocation13], 128, 128, 8
        $region36: #{forward.1} parent=11 // pred_fallthru
          _
      $region12: #{forward.1} parent=5 // pred_fallthru
        _
      %p396 = scmp.lt.s32.totalorder %s22, 2
      // Predicated region
      $region37: #{forward.1} parent=5 // pred_check
        %p397 = pneg %p396
      $region38: #{forward.1} parent=5 // pred_check_branch
        %399 = sbr.rel (%p397) target = $region40
      $region39: #{forward.1} parent=5 // pred_region
        // Predicated region
        $region41: #{forward.1} parent=39 // pred_check
          %p400 = pneg %p126
        $region42: #{forward.1} parent=39 // pred_check_branch
          %402 = sbr.rel (%p400) target = $region44
        $region43: #{forward.1} parent=39 // pred_region
          %p403 = scmp.lt.s32.totalorder %s22, 1
          %s404 = scalar_select %p403, %s22, 1
          %s405 = scalar_lea.vmem %s4, %s404
        $region44: #{forward.1} parent=39 // pred_fallthru
          _
        // Predicated region
        $region45: #{forward.1} parent=39 // pred_check
          %p406 = pneg %p152
        $region46: #{forward.1} parent=39 // pred_check_branch
          %408 = sbr.rel (%p406) target = $region48
        $region47: #{forward.1} parent=39 // pred_region
          %s409 = sand.u32 %s22, 1
          %s410 = scalar_lea.sflag [#allocation4], %s409
          %s411 = sand.u32 %s142, 1
          %s412 = smul.addr %s411, 320
          %s413 = scalar_lea.vmem [#allocation8], %s412
          %s415 = ssub.s32 5120, 5120
          %416 = vsyncadd %s410, %s415
          %s417 = smul.addr %s22, 80
          %s418 = smul.addr %s417, 64
          %s419 = scalar_lea.hbm %s5, %s418
          %s420 = sshll.u32 %s413, 4
          %s421 = int_to_ptr.vmem [resolvable:$true] %s420
          %426 = dma.hbm_to_vmem [thread:$0]  %s419, 5120, %s421, %s410, 320, 320, 20
        $region48: #{forward.1} parent=39 // pred_fallthru
          _
        // Predicated region
        $region49: #{forward.1} parent=39 // pred_check
          %p427 = pneg %p178
        $region50: #{forward.1} parent=39 // pred_check_branch
          %429 = sbr.rel (%p427) target = $region52
        $region51: #{forward.1} parent=39 // pred_region
          %p430 = scmp.lt.s32.totalorder %s22, 1
          %s431 = scalar_select %p430, %s22, 1
          %s432 = smul.addr %s431, 16
          %s433 = smul.addr %s432, 4
          %s434 = scalar_lea.vmem %s6, %s433
        $region52: #{forward.1} parent=39 // pred_fallthru
          _
        // Predicated region
        $region53: #{forward.1} parent=39 // pred_check
          %p435 = pneg %p204
        $region54: #{forward.1} parent=39 // pred_check_branch
          %437 = sbr.rel (%p435) target = $region56
        $region55: #{forward.1} parent=39 // pred_region
          %p438 = scmp.lt.s32.totalorder %s22, 1
          %s439 = scalar_select %p438, %s22, 1
          %s440 = scalar_lea.vmem %s7, %s439
        $region56: #{forward.1} parent=39 // pred_fallthru
          _
        // Predicated region
        $region57: #{forward.1} parent=39 // pred_check
          %p441 = pneg %p230
        $region58: #{forward.1} parent=39 // pred_check_branch
          %443 = sbr.rel (%p441) target = $region60
        $region59: #{forward.1} parent=39 // pred_region
          %s444 = sand.u32 %s22, 1
          %s445 = scalar_lea.sflag [#allocation4], %s444
          %s446 = sand.u32 %s220, 1
          %s447 = smul.addr %s446, 256
          %s448 = scalar_lea.vmem [#allocation9], %s447
          %s450 = ssub.s32 4096, 4096
          %451 = vsyncadd %s445, %s450
          %s452 = smul.addr %s22, 64
          %s453 = smul.addr %s452, 64
          %s454 = scalar_lea.hbm %s8, %s453
          %s455 = sshll.u32 %s448, 4
          %s456 = int_to_ptr.vmem [resolvable:$true] %s455
          %461 = dma.hbm_to_vmem [thread:$0]  %s454, 4096, %s456, %s445, 256, 256, 16
        $region60: #{forward.1} parent=39 // pred_fallthru
          _
        // Predicated region
        $region61: #{forward.1} parent=39 // pred_check
          %p462 = pneg %p256
        $region62: #{forward.1} parent=39 // pred_check_branch
          %464 = sbr.rel (%p462) target = $region64
        $region63: #{forward.1} parent=39 // pred_region
          %s465 = sand.u32 %s22, 1
          %s466 = scalar_lea.sflag [#allocation4], %s465
          %s467 = sand.u32 %s246, 1
          %s468 = smul.addr %s467, 128
          %s469 = scalar_lea.vmem [#allocation10], %s468
          %s471 = ssub.s32 2048, 2048
          %472 = vsyncadd %s466, %s471
          %s473 = smul.addr %s22, 32
          %s474 = smul.addr %s473, 64
          %s475 = scalar_lea.hbm %s9, %s474
          %s476 = sshll.u32 %s469, 4
          %s477 = int_to_ptr.vmem [resolvable:$true] %s476
          %482 = dma.hbm_to_vmem [thread:$0]  %s475, 2048, %s477, %s466, 64, 64, 4
        $region64: #{forward.1} parent=39 // pred_fallthru
          _
      $region40: #{forward.1} parent=5 // pred_fallthru
        _
      %p483 = scmp.le.s32.totalorder 1, %s22
      %p484 = scmp.lt.s32.totalorder %s22, 3
      %p485 = pnand %p483, %p484
      %p486 = pneg %p485
      // Predicated region
      $region65: #{forward.1} parent=5 // pred_check
        _
      $region66: #{forward.1} parent=5 // pred_check_branch
        %488 = sbr.rel (%p485) target = $region68
      $region67: #{forward.1} parent=5 // pred_region
        %s489 = ssub.s32 %s22, 1
        // Predicated region
        $region69: #{forward.1} parent=67 // pred_check
          %p490 = pneg %p64
        $region70: #{forward.1} parent=67 // pred_check_branch
          %492 = sbr.rel (%p490) target = $region72
        $region71: #{forward.1} parent=67 // pred_region
          %493 = dma.done [#allocation4], 256
        $region72: #{forward.1} parent=67 // pred_fallthru
          _
        // Predicated region
        $region73: #{forward.1} parent=67 // pred_check
          %p494 = pneg %p85
        $region74: #{forward.1} parent=67 // pred_check_branch
          %496 = sbr.rel (%p494) target = $region76
        $region75: #{forward.1} parent=67 // pred_region
          %497 = dma.done [#allocation7], 256
        $region76: #{forward.1} parent=67 // pred_fallthru
          _
        %s498 = sand.u32 %s27, 1
        %s499 = scalar_lea.sflag [#allocation4], %s498
        %s500 = sand.u32 %s145, 1
        %s501 = smul.addr %s500, 320
        %s502 = scalar_lea.vmem [#allocation8], %s501
        // Predicated region
        $region77: #{forward.1} parent=67 // pred_check
          %p503 = pneg %p158
        $region78: #{forward.1} parent=67 // pred_check_branch
          %505 = sbr.rel (%p503) target = $region80
        $region79: #{forward.1} parent=67 // pred_region
          %506 = dma.done %s499, 5120
        $region80: #{forward.1} parent=67 // pred_fallthru
          _
        %s507 = sand.u32 %s27, 1
        %s508 = scalar_lea.sflag [#allocation4], %s507
        %s509 = sand.u32 %s223, 1
        %s510 = smul.addr %s509, 256
        %s511 = scalar_lea.vmem [#allocation9], %s510
        // Predicated region
        $region81: #{forward.1} parent=67 // pred_check
          %p512 = pneg %p236
        $region82: #{forward.1} parent=67 // pred_check_branch
          %514 = sbr.rel (%p512) target = $region84
        $region83: #{forward.1} parent=67 // pred_region
          %515 = dma.done %s508, 4096
        $region84: #{forward.1} parent=67 // pred_fallthru
          _
        %s516 = sand.u32 %s27, 1
        %s517 = scalar_lea.sflag [#allocation4], %s516
        %s518 = sand.u32 %s249, 1
        %s519 = smul.addr %s518, 128
        %s520 = scalar_lea.vmem [#allocation10], %s519
        // Predicated region
        $region85: #{forward.1} parent=67 // pred_check
          %p521 = pneg %p262
        $region86: #{forward.1} parent=67 // pred_check_branch
          %523 = sbr.rel (%p521) target = $region88
        $region87: #{forward.1} parent=67 // pred_region
          %524 = dma.done %s517, 2048
        $region88: #{forward.1} parent=67 // pred_fallthru
          _
        // Predicated region
        $region89: #{forward.1} parent=67 // pred_check
          %p525 = pneg %p283
        $region90: #{forward.1} parent=67 // pred_check_branch
          %527 = sbr.rel (%p525) target = $region92
        $region91: #{forward.1} parent=67 // pred_region
          %528 = dma.done [#allocation7], 16
        $region92: #{forward.1} parent=67 // pred_fallthru
          _
        // Predicated region
        $region93: #{forward.1} parent=67 // pred_check
          %p529 = pneg %p304
        $region94: #{forward.1} parent=67 // pred_check_branch
          %531 = sbr.rel (%p529) target = $region96
        $region95: #{forward.1} parent=67 // pred_region
          %532 = dma.done [#allocation13], 2048
        $region96: #{forward.1} parent=67 // pred_fallthru
          _
        %p533 = pneg %p43
        %p534 = pneg %p40
        %p535 = pneg %p64
        %p536 = pneg %p61
        %p537 = pneg %p85
        %p538 = pneg %p82
        %p539 = pneg %p106
        %p540 = pneg %p103
        %p541 = scmp.lt.s32.totalorder %s27, 1
        %s542 = scalar_select %p541, %s27, 1
        %s543 = scalar_lea.vmem %s4, %s542
        %p544 = pneg %p132
        %p545 = pneg %p129
        %s546 = sand.u32 %s27, 1
        %s547 = scalar_lea.sflag [#allocation4], %s546
        %s548 = sand.u32 %s145, 1
        %s549 = smul.addr %s548, 320
        %s550 = scalar_lea.vmem [#allocation8], %s549
        %p551 = pneg %p158
        %p552 = pneg %p155
        %p553 = scmp.lt.s32.totalorder %s27, 1
        %s554 = scalar_select %p553, %s27, 1
        %s555 = smul.addr %s554, 16
        %s556 = smul.addr %s555, 4
        %s557 = scalar_lea.vmem %s6, %s556
        %p558 = pneg %p184
        %p559 = pneg %p181
        %p560 = scmp.lt.s32.totalorder %s27, 1
        %s561 = scalar_select %p560, %s27, 1
        %s562 = scalar_lea.vmem %s7, %s561
        %p563 = pneg %p210
        %p564 = pneg %p207
        %s565 = sand.u32 %s27, 1
        %s566 = scalar_lea.sflag [#allocation4], %s565
        %s567 = sand.u32 %s223, 1
        %s568 = smul.addr %s567, 256
        %s569 = scalar_lea.vmem [#allocation9], %s568
        %p570 = pneg %p236
        %p571 = pneg %p233
        %s572 = sand.u32 %s27, 1
        %s573 = scalar_lea.sflag [#allocation4], %s572
        %s574 = sand.u32 %s249, 1
        %s575 = smul.addr %s574, 128
        %s576 = scalar_lea.vmem [#allocation10], %s575
        %p577 = pneg %p262
        %p578 = pneg %p259
        %p579 = pneg %p283
        %p580 = pneg %p280
        %p581 = pneg %p304
        %p582 = pneg %p301
        %p583 = pneg %p325
        %p584 = pneg %p322
        %p585 = scmp.lt.s32.totalorder %s27, 1
        %s586 = scalar_select %p585, %s27, 1
        %s587 = scalar_lea.vmem %s4, %s586
        %p588 = scmp.lt.s32.totalorder %s27, 1
        %s589 = scalar_select %p588, %s27, 1
        %s590 = smul.addr %s589, 16
        %s591 = smul.addr %s590, 4
        %s592 = scalar_lea.vmem %s6, %s591
        %p593 = scmp.lt.s32.totalorder %s27, 1
        %s594 = scalar_select %p593, %s27, 1
        %s595 = scalar_lea.vmem %s7, %s594
        %p597 = scmp.eq.s32.totalorder %s27, 0
        // Predicated region
        $region97: #{forward.1} parent=67 // pred_check
          %p598 = pneg %p597
        $region98: #{forward.1} parent=67 // pred_check_branch
          %600 = sbr.rel (%p598) target = $region100
        $region99: #{forward.1} parent=67 // pred_region
          %v601 = vld [vmem:[%s0] sm:$0xf]
          %v602 = vld [vmem:[%s0 + $0x4] sm:$0xf]
          %v603 = vunpack.c.l.bf16 %v601
          %v604 = vunpack.c.l.bf16 %v602
          %605 = vst [vmem:[#allocation2] sm:$0xff] %v603
          %606 = vst [vmem:[#allocation2 + $0x8] sm:$0xff] %v604
        $region100: #{forward.1} parent=67 // pred_fallthru
          _
        %v607 = vld [vmem:[#allocation2] sm:$0xff]
        %v608 = vld [vmem:[#allocation2 + $0x8] sm:$0xff]
        %v609 = vmul.f32 %v607, %v607
        %v610 = vmul.f32 %v608, %v608
        %611 = vadd.xlane.f32.xlu0 %v609
        %v612 = vpop.xlane.xlu0 %611
        %613 = vadd.xlane.f32.xlu0 %v610
        %v614 = vpop.xlane.xlu0 %613
        %v615 = vrcp.pop 128.0
        %v616 = vmul.f32 %v612, %v615
        %v617 = vmul.f32 %v614, %v615
        %v618 = vadd.f32 %v616, 1e-06
        %v619 = vadd.f32 %v617, 1e-06
        %v620 = vrsqrt.pop %v618
        %v621 = vrsqrt.pop %v619
        %v622 = vmul.f32 %v607, %v620
        %v623 = vmul.f32 %v608, %v621
        %v624 = vld [vmem:[%s587] sm:$0x1]
        %v625 = vunpack.c.l.bf16 %v624
        %v626 = vlaneseq
        %v627 = vshrl.u32 %v626, 7
        %v628 = vsub.s32 0, %v627
        %v629 = vrot.slane %v625, %v628
        %v630 = vmul.f32 %v622, %v629
        %v631 = vmul.f32 %v623, %v629
        %v632 = vpack.c.bf16 %v631, %v630
        %v633 = vld [vmem:[%s502] sm:$0xff]
        %v634 = vld [vmem:[%s502 + $0x8] sm:$0xff]
        %v635 = vld [vmem:[%s502 + $0x10] sm:$0xf]
        %v636 = vld [vmem:[%s502 + $0x14] sm:$0xff]
        %v637 = vld [vmem:[%s502 + $0x1c] sm:$0xff]
        %v638 = vld [vmem:[%s502 + $0x24] sm:$0xf]
        %v639 = vld [vmem:[%s502 + $0x28] sm:$0xff]
        %v640 = vld [vmem:[%s502 + $0x30] sm:$0xff]
        %v641 = vld [vmem:[%s502 + $0x38] sm:$0xf]
        %v642 = vld [vmem:[%s502 + $0x3c] sm:$0xff]
        %v643 = vld [vmem:[%s502 + $0x44] sm:$0xff]
        %v644 = vld [vmem:[%s502 + $0x4c] sm:$0xf]
        %v645 = vld [vmem:[%s502 + $0x50] sm:$0xff]
        %v646 = vld [vmem:[%s502 + $0x58] sm:$0xff]
        %v647 = vld [vmem:[%s502 + $0x60] sm:$0xf]
        %v648 = vld [vmem:[%s502 + $0x64] sm:$0xff]
        %v649 = vld [vmem:[%s502 + $0x6c] sm:$0xff]
        %v650 = vld [vmem:[%s502 + $0x74] sm:$0xf]
        %v651 = vld [vmem:[%s502 + $0x78] sm:$0xff]
        %v652 = vld [vmem:[%s502 + $0x80] sm:$0xff]
        %v653 = vld [vmem:[%s502 + $0x88] sm:$0xf]
        %v654 = vld [vmem:[%s502 + $0x8c] sm:$0xff]
        %v655 = vld [vmem:[%s502 + $0x94] sm:$0xff]
        %v656 = vld [vmem:[%s502 + $0x9c] sm:$0xf]
        %v657 = vld [vmem:[%s502 + $0xa0] sm:$0xff]
        %v658 = vld [vmem:[%s502 + $0xa8] sm:$0xff]
        %v659 = vld [vmem:[%s502 + $0xb0] sm:$0xf]
        %v660 = vld [vmem:[%s502 + $0xb4] sm:$0xff]
        %v661 = vld [vmem:[%s502 + $0xbc] sm:$0xff]
        %v662 = vld [vmem:[%s502 + $0xc4] sm:$0xf]
        %v663 = vld [vmem:[%s502 + $0xc8] sm:$0xff]
        %v664 = vld [vmem:[%s502 + $0xd0] sm:$0xff]
        %v665 = vld [vmem:[%s502 + $0xd8] sm:$0xf]
        %v666 = vld [vmem:[%s502 + $0xdc] sm:$0xff]
        %v667 = vld [vmem:[%s502 + $0xe4] sm:$0xff]
        %v668 = vld [vmem:[%s502 + $0xec] sm:$0xf]
        %v669 = vld [vmem:[%s502 + $0xf0] sm:$0xff]
        %v670 = vld [vmem:[%s502 + $0xf8] sm:$0xff]
        %v671 = vld [vmem:[%s502 + $0x100] sm:$0xf]
        %v672 = vld [vmem:[%s502 + $0x104] sm:$0xff]
        %v673 = vld [vmem:[%s502 + $0x10c] sm:$0xff]
        %v674 = vld [vmem:[%s502 + $0x114] sm:$0xf]
        %v675 = vld [vmem:[%s502 + $0x118] sm:$0xff]
        %v676 = vld [vmem:[%s502 + $0x120] sm:$0xff]
        %v677 = vld [vmem:[%s502 + $0x128] sm:$0xf]
        %v678 = vld [vmem:[%s502 + $0x12c] sm:$0xff]
        %v679 = vld [vmem:[%s502 + $0x134] sm:$0xff]
        %v680 = vld [vmem:[%s502 + $0x13c] sm:$0xf]
        %v729 = vunpack.c.l.b16 %v633
        %v730 = vunpack.c.h.b16 %v633
        %v731 = vunpack.c.l.b16 %v634
        %v732 = vunpack.c.h.b16 %v634
        %v733 = vunpack.c.l.b16 %v635
        %v734 = vunpack.c.l.b16 %v636
        %v735 = vunpack.c.h.b16 %v636
        %v736 = vunpack.c.l.b16 %v637
        %v737 = vunpack.c.h.b16 %v637
        %v738 = vunpack.c.l.b16 %v638
        %v739 = vunpack.c.l.b16 %v639
        %v740 = vunpack.c.h.b16 %v639
        %v741 = vunpack.c.l.b16 %v640
        %v742 = vunpack.c.h.b16 %v640
        %v743 = vunpack.c.l.b16 %v641
        %v744 = vunpack.c.l.b16 %v642
        %v745 = vunpack.c.h.b16 %v642
        %v746 = vunpack.c.l.b16 %v643
        %v747 = vunpack.c.h.b16 %v643
        %v748 = vunpack.c.l.b16 %v644
        %v749 = vunpack.c.l.b16 %v645
        %v750 = vunpack.c.h.b16 %v645
        %v751 = vunpack.c.l.b16 %v646
        %v752 = vunpack.c.h.b16 %v646
        %v753 = vunpack.c.l.b16 %v647
        %v754 = vunpack.c.l.b16 %v648
        %v755 = vunpack.c.h.b16 %v648
        %v756 = vunpack.c.l.b16 %v649
        %v757 = vunpack.c.h.b16 %v649
        %v758 = vunpack.c.l.b16 %v650
        %v759 = vunpack.c.l.b16 %v651
        %v760 = vunpack.c.h.b16 %v651
        %v761 = vunpack.c.l.b16 %v652
        %v762 = vunpack.c.h.b16 %v652
        %v763 = vunpack.c.l.b16 %v653
        %v764 = vunpack.c.l.b16 %v654
        %v765 = vunpack.c.h.b16 %v654
        %v766 = vunpack.c.l.b16 %v655
        %v767 = vunpack.c.h.b16 %v655
        %v768 = vunpack.c.l.b16 %v656
        %v769 = vunpack.c.l.b16 %v657
        %v770 = vunpack.c.h.b16 %v657
        %v771 = vunpack.c.l.b16 %v658
        %v772 = vunpack.c.h.b16 %v658
        %v773 = vunpack.c.l.b16 %v659
        %v774 = vunpack.c.l.b16 %v660
        %v775 = vunpack.c.h.b16 %v660
        %v776 = vunpack.c.l.b16 %v661
        %v777 = vunpack.c.h.b16 %v661
        %v778 = vunpack.c.l.b16 %v662
        %v779 = vunpack.c.l.b16 %v663
        %v780 = vunpack.c.h.b16 %v663
        %v781 = vunpack.c.l.b16 %v664
        %v782 = vunpack.c.h.b16 %v664
        %v783 = vunpack.c.l.b16 %v665
        %v784 = vunpack.c.l.b16 %v666
        %v785 = vunpack.c.h.b16 %v666
        %v786 = vunpack.c.l.b16 %v667
        %v787 = vunpack.c.h.b16 %v667
        %v788 = vunpack.c.l.b16 %v668
        %v789 = vunpack.c.l.b16 %v669
        %v790 = vunpack.c.h.b16 %v669
        %v791 = vunpack.c.l.b16 %v670
        %v792 = vunpack.c.h.b16 %v670
        %v793 = vunpack.c.l.b16 %v671
        %v794 = vunpack.c.l.b16 %v672
        %v795 = vunpack.c.h.b16 %v672
        %v796 = vunpack.c.l.b16 %v673
        %v797 = vunpack.c.h.b16 %v673
        %v798 = vunpack.c.l.b16 %v674
        %v799 = vunpack.c.l.b16 %v675
        %v800 = vunpack.c.h.b16 %v675
        %v801 = vunpack.c.l.b16 %v676
        %v802 = vunpack.c.h.b16 %v676
        %v803 = vunpack.c.l.b16 %v677
        %v804 = vunpack.c.l.b16 %v678
        %v805 = vunpack.c.h.b16 %v678
        %v806 = vunpack.c.l.b16 %v679
        %v807 = vunpack.c.h.b16 %v679
        %v808 = vunpack.c.l.b16 %v680
        %v809 = vpack.c.b16 %v734, %v729
        %v810 = vpack.c.b16 %v735, %v730
        %v811 = vpack.c.b16 %v736, %v731
        %v812 = vpack.c.b16 %v737, %v732
        %v813 = vpack.c.b16 %v738, %v733
        %v814 = vpack.c.b16 %v744, %v739
        %v815 = vpack.c.b16 %v745, %v740
        %v816 = vpack.c.b16 %v746, %v741
        %v817 = vpack.c.b16 %v747, %v742
        %v818 = vpack.c.b16 %v748, %v743
        %v819 = vpack.c.b16 %v754, %v749
        %v820 = vpack.c.b16 %v755, %v750
        %v821 = vpack.c.b16 %v756, %v751
        %v822 = vpack.c.b16 %v757, %v752
        %v823 = vpack.c.b16 %v758, %v753
        %v824 = vpack.c.b16 %v764, %v759
        %v825 = vpack.c.b16 %v765, %v760
        %v826 = vpack.c.b16 %v766, %v761
        %v827 = vpack.c.b16 %v767, %v762
        %v828 = vpack.c.b16 %v768, %v763
        %v829 = vpack.c.b16 %v774, %v769
        %v830 = vpack.c.b16 %v775, %v770
        %v831 = vpack.c.b16 %v776, %v771
        %v832 = vpack.c.b16 %v777, %v772
        %v833 = vpack.c.b16 %v778, %v773
        %v834 = vpack.c.b16 %v784, %v779
        %v835 = vpack.c.b16 %v785, %v780
        %v836 = vpack.c.b16 %v786, %v781
        %v837 = vpack.c.b16 %v787, %v782
        %v838 = vpack.c.b16 %v788, %v783
        %v839 = vpack.c.b16 %v794, %v789
        %v840 = vpack.c.b16 %v795, %v790
        %v841 = vpack.c.b16 %v796, %v791
        %v842 = vpack.c.b16 %v797, %v792
        %v843 = vpack.c.b16 %v798, %v793
        %v844 = vpack.c.b16 %v804, %v799
        %v845 = vpack.c.b16 %v805, %v800
        %v846 = vpack.c.b16 %v806, %v801
        %v847 = vpack.c.b16 %v807, %v802
        %v848 = vpack.c.b16 %v808, %v803
        %889 = vmatprep.subr.bf16.mxu0 %v845
        %890 = vmatpush1.bf16.msra.mxu0 %v844
        %891 = vmatprep.subr.bf16.mxu0 %v840
        %892 = vmatpush1.bf16.msra.mxu0 %v839
        %893 = vmatprep.subr.bf16.mxu0 %v835
        %894 = vmatpush1.bf16.msra.mxu0 %v834
        %895 = vmatprep.subr.bf16.mxu0 %v830
        %896 = vmatpush1.bf16.msra.mxu0 %v829
        %897 = vmatprep.subr.bf16.mxu0 %v825
        %898 = vmatpush1.bf16.msra.mxu0 %v824
        %899 = vmatprep.subr.bf16.mxu0 %v820
        %900 = vmatpush1.bf16.msra.mxu0 %v819
        %901 = vmatprep.subr.bf16.mxu0 %v815
        %902 = vmatpush1.bf16.msra.mxu0 %v814
        %903 = vmatprep.subr.bf16.mxu0 %v810
        %904 = vmatpush1.bf16.msra.mxu0 %v809
        %905 = vmatprep.subr.bf16.mxu0 0
        %906 = vmatpush2.bf16.msra.mxu0 0
        %907 = vmatprep.subr.bf16.mxu0 0
        %908 = vmatpush2.bf16.msra.mxu0 0
        %909 = vmatprep.subr.bf16.mxu0 0
        %910 = vmatpush2.bf16.msra.mxu0 0
        %911 = vmatprep.subr.bf16.mxu0 0
        %912 = vmatpush2.bf16.msra.mxu0 0
        %913 = vmatprep.subr.bf16.mxu0 0
        %914 = vmatpush2.bf16.msra.mxu0 0
        %915 = vmatprep.subr.bf16.mxu0 0
        %916 = vmatpush2.bf16.msra.mxu0 0
        %917 = vmatprep.subr.bf16.mxu0 0
        %918 = vmatpush2.bf16.msra.mxu0 0
        %919 = vmatprep.subr.bf16.mxu0 0
        %920 = vmatpush2.bf16.msra.mxu0 0
        %921 = vmatprep.mubr.bf16.mxu0 0
        %922 = vmatmul.mubr.bf16.gmra.mxu0 %v632
        %v923 = vpop.f32.mrf.mxu0
        %v924 = vadd.f32 0.0, %v923
        %v925 = vpop.f32.mrf.mxu0
        %v926 = vadd.f32 0.0, %v925
        %v927 = vpop.f32.mrf.mxu0
        %v928 = vadd.f32 0.0, %v927
        %v929 = vpop.f32.mrf.mxu0
        %v930 = vadd.f32 0.0, %v929
        %931 = vdwg.mxu0
        %932 = vmatprep.subr.bf16.mxu0 %v847
        %933 = vmatpush1.bf16.msra.mxu0 %v846
        %934 = vmatprep.subr.bf16.mxu0 %v842
        %935 = vmatpush1.bf16.msra.mxu0 %v841
        %936 = vmatprep.subr.bf16.mxu0 %v837
        %937 = vmatpush1.bf16.msra.mxu0 %v836
        %938 = vmatprep.subr.bf16.mxu0 %v832
        %939 = vmatpush1.bf16.msra.mxu0 %v831
        %940 = vmatprep.subr.bf16.mxu0 %v827
        %941 = vmatpush1.bf16.msra.mxu0 %v826
        %942 = vmatprep.subr.bf16.mxu0 %v822
        %943 = vmatpush1.bf16.msra.mxu0 %v821
        %944 = vmatprep.subr.bf16.mxu0 %v817
        %945 = vmatpush1.bf16.msra.mxu0 %v816
        %946 = vmatprep.subr.bf16.mxu0 %v812
        %947 = vmatpush1.bf16.msra.mxu0 %v811
        %948 = vmatprep.subr.bf16.mxu0 0
        %949 = vmatpush2.bf16.msra.mxu0 0
        %950 = vmatprep.subr.bf16.mxu0 0
        %951 = vmatpush2.bf16.msra.mxu0 0
        %952 = vmatprep.subr.bf16.mxu0 0
        %953 = vmatpush2.bf16.msra.mxu0 0
        %954 = vmatprep.subr.bf16.mxu0 0
        %955 = vmatpush2.bf16.msra.mxu0 0
        %956 = vmatprep.subr.bf16.mxu0 0
        %957 = vmatpush2.bf16.msra.mxu0 0
        %958 = vmatprep.subr.bf16.mxu0 0
        %959 = vmatpush2.bf16.msra.mxu0 0
        %960 = vmatprep.subr.bf16.mxu0 0
        %961 = vmatpush2.bf16.msra.mxu0 0
        %962 = vmatprep.subr.bf16.mxu0 0
        %963 = vmatpush2.bf16.msra.mxu0 0
        %964 = vmatprep.mubr.bf16.mxu0 0
        %965 = vmatmul.mubr.bf16.gmra.mxu0 %v632
        %v966 = vpop.f32.mrf.mxu0
        %v967 = vadd.f32 0.0, %v966
        %v968 = vpop.f32.mrf.mxu0
        %v969 = vadd.f32 0.0, %v968
        %v970 = vpop.f32.mrf.mxu0
        %v971 = vadd.f32 0.0, %v970
        %v972 = vpop.f32.mrf.mxu0
        %v973 = vadd.f32 0.0, %v972
        %974 = vdwg.mxu0
        %975 = vmatprep.subr.bf16.mxu0 0
        %976 = vmatpush1.bf16.msra.mxu0 %v848
        %977 = vmatprep.subr.bf16.mxu0 0
        %978 = vmatpush1.bf16.msra.mxu0 %v843
        %979 = vmatprep.subr.bf16.mxu0 0
        %980 = vmatpush1.bf16.msra.mxu0 %v838
        %981 = vmatprep.subr.bf16.mxu0 0
        %982 = vmatpush1.bf16.msra.mxu0 %v833
        %983 = vmatprep.subr.bf16.mxu0 0
        %984 = vmatpush1.bf16.msra.mxu0 %v828
        %985 = vmatprep.subr.bf16.mxu0 0
        %986 = vmatpush1.bf16.msra.mxu0 %v823
        %987 = vmatprep.subr.bf16.mxu0 0
        %988 = vmatpush1.bf16.msra.mxu0 %v818
        %989 = vmatprep.subr.bf16.mxu0 0
        %990 = vmatpush1.bf16.msra.mxu0 %v813
        %991 = vmatprep.subr.bf16.mxu0 0
        %992 = vmatpush2.bf16.msra.mxu0 0
        %993 = vmatprep.subr.bf16.mxu0 0
        %994 = vmatpush2.bf16.msra.mxu0 0
        %995 = vmatprep.subr.bf16.mxu0 0
        %996 = vmatpush2.bf16.msra.mxu0 0
        %997 = vmatprep.subr.bf16.mxu0 0
        %998 = vmatpush2.bf16.msra.mxu0 0
        %999 = vmatprep.subr.bf16.mxu0 0
        %1000 = vmatpush2.bf16.msra.mxu0 0
        %1001 = vmatprep.subr.bf16.mxu0 0
        %1002 = vmatpush2.bf16.msra.mxu0 0
        %1003 = vmatprep.subr.bf16.mxu0 0
        %1004 = vmatpush2.bf16.msra.mxu0 0
        %1005 = vmatprep.subr.bf16.mxu0 0
        %1006 = vmatpush2.bf16.msra.mxu0 0
        %1007 = vmatprep.mubr.bf16.mxu0 0
        %1008 = vmatmul.mubr.bf16.gmra.mxu0 %v632
        %v1009 = vpop.f32.mrf.mxu0
        %v1010 = vadd.f32 0.0, %v1009
        %v1011 = vpop.f32.mrf.mxu0
        %v1012 = vpop.f32.mrf.mxu0
        %v1013 = vadd.f32 0.0, %v1012
        %v1014 = vpop.f32.mrf.mxu0
        %1015 = vdwg.mxu0
        %v1016 = vld [vmem:[#allocation3] sm:$0xff]
        %v1017 = vld [vmem:[#allocation3 + $0x8] sm:$0xff]
        %v1018 = vld [vmem:[#allocation6] sm:$0xff]
        %v1019 = vld [vmem:[#allocation6 + $0x8] sm:$0xff]
        %v1020 = vmul.f32 %v924, %v1016
        %v1021 = vmul.f32 %v928, %v1017
        %v1022 = vmul.f32 %v969, %v1018
        %v1023 = vmul.f32 %v973, %v1019
        %v1024 = vadd.f32 %v1020, %v1022
        %v1025 = vadd.f32 %v1021, %v1023
        %v1026 = vmul.f32 %v926, %v1016
        %v1027 = vmul.f32 %v930, %v1017
        %v1028 = vmul.f32 %v1010, %v1018
        %v1029 = vmul.f32 %v1013, %v1019
        %v1030 = vadd.f32 %v1026, %v1028
        %v1031 = vadd.f32 %v1027, %v1029
        %v1032 = vld [vmem:[%s3] sm:$0xff]
        %vm1033 = vcmask 261120
        %v1035 = vsel %vm1033, %v1024, 0
        %v1038 = vsel %vm1033, %v1030, 0
        %1040 = vmatprep.subr.mxu0 0.0
        %1041 = vmatpush1.xpose.msra.mxu0 0.0
        %1042 = vmatprep.subr.mxu0 0.0
        %1043 = vmatpush1.xpose.msra.mxu0 0.0
        %1044 = vmatprep.subr.mxu0 0.0
        %1045 = vmatpush1.xpose.msra.mxu0 0.0
        %1046 = vmatprep.subr.mxu0 0.0
        %1047 = vmatpush1.xpose.msra.mxu0 0.0
        %1048 = vmatprep.subr.mxu0 0.0
        %1049 = vmatpush1.xpose.msra.mxu0 0.0
        %1050 = vmatprep.subr.mxu0 0.0
        %1051 = vmatpush1.xpose.msra.mxu0 0.0
        %1052 = vmatprep.subr.mxu0 0.0
        %1053 = vmatpush1.xpose.msra.mxu0 0.0
        %1054 = vmatprep.subr.mxu0 0.0
        %1055 = vmatpush1.xpose.msra.mxu0 0.0
        %1056 = vmatprep.subr.mxu0 0.0
        %1057 = vmatpush1.xpose.msra.mxu0 0.0
        %1058 = vmatprep.subr.mxu0 0.0
        %1059 = vmatpush1.xpose.msra.mxu0 0.0
        %1060 = vmatprep.subr.mxu0 0.0
        %1061 = vmatpush1.xpose.msra.mxu0 0.0
        %1062 = vmatprep.subr.mxu0 0.0
        %1063 = vmatpush1.xpose.msra.mxu0 0.0
        %1064 = vmatprep.subr.mxu0 0.0
        %1065 = vmatpush1.xpose.msra.mxu0 0.0
        %1066 = vmatprep.subr.mxu0 0.0
        %1067 = vmatpush1.xpose.msra.mxu0 0.0
        %1068 = vmatprep.subr.mxu0 0.0
        %1069 = vmatpush1.xpose.msra.mxu0 0.0
        %1070 = vmatprep.subr.mxu0 0.0
        %1071 = vmatpush1.xpose.msra.mxu0 %v1038
        %1072 = vmatprep.subr.mxu0 0.0
        %1073 = vmatpush2.xpose.msra.mxu0 0.0
        %1074 = vmatprep.subr.mxu0 0.0
        %1075 = vmatpush2.xpose.msra.mxu0 0.0
        %1076 = vmatprep.subr.mxu0 0.0
        %1077 = vmatpush2.xpose.msra.mxu0 0.0
        %1078 = vmatprep.subr.mxu0 0.0
        %1079 = vmatpush2.xpose.msra.mxu0 0.0
        %1080 = vmatprep.subr.mxu0 0.0
        %1081 = vmatpush2.xpose.msra.mxu0 0.0
        %1082 = vmatprep.subr.mxu0 0.0
        %1083 = vmatpush2.xpose.msra.mxu0 0.0
        %1084 = vmatprep.subr.mxu0 0.0
        %1085 = vmatpush2.xpose.msra.mxu0 0.0
        %1086 = vmatprep.subr.mxu0 0.0
        %1087 = vmatpush2.xpose.msra.mxu0 0.0
        %1088 = vmatprep.subr.mxu0 0.0
        %1089 = vmatpush2.xpose.msra.mxu0 0.0
        %1090 = vmatprep.subr.mxu0 0.0
        %1091 = vmatpush2.xpose.msra.mxu0 0.0
        %1092 = vmatprep.subr.mxu0 0.0
        %1093 = vmatpush2.xpose.msra.mxu0 0.0
        %1094 = vmatprep.subr.mxu0 0.0
        %1095 = vmatpush2.xpose.msra.mxu0 0.0
        %1096 = vmatprep.subr.mxu0 0.0
        %1097 = vmatpush2.xpose.msra.mxu0 0.0
        %1098 = vmatprep.subr.mxu0 0.0
        %1099 = vmatpush2.xpose.msra.mxu0 0.0
        %1100 = vmatprep.subr.mxu0 0.0
        %1101 = vmatpush2.xpose.msra.mxu0 0.0
        %1102 = vmatprep.subr.mxu0 0.0
        %1103 = vmatpush2.xpose.msra.mxu0 0.0
        %1104 = vmatprep.mubr.f32.mxu0 0.0
        %1105 = vmatmul.mubr.f32.gmra.mxu0 %v1035
        %v1106 = vpop.f32.mrf.mxu0
        %v1107 = vadd.f32 %v1032, %v1106
        %v1108 = vpop.f32.mrf.mxu0
        %1109 = vdwg.mxu0
        %v1111 = vsel %vm1033, %v1025, 0
        %v1114 = vsel %vm1033, %v1031, 0
        %1116 = vmatprep.subr.mxu0 0.0
        %1117 = vmatpush1.xpose.msra.mxu0 0.0
        %1118 = vmatprep.subr.mxu0 0.0
        %1119 = vmatpush1.xpose.msra.mxu0 0.0
        %1120 = vmatprep.subr.mxu0 0.0
        %1121 = vmatpush1.xpose.msra.mxu0 0.0
        %1122 = vmatprep.subr.mxu0 0.0
        %1123 = vmatpush1.xpose.msra.mxu0 0.0
        %1124 = vmatprep.subr.mxu0 0.0
        %1125 = vmatpush1.xpose.msra.mxu0 0.0
        %1126 = vmatprep.subr.mxu0 0.0
        %1127 = vmatpush1.xpose.msra.mxu0 0.0
        %1128 = vmatprep.subr.mxu0 0.0
        %1129 = vmatpush1.xpose.msra.mxu0 0.0
        %1130 = vmatprep.subr.mxu0 0.0
        %1131 = vmatpush1.xpose.msra.mxu0 0.0
        %1132 = vmatprep.subr.mxu0 0.0
        %1133 = vmatpush1.xpose.msra.mxu0 0.0
        %1134 = vmatprep.subr.mxu0 0.0
        %1135 = vmatpush1.xpose.msra.mxu0 0.0
        %1136 = vmatprep.subr.mxu0 0.0
        %1137 = vmatpush1.xpose.msra.mxu0 0.0
        %1138 = vmatprep.subr.mxu0 0.0
        %1139 = vmatpush1.xpose.msra.mxu0 0.0
        %1140 = vmatprep.subr.mxu0 0.0
        %1141 = vmatpush1.xpose.msra.mxu0 0.0
        %1142 = vmatprep.subr.mxu0 0.0
        %1143 = vmatpush1.xpose.msra.mxu0 0.0
        %1144 = vmatprep.subr.mxu0 0.0
        %1145 = vmatpush1.xpose.msra.mxu0 0.0
        %1146 = vmatprep.subr.mxu0 0.0
        %1147 = vmatpush1.xpose.msra.mxu0 %v1114
        %1148 = vmatprep.subr.mxu0 0.0
        %1149 = vmatpush2.xpose.msra.mxu0 0.0
        %1150 = vmatprep.subr.mxu0 0.0
        %1151 = vmatpush2.xpose.msra.mxu0 0.0
        %1152 = vmatprep.subr.mxu0 0.0
        %1153 = vmatpush2.xpose.msra.mxu0 0.0
        %1154 = vmatprep.subr.mxu0 0.0
        %1155 = vmatpush2.xpose.msra.mxu0 0.0
        %1156 = vmatprep.subr.mxu0 0.0
        %1157 = vmatpush2.xpose.msra.mxu0 0.0
        %1158 = vmatprep.subr.mxu0 0.0
        %1159 = vmatpush2.xpose.msra.mxu0 0.0
        %1160 = vmatprep.subr.mxu0 0.0
        %1161 = vmatpush2.xpose.msra.mxu0 0.0
        %1162 = vmatprep.subr.mxu0 0.0
        %1163 = vmatpush2.xpose.msra.mxu0 0.0
        %1164 = vmatprep.subr.mxu0 0.0
        %1165 = vmatpush2.xpose.msra.mxu0 0.0
        %1166 = vmatprep.subr.mxu0 0.0
        %1167 = vmatpush2.xpose.msra.mxu0 0.0
        %1168 = vmatprep.subr.mxu0 0.0
        %1169 = vmatpush2.xpose.msra.mxu0 0.0
        %1170 = vmatprep.subr.mxu0 0.0
        %1171 = vmatpush2.xpose.msra.mxu0 0.0
        %1172 = vmatprep.subr.mxu0 0.0
        %1173 = vmatpush2.xpose.msra.mxu0 0.0
        %1174 = vmatprep.subr.mxu0 0.0
        %1175 = vmatpush2.xpose.msra.mxu0 0.0
        %1176 = vmatprep.subr.mxu0 0.0
        %1177 = vmatpush2.xpose.msra.mxu0 0.0
        %1178 = vmatprep.subr.mxu0 0.0
        %1179 = vmatpush2.xpose.msra.mxu0 0.0
        %1180 = vmatprep.mubr.f32.mxu0 0.0
        %1181 = vmatmul.mubr.f32.gmra.mxu0 %v1111
        %v1182 = vpop.f32.mrf.mxu0
        %v1183 = vadd.f32 %v1032, %v1182
        %v1184 = vpop.f32.mrf.mxu0
        %1185 = vdwg.mxu0
        %vm1186 = vcmask 64512
        %v1187 = vsel %vm1186, %v1107, -inf
        %1188 = vmax.xlane.f32.xlu0 %v1187
        %v1189 = vpop.xlane.xlu0 %1188
        %v1190 = vsel %vm1186, %v1183, -inf
        %1191 = vmax.xlane.f32.xlu0 %v1190
        %v1192 = vpop.xlane.xlu0 %1191
        %v1193 = vsub.f32 %v1107, %v1189
        %v1194 = vsub.f32 %v1183, %v1192
        %v1195 = vmul.f32 %v1193, 1.442695
        %v1196 = vpow.pop %v1195
        %v1197 = vmul.f32 %v1194, 1.442695
        %v1198 = vpow.pop %v1197
        %v1199 = vsel %vm1186, %v1196, 0.0
        %1200 = vadd.xlane.f32.xlu0 %v1199
        %v1201 = vpop.xlane.xlu0 %1200
        %v1202 = vsel %vm1186, %v1198, 0.0
        %1203 = vadd.xlane.f32.xlu0 %v1202
        %v1204 = vpop.xlane.xlu0 %1203
        %v1205 = vrcp.pop %v1201
        %v1206 = vrcp.pop %v1204
        %v1207 = vmul.f32 %v1196, %v1205
        %v1208 = vmul.f32 %v1198, %v1206
        %v1210 = vsel %vm1186, %v1207, 0
        %1212 = vmatprep.subr.mxu0 0.0
        %1213 = vmatpush1.msra.mxu0 0.0
        %1214 = vmatprep.subr.mxu0 0.0
        %1215 = vmatpush1.msra.mxu0 0.0
        %1216 = vmatprep.subr.mxu0 0.0
        %1217 = vmatpush1.msra.mxu0 0.0
        %1218 = vmatprep.subr.mxu0 0.0
        %1219 = vmatpush1.msra.mxu0 0.0
        %1220 = vmatprep.subr.mxu0 0.0
        %1221 = vmatpush1.msra.mxu0 0.0
        %1222 = vmatprep.subr.mxu0 0.0
        %1223 = vmatpush1.msra.mxu0 0.0
        %1224 = vmatprep.subr.mxu0 0.0
        %1225 = vmatpush1.msra.mxu0 0.0
        %1226 = vmatprep.subr.mxu0 0.0
        %1227 = vmatpush1.msra.mxu0 0.0
        %1228 = vmatprep.subr.mxu0 0.0
        %1229 = vmatpush1.msra.mxu0 0.0
        %1230 = vmatprep.subr.mxu0 0.0
        %1231 = vmatpush1.msra.mxu0 0.0
        %1232 = vmatprep.subr.mxu0 0.0
        %1233 = vmatpush1.msra.mxu0 0.0
        %1234 = vmatprep.subr.mxu0 0.0
        %1235 = vmatpush1.msra.mxu0 0.0
        %1236 = vmatprep.subr.mxu0 0.0
        %1237 = vmatpush1.msra.mxu0 0.0
        %1238 = vmatprep.subr.mxu0 0.0
        %1239 = vmatpush1.msra.mxu0 0.0
        %1240 = vmatprep.subr.mxu0 0.0
        %1241 = vmatpush1.msra.mxu0 0.0
        %1242 = vmatprep.subr.mxu0 0.0
        %1243 = vmatpush1.msra.mxu0 %v967
        %1244 = vmatprep.subr.mxu0 0.0
        %1245 = vmatpush2.msra.mxu0 0.0
        %1246 = vmatprep.subr.mxu0 0.0
        %1247 = vmatpush2.msra.mxu0 0.0
        %1248 = vmatprep.subr.mxu0 0.0
        %1249 = vmatpush2.msra.mxu0 0.0
        %1250 = vmatprep.subr.mxu0 0.0
        %1251 = vmatpush2.msra.mxu0 0.0
        %1252 = vmatprep.subr.mxu0 0.0
        %1253 = vmatpush2.msra.mxu0 0.0
        %1254 = vmatprep.subr.mxu0 0.0
        %1255 = vmatpush2.msra.mxu0 0.0
        %1256 = vmatprep.subr.mxu0 0.0
        %1257 = vmatpush2.msra.mxu0 0.0
        %1258 = vmatprep.subr.mxu0 0.0
        %1259 = vmatpush2.msra.mxu0 0.0
        %1260 = vmatprep.subr.mxu0 0.0
        %1261 = vmatpush2.msra.mxu0 0.0
        %1262 = vmatprep.subr.mxu0 0.0
        %1263 = vmatpush2.msra.mxu0 0.0
        %1264 = vmatprep.subr.mxu0 0.0
        %1265 = vmatpush2.msra.mxu0 0.0
        %1266 = vmatprep.subr.mxu0 0.0
        %1267 = vmatpush2.msra.mxu0 0.0
        %1268 = vmatprep.subr.mxu0 0.0
        %1269 = vmatpush2.msra.mxu0 0.0
        %1270 = vmatprep.subr.mxu0 0.0
        %1271 = vmatpush2.msra.mxu0 0.0
        %1272 = vmatprep.subr.mxu0 0.0
        %1273 = vmatpush2.msra.mxu0 0.0
        %1274 = vmatprep.subr.mxu0 0.0
        %1275 = vmatpush2.msra.mxu0 0.0
        %1276 = vmatprep.mubr.f32.mxu0 0.0
        %1277 = vmatmul.mubr.f32.gmra.mxu0 %v1210
        %v1278 = vpop.f32.mrf.mxu0
        %v1279 = vadd.f32 0.0, %v1278
        %v1280 = vpop.f32.mrf.mxu0
        %1281 = vdwg.mxu0
        %v1283 = vsel %vm1186, %v1208, 0
        %1285 = vmatprep.subr.mxu0 0.0
        %1286 = vmatpush1.msra.mxu0 0.0
        %1287 = vmatprep.subr.mxu0 0.0
        %1288 = vmatpush1.msra.mxu0 0.0
        %1289 = vmatprep.subr.mxu0 0.0
        %1290 = vmatpush1.msra.mxu0 0.0
        %1291 = vmatprep.subr.mxu0 0.0
        %1292 = vmatpush1.msra.mxu0 0.0
        %1293 = vmatprep.subr.mxu0 0.0
        %1294 = vmatpush1.msra.mxu0 0.0
        %1295 = vmatprep.subr.mxu0 0.0
        %1296 = vmatpush1.msra.mxu0 0.0
        %1297 = vmatprep.subr.mxu0 0.0
        %1298 = vmatpush1.msra.mxu0 0.0
        %1299 = vmatprep.subr.mxu0 0.0
        %1300 = vmatpush1.msra.mxu0 0.0
        %1301 = vmatprep.subr.mxu0 0.0
        %1302 = vmatpush1.msra.mxu0 0.0
        %1303 = vmatprep.subr.mxu0 0.0
        %1304 = vmatpush1.msra.mxu0 0.0
        %1305 = vmatprep.subr.mxu0 0.0
        %1306 = vmatpush1.msra.mxu0 0.0
        %1307 = vmatprep.subr.mxu0 0.0
        %1308 = vmatpush1.msra.mxu0 0.0
        %1309 = vmatprep.subr.mxu0 0.0
        %1310 = vmatpush1.msra.mxu0 0.0
        %1311 = vmatprep.subr.mxu0 0.0
        %1312 = vmatpush1.msra.mxu0 0.0
        %1313 = vmatprep.subr.mxu0 0.0
        %1314 = vmatpush1.msra.mxu0 0.0
        %1315 = vmatprep.subr.mxu0 0.0
        %1316 = vmatpush1.msra.mxu0 %v971
        %1317 = vmatprep.subr.mxu0 0.0
        %1318 = vmatpush2.msra.mxu0 0.0
        %1319 = vmatprep.subr.mxu0 0.0
        %1320 = vmatpush2.msra.mxu0 0.0
        %1321 = vmatprep.subr.mxu0 0.0
        %1322 = vmatpush2.msra.mxu0 0.0
        %1323 = vmatprep.subr.mxu0 0.0
        %1324 = vmatpush2.msra.mxu0 0.0
        %1325 = vmatprep.subr.mxu0 0.0
        %1326 = vmatpush2.msra.mxu0 0.0
        %1327 = vmatprep.subr.mxu0 0.0
        %1328 = vmatpush2.msra.mxu0 0.0
        %1329 = vmatprep.subr.mxu0 0.0
        %1330 = vmatpush2.msra.mxu0 0.0
        %1331 = vmatprep.subr.mxu0 0.0
        %1332 = vmatpush2.msra.mxu0 0.0
        %1333 = vmatprep.subr.mxu0 0.0
        %1334 = vmatpush2.msra.mxu0 0.0
        %1335 = vmatprep.subr.mxu0 0.0
        %1336 = vmatpush2.msra.mxu0 0.0
        %1337 = vmatprep.subr.mxu0 0.0
        %1338 = vmatpush2.msra.mxu0 0.0
        %1339 = vmatprep.subr.mxu0 0.0
        %1340 = vmatpush2.msra.mxu0 0.0
        %1341 = vmatprep.subr.mxu0 0.0
        %1342 = vmatpush2.msra.mxu0 0.0
        %1343 = vmatprep.subr.mxu0 0.0
        %1344 = vmatpush2.msra.mxu0 0.0
        %1345 = vmatprep.subr.mxu0 0.0
        %1346 = vmatpush2.msra.mxu0 0.0
        %1347 = vmatprep.subr.mxu0 0.0
        %1348 = vmatpush2.msra.mxu0 0.0
        %1349 = vmatprep.mubr.f32.mxu0 0.0
        %1350 = vmatmul.mubr.f32.gmra.mxu0 %v1283
        %v1351 = vpop.f32.mrf.mxu0
        %v1352 = vadd.f32 0.0, %v1351
        %v1353 = vpop.f32.mrf.mxu0
        %1354 = vdwg.mxu0
        %1355 = vrot.lane.b32.xlu0 %v1024, 96
        %v1356 = vpop.permute.xlu0 %1355
        %1357 = vrot.lane.b32.xlu0 %v1030, 96
        %v1358 = vpop.permute.xlu0 %1357
        %v1359 = vsel %vm1033, %v1356, 0
        %v1361 = vsel %vm1033, %v1358, 0
        %1363 = vmatprep.subr.mxu0 0.0
        %1364 = vmatpush1.xpose.msra.mxu0 0.0
        %1365 = vmatprep.subr.mxu0 0.0
        %1366 = vmatpush1.xpose.msra.mxu0 0.0
        %1367 = vmatprep.subr.mxu0 0.0
        %1368 = vmatpush1.xpose.msra.mxu0 0.0
        %1369 = vmatprep.subr.mxu0 0.0
        %1370 = vmatpush1.xpose.msra.mxu0 0.0
        %1371 = vmatprep.subr.mxu0 0.0
        %1372 = vmatpush1.xpose.msra.mxu0 0.0
        %1373 = vmatprep.subr.mxu0 0.0
        %1374 = vmatpush1.xpose.msra.mxu0 0.0
        %1375 = vmatprep.subr.mxu0 0.0
        %1376 = vmatpush1.xpose.msra.mxu0 0.0
        %1377 = vmatprep.subr.mxu0 0.0
        %1378 = vmatpush1.xpose.msra.mxu0 0.0
        %1379 = vmatprep.subr.mxu0 0.0
        %1380 = vmatpush1.xpose.msra.mxu0 0.0
        %1381 = vmatprep.subr.mxu0 0.0
        %1382 = vmatpush1.xpose.msra.mxu0 0.0
        %1383 = vmatprep.subr.mxu0 0.0
        %1384 = vmatpush1.xpose.msra.mxu0 0.0
        %1385 = vmatprep.subr.mxu0 0.0
        %1386 = vmatpush1.xpose.msra.mxu0 0.0
        %1387 = vmatprep.subr.mxu0 0.0
        %1388 = vmatpush1.xpose.msra.mxu0 0.0
        %1389 = vmatprep.subr.mxu0 0.0
        %1390 = vmatpush1.xpose.msra.mxu0 0.0
        %1391 = vmatprep.subr.mxu0 0.0
        %1392 = vmatpush1.xpose.msra.mxu0 0.0
        %1393 = vmatprep.subr.mxu0 0.0
        %1394 = vmatpush1.xpose.msra.mxu0 %v1361
        %1395 = vmatprep.subr.mxu0 0.0
        %1396 = vmatpush2.xpose.msra.mxu0 0.0
        %1397 = vmatprep.subr.mxu0 0.0
        %1398 = vmatpush2.xpose.msra.mxu0 0.0
        %1399 = vmatprep.subr.mxu0 0.0
        %1400 = vmatpush2.xpose.msra.mxu0 0.0
        %1401 = vmatprep.subr.mxu0 0.0
        %1402 = vmatpush2.xpose.msra.mxu0 0.0
        %1403 = vmatprep.subr.mxu0 0.0
        %1404 = vmatpush2.xpose.msra.mxu0 0.0
        %1405 = vmatprep.subr.mxu0 0.0
        %1406 = vmatpush2.xpose.msra.mxu0 0.0
        %1407 = vmatprep.subr.mxu0 0.0
        %1408 = vmatpush2.xpose.msra.mxu0 0.0
        %1409 = vmatprep.subr.mxu0 0.0
        %1410 = vmatpush2.xpose.msra.mxu0 0.0
        %1411 = vmatprep.subr.mxu0 0.0
        %1412 = vmatpush2.xpose.msra.mxu0 0.0
        %1413 = vmatprep.subr.mxu0 0.0
        %1414 = vmatpush2.xpose.msra.mxu0 0.0
        %1415 = vmatprep.subr.mxu0 0.0
        %1416 = vmatpush2.xpose.msra.mxu0 0.0
        %1417 = vmatprep.subr.mxu0 0.0
        %1418 = vmatpush2.xpose.msra.mxu0 0.0
        %1419 = vmatprep.subr.mxu0 0.0
        %1420 = vmatpush2.xpose.msra.mxu0 0.0
        %1421 = vmatprep.subr.mxu0 0.0
        %1422 = vmatpush2.xpose.msra.mxu0 0.0
        %1423 = vmatprep.subr.mxu0 0.0
        %1424 = vmatpush2.xpose.msra.mxu0 0.0
        %1425 = vmatprep.subr.mxu0 0.0
        %1426 = vmatpush2.xpose.msra.mxu0 0.0
        %1427 = vmatprep.mubr.f32.mxu0 0.0
        %1428 = vmatmul.mubr.f32.gmra.mxu0 %v1359
        %v1429 = vpop.f32.mrf.mxu0
        %v1430 = vadd.f32 %v1032, %v1429
        %v1431 = vpop.f32.mrf.mxu0
        %1432 = vdwg.mxu0
        %1433 = vrot.lane.b32.xlu0 %v1025, 96
        %v1434 = vpop.permute.xlu0 %1433
        %1435 = vrot.lane.b32.xlu0 %v1031, 96
        %v1436 = vpop.permute.xlu0 %1435
        %v1437 = vsel %vm1033, %v1434, 0
        %v1439 = vsel %vm1033, %v1436, 0
        %1441 = vmatprep.subr.mxu0 0.0
        %1442 = vmatpush1.xpose.msra.mxu0 0.0
        %1443 = vmatprep.subr.mxu0 0.0
        %1444 = vmatpush1.xpose.msra.mxu0 0.0
        %1445 = vmatprep.subr.mxu0 0.0
        %1446 = vmatpush1.xpose.msra.mxu0 0.0
        %1447 = vmatprep.subr.mxu0 0.0
        %1448 = vmatpush1.xpose.msra.mxu0 0.0
        %1449 = vmatprep.subr.mxu0 0.0
        %1450 = vmatpush1.xpose.msra.mxu0 0.0
        %1451 = vmatprep.subr.mxu0 0.0
        %1452 = vmatpush1.xpose.msra.mxu0 0.0
        %1453 = vmatprep.subr.mxu0 0.0
        %1454 = vmatpush1.xpose.msra.mxu0 0.0
        %1455 = vmatprep.subr.mxu0 0.0
        %1456 = vmatpush1.xpose.msra.mxu0 0.0
        %1457 = vmatprep.subr.mxu0 0.0
        %1458 = vmatpush1.xpose.msra.mxu0 0.0
        %1459 = vmatprep.subr.mxu0 0.0
        %1460 = vmatpush1.xpose.msra.mxu0 0.0
        %1461 = vmatprep.subr.mxu0 0.0
        %1462 = vmatpush1.xpose.msra.mxu0 0.0
        %1463 = vmatprep.subr.mxu0 0.0
        %1464 = vmatpush1.xpose.msra.mxu0 0.0
        %1465 = vmatprep.subr.mxu0 0.0
        %1466 = vmatpush1.xpose.msra.mxu0 0.0
        %1467 = vmatprep.subr.mxu0 0.0
        %1468 = vmatpush1.xpose.msra.mxu0 0.0
        %1469 = vmatprep.subr.mxu0 0.0
        %1470 = vmatpush1.xpose.msra.mxu0 0.0
        %1471 = vmatprep.subr.mxu0 0.0
        %1472 = vmatpush1.xpose.msra.mxu0 %v1439
        %1473 = vmatprep.subr.mxu0 0.0
        %1474 = vmatpush2.xpose.msra.mxu0 0.0
        %1475 = vmatprep.subr.mxu0 0.0
        %1476 = vmatpush2.xpose.msra.mxu0 0.0
        %1477 = vmatprep.subr.mxu0 0.0
        %1478 = vmatpush2.xpose.msra.mxu0 0.0
        %1479 = vmatprep.subr.mxu0 0.0
        %1480 = vmatpush2.xpose.msra.mxu0 0.0
        %1481 = vmatprep.subr.mxu0 0.0
        %1482 = vmatpush2.xpose.msra.mxu0 0.0
        %1483 = vmatprep.subr.mxu0 0.0
        %1484 = vmatpush2.xpose.msra.mxu0 0.0
        %1485 = vmatprep.subr.mxu0 0.0
        %1486 = vmatpush2.xpose.msra.mxu0 0.0
        %1487 = vmatprep.subr.mxu0 0.0
        %1488 = vmatpush2.xpose.msra.mxu0 0.0
        %1489 = vmatprep.subr.mxu0 0.0
        %1490 = vmatpush2.xpose.msra.mxu0 0.0
        %1491 = vmatprep.subr.mxu0 0.0
        %1492 = vmatpush2.xpose.msra.mxu0 0.0
        %1493 = vmatprep.subr.mxu0 0.0
        %1494 = vmatpush2.xpose.msra.mxu0 0.0
        %1495 = vmatprep.subr.mxu0 0.0
        %1496 = vmatpush2.xpose.msra.mxu0 0.0
        %1497 = vmatprep.subr.mxu0 0.0
        %1498 = vmatpush2.xpose.msra.mxu0 0.0
        %1499 = vmatprep.subr.mxu0 0.0
        %1500 = vmatpush2.xpose.msra.mxu0 0.0
        %1501 = vmatprep.subr.mxu0 0.0
        %1502 = vmatpush2.xpose.msra.mxu0 0.0
        %1503 = vmatprep.subr.mxu0 0.0
        %1504 = vmatpush2.xpose.msra.mxu0 0.0
        %1505 = vmatprep.mubr.f32.mxu0 0.0
        %1506 = vmatmul.mubr.f32.gmra.mxu0 %v1437
        %v1507 = vpop.f32.mrf.mxu0
        %v1508 = vadd.f32 %v1032, %v1507
        %v1509 = vpop.f32.mrf.mxu0
        %1510 = vdwg.mxu0
        %v1511 = vsel %vm1186, %v1430, -inf
        %1512 = vmax.xlane.f32.xlu0 %v1511
        %v1513 = vpop.xlane.xlu0 %1512
        %v1514 = vsel %vm1186, %v1508, -inf
        %1515 = vmax.xlane.f32.xlu0 %v1514
        %v1516 = vpop.xlane.xlu0 %1515
        %v1517 = vsub.f32 %v1430, %v1513
        %v1518 = vsub.f32 %v1508, %v1516
        %v1519 = vmul.f32 %v1517, 1.442695
        %v1520 = vpow.pop %v1519
        %v1521 = vmul.f32 %v1518, 1.442695
        %v1522 = vpow.pop %v1521
        %v1523 = vsel %vm1186, %v1520, 0.0
        %1524 = vadd.xlane.f32.xlu0 %v1523
        %v1525 = vpop.xlane.xlu0 %1524
        %v1526 = vsel %vm1186, %v1522, 0.0
        %1527 = vadd.xlane.f32.xlu0 %v1526
        %v1528 = vpop.xlane.xlu0 %1527
        %v1529 = vrcp.pop %v1525
        %v1530 = vrcp.pop %v1528
        %v1531 = vmul.f32 %v1520, %v1529
        %v1532 = vmul.f32 %v1522, %v1530
        %1534 = vrot.lane.b32.xlu0 %v967, 96
        %v1535 = vpop.permute.xlu0 %1534
        %v1538 = vsel %vm1186, %v1531, 0
        %1540 = vmatprep.subr.mxu0 0.0
        %1541 = vmatpush1.msra.mxu0 0.0
        %1542 = vmatprep.subr.mxu0 0.0
        %1543 = vmatpush1.msra.mxu0 0.0
        %1544 = vmatprep.subr.mxu0 0.0
        %1545 = vmatpush1.msra.mxu0 0.0
        %1546 = vmatprep.subr.mxu0 0.0
        %1547 = vmatpush1.msra.mxu0 0.0
        %1548 = vmatprep.subr.mxu0 0.0
        %1549 = vmatpush1.msra.mxu0 0.0
        %1550 = vmatprep.subr.mxu0 0.0
        %1551 = vmatpush1.msra.mxu0 0.0
        %1552 = vmatprep.subr.mxu0 0.0
        %1553 = vmatpush1.msra.mxu0 0.0
        %1554 = vmatprep.subr.mxu0 0.0
        %1555 = vmatpush1.msra.mxu0 0.0
        %1556 = vmatprep.subr.mxu0 0.0
        %1557 = vmatpush1.msra.mxu0 0.0
        %1558 = vmatprep.subr.mxu0 0.0
        %1559 = vmatpush1.msra.mxu0 0.0
        %1560 = vmatprep.subr.mxu0 0.0
        %1561 = vmatpush1.msra.mxu0 0.0
        %1562 = vmatprep.subr.mxu0 0.0
        %1563 = vmatpush1.msra.mxu0 0.0
        %1564 = vmatprep.subr.mxu0 0.0
        %1565 = vmatpush1.msra.mxu0 0.0
        %1566 = vmatprep.subr.mxu0 0.0
        %1567 = vmatpush1.msra.mxu0 0.0
        %1568 = vmatprep.subr.mxu0 0.0
        %1569 = vmatpush1.msra.mxu0 0.0
        %1570 = vmatprep.subr.mxu0 0.0
        %1571 = vmatpush1.msra.mxu0 %v1535
        %1572 = vmatprep.subr.mxu0 0.0
        %1573 = vmatpush2.msra.mxu0 0.0
        %1574 = vmatprep.subr.mxu0 0.0
        %1575 = vmatpush2.msra.mxu0 0.0
        %1576 = vmatprep.subr.mxu0 0.0
        %1577 = vmatpush2.msra.mxu0 0.0
        %1578 = vmatprep.subr.mxu0 0.0
        %1579 = vmatpush2.msra.mxu0 0.0
        %1580 = vmatprep.subr.mxu0 0.0
        %1581 = vmatpush2.msra.mxu0 0.0
        %1582 = vmatprep.subr.mxu0 0.0
        %1583 = vmatpush2.msra.mxu0 0.0
        %1584 = vmatprep.subr.mxu0 0.0
        %1585 = vmatpush2.msra.mxu0 0.0
        %1586 = vmatprep.subr.mxu0 0.0
        %1587 = vmatpush2.msra.mxu0 0.0
        %1588 = vmatprep.subr.mxu0 0.0
        %1589 = vmatpush2.msra.mxu0 0.0
        %1590 = vmatprep.subr.mxu0 0.0
        %1591 = vmatpush2.msra.mxu0 0.0
        %1592 = vmatprep.subr.mxu0 0.0
        %1593 = vmatpush2.msra.mxu0 0.0
        %1594 = vmatprep.subr.mxu0 0.0
        %1595 = vmatpush2.msra.mxu0 0.0
        %1596 = vmatprep.subr.mxu0 0.0
        %1597 = vmatpush2.msra.mxu0 0.0
        %1598 = vmatprep.subr.mxu0 0.0
        %1599 = vmatpush2.msra.mxu0 0.0
        %1600 = vmatprep.subr.mxu0 0.0
        %1601 = vmatpush2.msra.mxu0 0.0
        %1602 = vmatprep.subr.mxu0 0.0
        %1603 = vmatpush2.msra.mxu0 0.0
        %1604 = vmatprep.mubr.f32.mxu0 0.0
        %1605 = vmatmul.mubr.f32.gmra.mxu0 %v1538
        %v1606 = vpop.f32.mrf.mxu0
        %v1607 = vadd.f32 0.0, %v1606
        %v1608 = vpop.f32.mrf.mxu0
        %1609 = vdwg.mxu0
        %1611 = vrot.lane.b32.xlu0 %v971, 96
        %v1612 = vpop.permute.xlu0 %1611
        %v1615 = vsel %vm1186, %v1532, 0
        %1617 = vmatprep.subr.mxu0 0.0
        %1618 = vmatpush1.msra.mxu0 0.0
        %1619 = vmatprep.subr.mxu0 0.0
        %1620 = vmatpush1.msra.mxu0 0.0
        %1621 = vmatprep.subr.mxu0 0.0
        %1622 = vmatpush1.msra.mxu0 0.0
        %1623 = vmatprep.subr.mxu0 0.0
        %1624 = vmatpush1.msra.mxu0 0.0
        %1625 = vmatprep.subr.mxu0 0.0
        %1626 = vmatpush1.msra.mxu0 0.0
        %1627 = vmatprep.subr.mxu0 0.0
        %1628 = vmatpush1.msra.mxu0 0.0
        %1629 = vmatprep.subr.mxu0 0.0
        %1630 = vmatpush1.msra.mxu0 0.0
        %1631 = vmatprep.subr.mxu0 0.0
        %1632 = vmatpush1.msra.mxu0 0.0
        %1633 = vmatprep.subr.mxu0 0.0
        %1634 = vmatpush1.msra.mxu0 0.0
        %1635 = vmatprep.subr.mxu0 0.0
        %1636 = vmatpush1.msra.mxu0 0.0
        %1637 = vmatprep.subr.mxu0 0.0
        %1638 = vmatpush1.msra.mxu0 0.0
        %1639 = vmatprep.subr.mxu0 0.0
        %1640 = vmatpush1.msra.mxu0 0.0
        %1641 = vmatprep.subr.mxu0 0.0
        %1642 = vmatpush1.msra.mxu0 0.0
        %1643 = vmatprep.subr.mxu0 0.0
        %1644 = vmatpush1.msra.mxu0 0.0
        %1645 = vmatprep.subr.mxu0 0.0
        %1646 = vmatpush1.msra.mxu0 0.0
        %1647 = vmatprep.subr.mxu0 0.0
        %1648 = vmatpush1.msra.mxu0 %v1612
        %1649 = vmatprep.subr.mxu0 0.0
        %1650 = vmatpush2.msra.mxu0 0.0
        %1651 = vmatprep.subr.mxu0 0.0
        %1652 = vmatpush2.msra.mxu0 0.0
        %1653 = vmatprep.subr.mxu0 0.0
        %1654 = vmatpush2.msra.mxu0 0.0
        %1655 = vmatprep.subr.mxu0 0.0
        %1656 = vmatpush2.msra.mxu0 0.0
        %1657 = vmatprep.subr.mxu0 0.0
        %1658 = vmatpush2.msra.mxu0 0.0
        %1659 = vmatprep.subr.mxu0 0.0
        %1660 = vmatpush2.msra.mxu0 0.0
        %1661 = vmatprep.subr.mxu0 0.0
        %1662 = vmatpush2.msra.mxu0 0.0
        %1663 = vmatprep.subr.mxu0 0.0
        %1664 = vmatpush2.msra.mxu0 0.0
        %1665 = vmatprep.subr.mxu0 0.0
        %1666 = vmatpush2.msra.mxu0 0.0
        %1667 = vmatprep.subr.mxu0 0.0
        %1668 = vmatpush2.msra.mxu0 0.0
        %1669 = vmatprep.subr.mxu0 0.0
        %1670 = vmatpush2.msra.mxu0 0.0
        %1671 = vmatprep.subr.mxu0 0.0
        %1672 = vmatpush2.msra.mxu0 0.0
        %1673 = vmatprep.subr.mxu0 0.0
        %1674 = vmatpush2.msra.mxu0 0.0
        %1675 = vmatprep.subr.mxu0 0.0
        %1676 = vmatpush2.msra.mxu0 0.0
        %1677 = vmatprep.subr.mxu0 0.0
        %1678 = vmatpush2.msra.mxu0 0.0
        %1679 = vmatprep.subr.mxu0 0.0
        %1680 = vmatpush2.msra.mxu0 0.0
        %1681 = vmatprep.mubr.f32.mxu0 0.0
        %1682 = vmatmul.mubr.f32.gmra.mxu0 %v1615
        %v1683 = vpop.f32.mrf.mxu0
        %v1684 = vadd.f32 0.0, %v1683
        %v1685 = vpop.f32.mrf.mxu0
        %1686 = vdwg.mxu0
        %1687 = vrot.lane.b32.xlu0 %v1024, 64
        %v1688 = vpop.permute.xlu0 %1687
        %1689 = vrot.lane.b32.xlu0 %v1030, 64
        %v1690 = vpop.permute.xlu0 %1689
        %v1691 = vsel %vm1033, %v1688, 0
        %v1693 = vsel %vm1033, %v1690, 0
        %1695 = vmatprep.subr.mxu0 0.0
        %1696 = vmatpush1.xpose.msra.mxu0 0.0
        %1697 = vmatprep.subr.mxu0 0.0
        %1698 = vmatpush1.xpose.msra.mxu0 0.0
        %1699 = vmatprep.subr.mxu0 0.0
        %1700 = vmatpush1.xpose.msra.mxu0 0.0
        %1701 = vmatprep.subr.mxu0 0.0
        %1702 = vmatpush1.xpose.msra.mxu0 0.0
        %1703 = vmatprep.subr.mxu0 0.0
        %1704 = vmatpush1.xpose.msra.mxu0 0.0
        %1705 = vmatprep.subr.mxu0 0.0
        %1706 = vmatpush1.xpose.msra.mxu0 0.0
        %1707 = vmatprep.subr.mxu0 0.0
        %1708 = vmatpush1.xpose.msra.mxu0 0.0
        %1709 = vmatprep.subr.mxu0 0.0
        %1710 = vmatpush1.xpose.msra.mxu0 0.0
        %1711 = vmatprep.subr.mxu0 0.0
        %1712 = vmatpush1.xpose.msra.mxu0 0.0
        %1713 = vmatprep.subr.mxu0 0.0
        %1714 = vmatpush1.xpose.msra.mxu0 0.0
        %1715 = vmatprep.subr.mxu0 0.0
        %1716 = vmatpush1.xpose.msra.mxu0 0.0
        %1717 = vmatprep.subr.mxu0 0.0
        %1718 = vmatpush1.xpose.msra.mxu0 0.0
        %1719 = vmatprep.subr.mxu0 0.0
        %1720 = vmatpush1.xpose.msra.mxu0 0.0
        %1721 = vmatprep.subr.mxu0 0.0
        %1722 = vmatpush1.xpose.msra.mxu0 0.0
        %1723 = vmatprep.subr.mxu0 0.0
        %1724 = vmatpush1.xpose.msra.mxu0 0.0
        %1725 = vmatprep.subr.mxu0 0.0
        %1726 = vmatpush1.xpose.msra.mxu0 %v1693
        %1727 = vmatprep.subr.mxu0 0.0
        %1728 = vmatpush2.xpose.msra.mxu0 0.0
        %1729 = vmatprep.subr.mxu0 0.0
        %1730 = vmatpush2.xpose.msra.mxu0 0.0
        %1731 = vmatprep.subr.mxu0 0.0
        %1732 = vmatpush2.xpose.msra.mxu0 0.0
        %1733 = vmatprep.subr.mxu0 0.0
        %1734 = vmatpush2.xpose.msra.mxu0 0.0
        %1735 = vmatprep.subr.mxu0 0.0
        %1736 = vmatpush2.xpose.msra.mxu0 0.0
        %1737 = vmatprep.subr.mxu0 0.0
        %1738 = vmatpush2.xpose.msra.mxu0 0.0
        %1739 = vmatprep.subr.mxu0 0.0
        %1740 = vmatpush2.xpose.msra.mxu0 0.0
        %1741 = vmatprep.subr.mxu0 0.0
        %1742 = vmatpush2.xpose.msra.mxu0 0.0
        %1743 = vmatprep.subr.mxu0 0.0
        %1744 = vmatpush2.xpose.msra.mxu0 0.0
        %1745 = vmatprep.subr.mxu0 0.0
        %1746 = vmatpush2.xpose.msra.mxu0 0.0
        %1747 = vmatprep.subr.mxu0 0.0
        %1748 = vmatpush2.xpose.msra.mxu0 0.0
        %1749 = vmatprep.subr.mxu0 0.0
        %1750 = vmatpush2.xpose.msra.mxu0 0.0
        %1751 = vmatprep.subr.mxu0 0.0
        %1752 = vmatpush2.xpose.msra.mxu0 0.0
        %1753 = vmatprep.subr.mxu0 0.0
        %1754 = vmatpush2.xpose.msra.mxu0 0.0
        %1755 = vmatprep.subr.mxu0 0.0
        %1756 = vmatpush2.xpose.msra.mxu0 0.0
        %1757 = vmatprep.subr.mxu0 0.0
        %1758 = vmatpush2.xpose.msra.mxu0 0.0
        %1759 = vmatprep.mubr.f32.mxu0 0.0
        %1760 = vmatmul.mubr.f32.gmra.mxu0 %v1691
        %v1761 = vpop.f32.mrf.mxu0
        %v1762 = vadd.f32 %v1032, %v1761
        %v1763 = vpop.f32.mrf.mxu0
        %1764 = vdwg.mxu0
        %1765 = vrot.lane.b32.xlu0 %v1025, 64
        %v1766 = vpop.permute.xlu0 %1765
        %1767 = vrot.lane.b32.xlu0 %v1031, 64
        %v1768 = vpop.permute.xlu0 %1767
        %v1769 = vsel %vm1033, %v1766, 0
        %v1771 = vsel %vm1033, %v1768, 0
        %1773 = vmatprep.subr.mxu0 0.0
        %1774 = vmatpush1.xpose.msra.mxu0 0.0
        %1775 = vmatprep.subr.mxu0 0.0
        %1776 = vmatpush1.xpose.msra.mxu0 0.0
        %1777 = vmatprep.subr.mxu0 0.0
        %1778 = vmatpush1.xpose.msra.mxu0 0.0
        %1779 = vmatprep.subr.mxu0 0.0
        %1780 = vmatpush1.xpose.msra.mxu0 0.0
        %1781 = vmatprep.subr.mxu0 0.0
        %1782 = vmatpush1.xpose.msra.mxu0 0.0
        %1783 = vmatprep.subr.mxu0 0.0
        %1784 = vmatpush1.xpose.msra.mxu0 0.0
        %1785 = vmatprep.subr.mxu0 0.0
        %1786 = vmatpush1.xpose.msra.mxu0 0.0
        %1787 = vmatprep.subr.mxu0 0.0
        %1788 = vmatpush1.xpose.msra.mxu0 0.0
        %1789 = vmatprep.subr.mxu0 0.0
        %1790 = vmatpush1.xpose.msra.mxu0 0.0
        %1791 = vmatprep.subr.mxu0 0.0
        %1792 = vmatpush1.xpose.msra.mxu0 0.0
        %1793 = vmatprep.subr.mxu0 0.0
        %1794 = vmatpush1.xpose.msra.mxu0 0.0
        %1795 = vmatprep.subr.mxu0 0.0
        %1796 = vmatpush1.xpose.msra.mxu0 0.0
        %1797 = vmatprep.subr.mxu0 0.0
        %1798 = vmatpush1.xpose.msra.mxu0 0.0
        %1799 = vmatprep.subr.mxu0 0.0
        %1800 = vmatpush1.xpose.msra.mxu0 0.0
        %1801 = vmatprep.subr.mxu0 0.0
        %1802 = vmatpush1.xpose.msra.mxu0 0.0
        %1803 = vmatprep.subr.mxu0 0.0
        %1804 = vmatpush1.xpose.msra.mxu0 %v1771
        %1805 = vmatprep.subr.mxu0 0.0
        %1806 = vmatpush2.xpose.msra.mxu0 0.0
        %1807 = vmatprep.subr.mxu0 0.0
        %1808 = vmatpush2.xpose.msra.mxu0 0.0
        %1809 = vmatprep.subr.mxu0 0.0
        %1810 = vmatpush2.xpose.msra.mxu0 0.0
        %1811 = vmatprep.subr.mxu0 0.0
        %1812 = vmatpush2.xpose.msra.mxu0 0.0
        %1813 = vmatprep.subr.mxu0 0.0
        %1814 = vmatpush2.xpose.msra.mxu0 0.0
        %1815 = vmatprep.subr.mxu0 0.0
        %1816 = vmatpush2.xpose.msra.mxu0 0.0
        %1817 = vmatprep.subr.mxu0 0.0
        %1818 = vmatpush2.xpose.msra.mxu0 0.0
        %1819 = vmatprep.subr.mxu0 0.0
        %1820 = vmatpush2.xpose.msra.mxu0 0.0
        %1821 = vmatprep.subr.mxu0 0.0
        %1822 = vmatpush2.xpose.msra.mxu0 0.0
        %1823 = vmatprep.subr.mxu0 0.0
        %1824 = vmatpush2.xpose.msra.mxu0 0.0
        %1825 = vmatprep.subr.mxu0 0.0
        %1826 = vmatpush2.xpose.msra.mxu0 0.0
        %1827 = vmatprep.subr.mxu0 0.0
        %1828 = vmatpush2.xpose.msra.mxu0 0.0
        %1829 = vmatprep.subr.mxu0 0.0
        %1830 = vmatpush2.xpose.msra.mxu0 0.0
        %1831 = vmatprep.subr.mxu0 0.0
        %1832 = vmatpush2.xpose.msra.mxu0 0.0
        %1833 = vmatprep.subr.mxu0 0.0
        %1834 = vmatpush2.xpose.msra.mxu0 0.0
        %1835 = vmatprep.subr.mxu0 0.0
        %1836 = vmatpush2.xpose.msra.mxu0 0.0
        %1837 = vmatprep.mubr.f32.mxu0 0.0
        %1838 = vmatmul.mubr.f32.gmra.mxu0 %v1769
        %v1839 = vpop.f32.mrf.mxu0
        %v1840 = vadd.f32 %v1032, %v1839
        %v1841 = vpop.f32.mrf.mxu0
        %1842 = vdwg.mxu0
        %v1843 = vsel %vm1186, %v1762, -inf
        %1844 = vmax.xlane.f32.xlu0 %v1843
        %v1845 = vpop.xlane.xlu0 %1844
        %v1846 = vsel %vm1186, %v1840, -inf
        %1847 = vmax.xlane.f32.xlu0 %v1846
        %v1848 = vpop.xlane.xlu0 %1847
        %v1849 = vsub.f32 %v1762, %v1845
        %v1850 = vsub.f32 %v1840, %v1848
        %v1851 = vmul.f32 %v1849, 1.442695
        %v1852 = vpow.pop %v1851
        %v1853 = vmul.f32 %v1850, 1.442695
        %v1854 = vpow.pop %v1853
        %v1855 = vsel %vm1186, %v1852, 0.0
        %1856 = vadd.xlane.f32.xlu0 %v1855
        %v1857 = vpop.xlane.xlu0 %1856
        %v1858 = vsel %vm1186, %v1854, 0.0
        %1859 = vadd.xlane.f32.xlu0 %v1858
        %v1860 = vpop.xlane.xlu0 %1859
        %v1861 = vrcp.pop %v1857
        %v1862 = vrcp.pop %v1860
        %v1863 = vmul.f32 %v1852, %v1861
        %v1864 = vmul.f32 %v1854, %v1862
        %1865 = vrot.lane.b32.xlu0 %v967, 64
        %v1866 = vpop.permute.xlu0 %1865
        %v1869 = vsel %vm1186, %v1863, 0
        %1871 = vmatprep.subr.mxu0 0.0
        %1872 = vmatpush1.msra.mxu0 0.0
        %1873 = vmatprep.subr.mxu0 0.0
        %1874 = vmatpush1.msra.mxu0 0.0
        %1875 = vmatprep.subr.mxu0 0.0
        %1876 = vmatpush1.msra.mxu0 0.0
        %1877 = vmatprep.subr.mxu0 0.0
        %1878 = vmatpush1.msra.mxu0 0.0
        %1879 = vmatprep.subr.mxu0 0.0
        %1880 = vmatpush1.msra.mxu0 0.0
        %1881 = vmatprep.subr.mxu0 0.0
        %1882 = vmatpush1.msra.mxu0 0.0
        %1883 = vmatprep.subr.mxu0 0.0
        %1884 = vmatpush1.msra.mxu0 0.0
        %1885 = vmatprep.subr.mxu0 0.0
        %1886 = vmatpush1.msra.mxu0 0.0
        %1887 = vmatprep.subr.mxu0 0.0
        %1888 = vmatpush1.msra.mxu0 0.0
        %1889 = vmatprep.subr.mxu0 0.0
        %1890 = vmatpush1.msra.mxu0 0.0
        %1891 = vmatprep.subr.mxu0 0.0
        %1892 = vmatpush1.msra.mxu0 0.0
        %1893 = vmatprep.subr.mxu0 0.0
        %1894 = vmatpush1.msra.mxu0 0.0
        %1895 = vmatprep.subr.mxu0 0.0
        %1896 = vmatpush1.msra.mxu0 0.0
        %1897 = vmatprep.subr.mxu0 0.0
        %1898 = vmatpush1.msra.mxu0 0.0
        %1899 = vmatprep.subr.mxu0 0.0
        %1900 = vmatpush1.msra.mxu0 0.0
        %1901 = vmatprep.subr.mxu0 0.0
        %1902 = vmatpush1.msra.mxu0 %v1866
        %1903 = vmatprep.subr.mxu0 0.0
        %1904 = vmatpush2.msra.mxu0 0.0
        %1905 = vmatprep.subr.mxu0 0.0
        %1906 = vmatpush2.msra.mxu0 0.0
        %1907 = vmatprep.subr.mxu0 0.0
        %1908 = vmatpush2.msra.mxu0 0.0
        %1909 = vmatprep.subr.mxu0 0.0
        %1910 = vmatpush2.msra.mxu0 0.0
        %1911 = vmatprep.subr.mxu0 0.0
        %1912 = vmatpush2.msra.mxu0 0.0
        %1913 = vmatprep.subr.mxu0 0.0
        %1914 = vmatpush2.msra.mxu0 0.0
        %1915 = vmatprep.subr.mxu0 0.0
        %1916 = vmatpush2.msra.mxu0 0.0
        %1917 = vmatprep.subr.mxu0 0.0
        %1918 = vmatpush2.msra.mxu0 0.0
        %1919 = vmatprep.subr.mxu0 0.0
        %1920 = vmatpush2.msra.mxu0 0.0
        %1921 = vmatprep.subr.mxu0 0.0
        %1922 = vmatpush2.msra.mxu0 0.0
        %1923 = vmatprep.subr.mxu0 0.0
        %1924 = vmatpush2.msra.mxu0 0.0
        %1925 = vmatprep.subr.mxu0 0.0
        %1926 = vmatpush2.msra.mxu0 0.0
        %1927 = vmatprep.subr.mxu0 0.0
        %1928 = vmatpush2.msra.mxu0 0.0
        %1929 = vmatprep.subr.mxu0 0.0
        %1930 = vmatpush2.msra.mxu0 0.0
        %1931 = vmatprep.subr.mxu0 0.0
        %1932 = vmatpush2.msra.mxu0 0.0
        %1933 = vmatprep.subr.mxu0 0.0
        %1934 = vmatpush2.msra.mxu0 0.0
        %1935 = vmatprep.mubr.f32.mxu0 0.0
        %1936 = vmatmul.mubr.f32.gmra.mxu0 %v1869
        %v1937 = vpop.f32.mrf.mxu0
        %v1938 = vadd.f32 0.0, %v1937
        %v1939 = vpop.f32.mrf.mxu0
        %1940 = vdwg.mxu0
        %1941 = vrot.lane.b32.xlu0 %v971, 64
        %v1942 = vpop.permute.xlu0 %1941
        %v1945 = vsel %vm1186, %v1864, 0
        %1947 = vmatprep.subr.mxu0 0.0
        %1948 = vmatpush1.msra.mxu0 0.0
        %1949 = vmatprep.subr.mxu0 0.0
        %1950 = vmatpush1.msra.mxu0 0.0
        %1951 = vmatprep.subr.mxu0 0.0
        %1952 = vmatpush1.msra.mxu0 0.0
        %1953 = vmatprep.subr.mxu0 0.0
        %1954 = vmatpush1.msra.mxu0 0.0
        %1955 = vmatprep.subr.mxu0 0.0
        %1956 = vmatpush1.msra.mxu0 0.0
        %1957 = vmatprep.subr.mxu0 0.0
        %1958 = vmatpush1.msra.mxu0 0.0
        %1959 = vmatprep.subr.mxu0 0.0
        %1960 = vmatpush1.msra.mxu0 0.0
        %1961 = vmatprep.subr.mxu0 0.0
        %1962 = vmatpush1.msra.mxu0 0.0
        %1963 = vmatprep.subr.mxu0 0.0
        %1964 = vmatpush1.msra.mxu0 0.0
        %1965 = vmatprep.subr.mxu0 0.0
        %1966 = vmatpush1.msra.mxu0 0.0
        %1967 = vmatprep.subr.mxu0 0.0
        %1968 = vmatpush1.msra.mxu0 0.0
        %1969 = vmatprep.subr.mxu0 0.0
        %1970 = vmatpush1.msra.mxu0 0.0
        %1971 = vmatprep.subr.mxu0 0.0
        %1972 = vmatpush1.msra.mxu0 0.0
        %1973 = vmatprep.subr.mxu0 0.0
        %1974 = vmatpush1.msra.mxu0 0.0
        %1975 = vmatprep.subr.mxu0 0.0
        %1976 = vmatpush1.msra.mxu0 0.0
        %1977 = vmatprep.subr.mxu0 0.0
        %1978 = vmatpush1.msra.mxu0 %v1942
        %1979 = vmatprep.subr.mxu0 0.0
        %1980 = vmatpush2.msra.mxu0 0.0
        %1981 = vmatprep.subr.mxu0 0.0
        %1982 = vmatpush2.msra.mxu0 0.0
        %1983 = vmatprep.subr.mxu0 0.0
        %1984 = vmatpush2.msra.mxu0 0.0
        %1985 = vmatprep.subr.mxu0 0.0
        %1986 = vmatpush2.msra.mxu0 0.0
        %1987 = vmatprep.subr.mxu0 0.0
        %1988 = vmatpush2.msra.mxu0 0.0
        %1989 = vmatprep.subr.mxu0 0.0
        %1990 = vmatpush2.msra.mxu0 0.0
        %1991 = vmatprep.subr.mxu0 0.0
        %1992 = vmatpush2.msra.mxu0 0.0
        %1993 = vmatprep.subr.mxu0 0.0
        %1994 = vmatpush2.msra.mxu0 0.0
        %1995 = vmatprep.subr.mxu0 0.0
        %1996 = vmatpush2.msra.mxu0 0.0
        %1997 = vmatprep.subr.mxu0 0.0
        %1998 = vmatpush2.msra.mxu0 0.0
        %1999 = vmatprep.subr.mxu0 0.0
        %2000 = vmatpush2.msra.mxu0 0.0
        %2001 = vmatprep.subr.mxu0 0.0
        %2002 = vmatpush2.msra.mxu0 0.0
        %2003 = vmatprep.subr.mxu0 0.0
        %2004 = vmatpush2.msra.mxu0 0.0
        %2005 = vmatprep.subr.mxu0 0.0
        %2006 = vmatpush2.msra.mxu0 0.0
        %2007 = vmatprep.subr.mxu0 0.0
        %2008 = vmatpush2.msra.mxu0 0.0
        %2009 = vmatprep.subr.mxu0 0.0
        %2010 = vmatpush2.msra.mxu0 0.0
        %2011 = vmatprep.mubr.f32.mxu0 0.0
        %2012 = vmatmul.mubr.f32.gmra.mxu0 %v1945
        %v2013 = vpop.f32.mrf.mxu0
        %v2014 = vadd.f32 0.0, %v2013
        %v2015 = vpop.f32.mrf.mxu0
        %2016 = vdwg.mxu0
        %2017 = vrot.lane.b32.xlu0 %v1024, 32
        %v2018 = vpop.permute.xlu0 %2017
        %2019 = vrot.lane.b32.xlu0 %v1030, 32
        %v2020 = vpop.permute.xlu0 %2019
        %v2021 = vsel %vm1033, %v2018, 0
        %v2023 = vsel %vm1033, %v2020, 0
        %2025 = vmatprep.subr.mxu0 0.0
        %2026 = vmatpush1.xpose.msra.mxu0 0.0
        %2027 = vmatprep.subr.mxu0 0.0
        %2028 = vmatpush1.xpose.msra.mxu0 0.0
        %2029 = vmatprep.subr.mxu0 0.0
        %2030 = vmatpush1.xpose.msra.mxu0 0.0
        %2031 = vmatprep.subr.mxu0 0.0
        %2032 = vmatpush1.xpose.msra.mxu0 0.0
        %2033 = vmatprep.subr.mxu0 0.0
        %2034 = vmatpush1.xpose.msra.mxu0 0.0
        %2035 = vmatprep.subr.mxu0 0.0
        %2036 = vmatpush1.xpose.msra.mxu0 0.0
        %2037 = vmatprep.subr.mxu0 0.0
        %2038 = vmatpush1.xpose.msra.mxu0 0.0
        %2039 = vmatprep.subr.mxu0 0.0
        %2040 = vmatpush1.xpose.msra.mxu0 0.0
        %2041 = vmatprep.subr.mxu0 0.0
        %2042 = vmatpush1.xpose.msra.mxu0 0.0
        %2043 = vmatprep.subr.mxu0 0.0
        %2044 = vmatpush1.xpose.msra.mxu0 0.0
        %2045 = vmatprep.subr.mxu0 0.0
        %2046 = vmatpush1.xpose.msra.mxu0 0.0
        %2047 = vmatprep.subr.mxu0 0.0
        %2048 = vmatpush1.xpose.msra.mxu0 0.0
        %2049 = vmatprep.subr.mxu0 0.0
        %2050 = vmatpush1.xpose.msra.mxu0 0.0
        %2051 = vmatprep.subr.mxu0 0.0
        %2052 = vmatpush1.xpose.msra.mxu0 0.0
        %2053 = vmatprep.subr.mxu0 0.0
        %2054 = vmatpush1.xpose.msra.mxu0 0.0
        %2055 = vmatprep.subr.mxu0 0.0
        %2056 = vmatpush1.xpose.msra.mxu0 %v2023
        %2057 = vmatprep.subr.mxu0 0.0
        %2058 = vmatpush2.xpose.msra.mxu0 0.0
        %2059 = vmatprep.subr.mxu0 0.0
        %2060 = vmatpush2.xpose.msra.mxu0 0.0
        %2061 = vmatprep.subr.mxu0 0.0
        %2062 = vmatpush2.xpose.msra.mxu0 0.0
        %2063 = vmatprep.subr.mxu0 0.0
        %2064 = vmatpush2.xpose.msra.mxu0 0.0
        %2065 = vmatprep.subr.mxu0 0.0
        %2066 = vmatpush2.xpose.msra.mxu0 0.0
        %2067 = vmatprep.subr.mxu0 0.0
        %2068 = vmatpush2.xpose.msra.mxu0 0.0
        %2069 = vmatprep.subr.mxu0 0.0
        %2070 = vmatpush2.xpose.msra.mxu0 0.0
        %2071 = vmatprep.subr.mxu0 0.0
        %2072 = vmatpush2.xpose.msra.mxu0 0.0
        %2073 = vmatprep.subr.mxu0 0.0
        %2074 = vmatpush2.xpose.msra.mxu0 0.0
        %2075 = vmatprep.subr.mxu0 0.0
        %2076 = vmatpush2.xpose.msra.mxu0 0.0
        %2077 = vmatprep.subr.mxu0 0.0
        %2078 = vmatpush2.xpose.msra.mxu0 0.0
        %2079 = vmatprep.subr.mxu0 0.0
        %2080 = vmatpush2.xpose.msra.mxu0 0.0
        %2081 = vmatprep.subr.mxu0 0.0
        %2082 = vmatpush2.xpose.msra.mxu0 0.0
        %2083 = vmatprep.subr.mxu0 0.0
        %2084 = vmatpush2.xpose.msra.mxu0 0.0
        %2085 = vmatprep.subr.mxu0 0.0
        %2086 = vmatpush2.xpose.msra.mxu0 0.0
        %2087 = vmatprep.subr.mxu0 0.0
        %2088 = vmatpush2.xpose.msra.mxu0 0.0
        %2089 = vmatprep.mubr.f32.mxu0 0.0
        %2090 = vmatmul.mubr.f32.gmra.mxu0 %v2021
        %v2091 = vpop.f32.mrf.mxu0
        %v2092 = vadd.f32 %v1032, %v2091
        %v2093 = vpop.f32.mrf.mxu0
        %2094 = vdwg.mxu0
        %2095 = vrot.lane.b32.xlu0 %v1025, 32
        %v2096 = vpop.permute.xlu0 %2095
        %2097 = vrot.lane.b32.xlu0 %v1031, 32
        %v2098 = vpop.permute.xlu0 %2097
        %v2099 = vsel %vm1033, %v2096, 0
        %v2101 = vsel %vm1033, %v2098, 0
        %2103 = vmatprep.subr.mxu0 0.0
        %2104 = vmatpush1.xpose.msra.mxu0 0.0
        %2105 = vmatprep.subr.mxu0 0.0
        %2106 = vmatpush1.xpose.msra.mxu0 0.0
        %2107 = vmatprep.subr.mxu0 0.0
        %2108 = vmatpush1.xpose.msra.mxu0 0.0
        %2109 = vmatprep.subr.mxu0 0.0
        %2110 = vmatpush1.xpose.msra.mxu0 0.0
        %2111 = vmatprep.subr.mxu0 0.0
        %2112 = vmatpush1.xpose.msra.mxu0 0.0
        %2113 = vmatprep.subr.mxu0 0.0
        %2114 = vmatpush1.xpose.msra.mxu0 0.0
        %2115 = vmatprep.subr.mxu0 0.0
        %2116 = vmatpush1.xpose.msra.mxu0 0.0
        %2117 = vmatprep.subr.mxu0 0.0
        %2118 = vmatpush1.xpose.msra.mxu0 0.0
        %2119 = vmatprep.subr.mxu0 0.0
        %2120 = vmatpush1.xpose.msra.mxu0 0.0
        %2121 = vmatprep.subr.mxu0 0.0
        %2122 = vmatpush1.xpose.msra.mxu0 0.0
        %2123 = vmatprep.subr.mxu0 0.0
        %2124 = vmatpush1.xpose.msra.mxu0 0.0
        %2125 = vmatprep.subr.mxu0 0.0
        %2126 = vmatpush1.xpose.msra.mxu0 0.0
        %2127 = vmatprep.subr.mxu0 0.0
        %2128 = vmatpush1.xpose.msra.mxu0 0.0
        %2129 = vmatprep.subr.mxu0 0.0
        %2130 = vmatpush1.xpose.msra.mxu0 0.0
        %2131 = vmatprep.subr.mxu0 0.0
        %2132 = vmatpush1.xpose.msra.mxu0 0.0
        %2133 = vmatprep.subr.mxu0 0.0
        %2134 = vmatpush1.xpose.msra.mxu0 %v2101
        %2135 = vmatprep.subr.mxu0 0.0
        %2136 = vmatpush2.xpose.msra.mxu0 0.0
        %2137 = vmatprep.subr.mxu0 0.0
        %2138 = vmatpush2.xpose.msra.mxu0 0.0
        %2139 = vmatprep.subr.mxu0 0.0
        %2140 = vmatpush2.xpose.msra.mxu0 0.0
        %2141 = vmatprep.subr.mxu0 0.0
        %2142 = vmatpush2.xpose.msra.mxu0 0.0
        %2143 = vmatprep.subr.mxu0 0.0
        %2144 = vmatpush2.xpose.msra.mxu0 0.0
        %2145 = vmatprep.subr.mxu0 0.0
        %2146 = vmatpush2.xpose.msra.mxu0 0.0
        %2147 = vmatprep.subr.mxu0 0.0
        %2148 = vmatpush2.xpose.msra.mxu0 0.0
        %2149 = vmatprep.subr.mxu0 0.0
        %2150 = vmatpush2.xpose.msra.mxu0 0.0
        %2151 = vmatprep.subr.mxu0 0.0
        %2152 = vmatpush2.xpose.msra.mxu0 0.0
        %2153 = vmatprep.subr.mxu0 0.0
        %2154 = vmatpush2.xpose.msra.mxu0 0.0
        %2155 = vmatprep.subr.mxu0 0.0
        %2156 = vmatpush2.xpose.msra.mxu0 0.0
        %2157 = vmatprep.subr.mxu0 0.0
        %2158 = vmatpush2.xpose.msra.mxu0 0.0
        %2159 = vmatprep.subr.mxu0 0.0
        %2160 = vmatpush2.xpose.msra.mxu0 0.0
        %2161 = vmatprep.subr.mxu0 0.0
        %2162 = vmatpush2.xpose.msra.mxu0 0.0
        %2163 = vmatprep.subr.mxu0 0.0
        %2164 = vmatpush2.xpose.msra.mxu0 0.0
        %2165 = vmatprep.subr.mxu0 0.0
        %2166 = vmatpush2.xpose.msra.mxu0 0.0
        %2167 = vmatprep.mubr.f32.mxu0 0.0
        %2168 = vmatmul.mubr.f32.gmra.mxu0 %v2099
        %v2169 = vpop.f32.mrf.mxu0
        %v2170 = vadd.f32 %v1032, %v2169
        %v2171 = vpop.f32.mrf.mxu0
        %2172 = vdwg.mxu0
        %v2173 = vsel %vm1186, %v2092, -inf
        %2174 = vmax.xlane.f32.xlu0 %v2173
        %v2175 = vpop.xlane.xlu0 %2174
        %v2176 = vsel %vm1186, %v2170, -inf
        %2177 = vmax.xlane.f32.xlu0 %v2176
        %v2178 = vpop.xlane.xlu0 %2177
        %v2179 = vsub.f32 %v2092, %v2175
        %v2180 = vsub.f32 %v2170, %v2178
        %v2181 = vmul.f32 %v2179, 1.442695
        %v2182 = vpow.pop %v2181
        %v2183 = vmul.f32 %v2180, 1.442695
        %v2184 = vpow.pop %v2183
        %v2185 = vsel %vm1186, %v2182, 0.0
        %2186 = vadd.xlane.f32.xlu0 %v2185
        %v2187 = vpop.xlane.xlu0 %2186
        %v2188 = vsel %vm1186, %v2184, 0.0
        %2189 = vadd.xlane.f32.xlu0 %v2188
        %v2190 = vpop.xlane.xlu0 %2189
        %v2191 = vrcp.pop %v2187
        %v2192 = vrcp.pop %v2190
        %v2193 = vmul.f32 %v2182, %v2191
        %v2194 = vmul.f32 %v2184, %v2192
        %2195 = vrot.lane.b32.xlu0 %v967, 32
        %v2196 = vpop.permute.xlu0 %2195
        %v2199 = vsel %vm1186, %v2193, 0
        %2201 = vmatprep.subr.mxu0 0.0
        %2202 = vmatpush1.msra.mxu0 0.0
        %2203 = vmatprep.subr.mxu0 0.0
        %2204 = vmatpush1.msra.mxu0 0.0
        %2205 = vmatprep.subr.mxu0 0.0
        %2206 = vmatpush1.msra.mxu0 0.0
        %2207 = vmatprep.subr.mxu0 0.0
        %2208 = vmatpush1.msra.mxu0 0.0
        %2209 = vmatprep.subr.mxu0 0.0
        %2210 = vmatpush1.msra.mxu0 0.0
        %2211 = vmatprep.subr.mxu0 0.0
        %2212 = vmatpush1.msra.mxu0 0.0
        %2213 = vmatprep.subr.mxu0 0.0
        %2214 = vmatpush1.msra.mxu0 0.0
        %2215 = vmatprep.subr.mxu0 0.0
        %2216 = vmatpush1.msra.mxu0 0.0
        %2217 = vmatprep.subr.mxu0 0.0
        %2218 = vmatpush1.msra.mxu0 0.0
        %2219 = vmatprep.subr.mxu0 0.0
        %2220 = vmatpush1.msra.mxu0 0.0
        %2221 = vmatprep.subr.mxu0 0.0
        %2222 = vmatpush1.msra.mxu0 0.0
        %2223 = vmatprep.subr.mxu0 0.0
        %2224 = vmatpush1.msra.mxu0 0.0
        %2225 = vmatprep.subr.mxu0 0.0
        %2226 = vmatpush1.msra.mxu0 0.0
        %2227 = vmatprep.subr.mxu0 0.0
        %2228 = vmatpush1.msra.mxu0 0.0
        %2229 = vmatprep.subr.mxu0 0.0
        %2230 = vmatpush1.msra.mxu0 0.0
        %2231 = vmatprep.subr.mxu0 0.0
        %2232 = vmatpush1.msra.mxu0 %v2196
        %2233 = vmatprep.subr.mxu0 0.0
        %2234 = vmatpush2.msra.mxu0 0.0
        %2235 = vmatprep.subr.mxu0 0.0
        %2236 = vmatpush2.msra.mxu0 0.0
        %2237 = vmatprep.subr.mxu0 0.0
        %2238 = vmatpush2.msra.mxu0 0.0
        %2239 = vmatprep.subr.mxu0 0.0
        %2240 = vmatpush2.msra.mxu0 0.0
        %2241 = vmatprep.subr.mxu0 0.0
        %2242 = vmatpush2.msra.mxu0 0.0
        %2243 = vmatprep.subr.mxu0 0.0
        %2244 = vmatpush2.msra.mxu0 0.0
        %2245 = vmatprep.subr.mxu0 0.0
        %2246 = vmatpush2.msra.mxu0 0.0
        %2247 = vmatprep.subr.mxu0 0.0
        %2248 = vmatpush2.msra.mxu0 0.0
        %2249 = vmatprep.subr.mxu0 0.0
        %2250 = vmatpush2.msra.mxu0 0.0
        %2251 = vmatprep.subr.mxu0 0.0
        %2252 = vmatpush2.msra.mxu0 0.0
        %2253 = vmatprep.subr.mxu0 0.0
        %2254 = vmatpush2.msra.mxu0 0.0
        %2255 = vmatprep.subr.mxu0 0.0
        %2256 = vmatpush2.msra.mxu0 0.0
        %2257 = vmatprep.subr.mxu0 0.0
        %2258 = vmatpush2.msra.mxu0 0.0
        %2259 = vmatprep.subr.mxu0 0.0
        %2260 = vmatpush2.msra.mxu0 0.0
        %2261 = vmatprep.subr.mxu0 0.0
        %2262 = vmatpush2.msra.mxu0 0.0
        %2263 = vmatprep.subr.mxu0 0.0
        %2264 = vmatpush2.msra.mxu0 0.0
        %2265 = vmatprep.mubr.f32.mxu0 0.0
        %2266 = vmatmul.mubr.f32.gmra.mxu0 %v2199
        %v2267 = vpop.f32.mrf.mxu0
        %v2268 = vadd.f32 0.0, %v2267
        %v2269 = vpop.f32.mrf.mxu0
        %2270 = vdwg.mxu0
        %2271 = vrot.lane.b32.xlu0 %v971, 32
        %v2272 = vpop.permute.xlu0 %2271
        %v2275 = vsel %vm1186, %v2194, 0
        %2277 = vmatprep.subr.mxu0 0.0
        %2278 = vmatpush1.msra.mxu0 0.0
        %2279 = vmatprep.subr.mxu0 0.0
        %2280 = vmatpush1.msra.mxu0 0.0
        %2281 = vmatprep.subr.mxu0 0.0
        %2282 = vmatpush1.msra.mxu0 0.0
        %2283 = vmatprep.subr.mxu0 0.0
        %2284 = vmatpush1.msra.mxu0 0.0
        %2285 = vmatprep.subr.mxu0 0.0
        %2286 = vmatpush1.msra.mxu0 0.0
        %2287 = vmatprep.subr.mxu0 0.0
        %2288 = vmatpush1.msra.mxu0 0.0
        %2289 = vmatprep.subr.mxu0 0.0
        %2290 = vmatpush1.msra.mxu0 0.0
        %2291 = vmatprep.subr.mxu0 0.0
        %2292 = vmatpush1.msra.mxu0 0.0
        %2293 = vmatprep.subr.mxu0 0.0
        %2294 = vmatpush1.msra.mxu0 0.0
        %2295 = vmatprep.subr.mxu0 0.0
        %2296 = vmatpush1.msra.mxu0 0.0
        %2297 = vmatprep.subr.mxu0 0.0
        %2298 = vmatpush1.msra.mxu0 0.0
        %2299 = vmatprep.subr.mxu0 0.0
        %2300 = vmatpush1.msra.mxu0 0.0
        %2301 = vmatprep.subr.mxu0 0.0
        %2302 = vmatpush1.msra.mxu0 0.0
        %2303 = vmatprep.subr.mxu0 0.0
        %2304 = vmatpush1.msra.mxu0 0.0
        %2305 = vmatprep.subr.mxu0 0.0
        %2306 = vmatpush1.msra.mxu0 0.0
        %2307 = vmatprep.subr.mxu0 0.0
        %2308 = vmatpush1.msra.mxu0 %v2272
        %2309 = vmatprep.subr.mxu0 0.0
        %2310 = vmatpush2.msra.mxu0 0.0
        %2311 = vmatprep.subr.mxu0 0.0
        %2312 = vmatpush2.msra.mxu0 0.0
        %2313 = vmatprep.subr.mxu0 0.0
        %2314 = vmatpush2.msra.mxu0 0.0
        %2315 = vmatprep.subr.mxu0 0.0
        %2316 = vmatpush2.msra.mxu0 0.0
        %2317 = vmatprep.subr.mxu0 0.0
        %2318 = vmatpush2.msra.mxu0 0.0
        %2319 = vmatprep.subr.mxu0 0.0
        %2320 = vmatpush2.msra.mxu0 0.0
        %2321 = vmatprep.subr.mxu0 0.0
        %2322 = vmatpush2.msra.mxu0 0.0
        %2323 = vmatprep.subr.mxu0 0.0
        %2324 = vmatpush2.msra.mxu0 0.0
        %2325 = vmatprep.subr.mxu0 0.0
        %2326 = vmatpush2.msra.mxu0 0.0
        %2327 = vmatprep.subr.mxu0 0.0
        %2328 = vmatpush2.msra.mxu0 0.0
        %2329 = vmatprep.subr.mxu0 0.0
        %2330 = vmatpush2.msra.mxu0 0.0
        %2331 = vmatprep.subr.mxu0 0.0
        %2332 = vmatpush2.msra.mxu0 0.0
        %2333 = vmatprep.subr.mxu0 0.0
        %2334 = vmatpush2.msra.mxu0 0.0
        %2335 = vmatprep.subr.mxu0 0.0
        %2336 = vmatpush2.msra.mxu0 0.0
        %2337 = vmatprep.subr.mxu0 0.0
        %2338 = vmatpush2.msra.mxu0 0.0
        %2339 = vmatprep.subr.mxu0 0.0
        %2340 = vmatpush2.msra.mxu0 0.0
        %2341 = vmatprep.mubr.f32.mxu0 0.0
        %2342 = vmatmul.mubr.f32.gmra.mxu0 %v2275
        %v2343 = vpop.f32.mrf.mxu0
        %v2344 = vadd.f32 0.0, %v2343
        %v2345 = vpop.f32.mrf.mxu0
        %2346 = vdwg.mxu0
        %2349 = vrot.lane.b32.xlu0 %v1607, 32
        %v2350 = vpop.permute.xlu0 %2349
        %2351 = vrot.lane.b32.xlu0 %v1684, 32
        %v2352 = vpop.permute.xlu0 %2351
        %2357 = vrot.lane.b32.xlu0 %v1938, 64
        %v2358 = vpop.permute.xlu0 %2357
        %2359 = vrot.lane.b32.xlu0 %v2014, 64
        %v2360 = vpop.permute.xlu0 %2359
        %2365 = vrot.lane.b32.xlu0 %v2268, 96
        %v2366 = vpop.permute.xlu0 %2365
        %2367 = vrot.lane.b32.xlu0 %v2344, 96
        %v2368 = vpop.permute.xlu0 %2367
        %v2371 = vsel %vm1033, %v1279, %v2350
        %v2372 = vsel %vm1033, %v1352, %v2352
        %vm2373 = vcmask 523264
        %v2374 = vsel %vm2373, %v2371, %v2358
        %v2375 = vsel %vm2373, %v2372, %v2360
        %vm2376 = vcmask 785408
        %v2377 = vsel %vm2376, %v2374, %v2366
        %v2378 = vsel %vm2376, %v2375, %v2368
        %v2379 = vpack.c.bf16 %v2378, %v2377
        %v2380 = vld [vmem:[%s592] sm:$0xf]
        %v2381 = vld [vmem:[%s592 + $0x4] sm:$0xf]
        %v2382 = vld [vmem:[%s592 + $0x8] sm:$0xf]
        %v2383 = vld [vmem:[%s592 + $0xc] sm:$0xf]
        %v2384 = vld [vmem:[%s592 + $0x10] sm:$0xf]
        %v2385 = vld [vmem:[%s592 + $0x14] sm:$0xf]
        %v2386 = vld [vmem:[%s592 + $0x18] sm:$0xf]
        %v2387 = vld [vmem:[%s592 + $0x1c] sm:$0xf]
        %v2388 = vld [vmem:[%s592 + $0x20] sm:$0xf]
        %v2389 = vld [vmem:[%s592 + $0x24] sm:$0xf]
        %v2390 = vld [vmem:[%s592 + $0x28] sm:$0xf]
        %v2391 = vld [vmem:[%s592 + $0x2c] sm:$0xf]
        %v2392 = vld [vmem:[%s592 + $0x30] sm:$0xf]
        %v2393 = vld [vmem:[%s592 + $0x34] sm:$0xf]
        %v2394 = vld [vmem:[%s592 + $0x38] sm:$0xf]
        %v2395 = vld [vmem:[%s592 + $0x3c] sm:$0xf]
        %v2412 = vunpack.c.l.b16 %v2380
        %v2413 = vunpack.c.l.b16 %v2381
        %v2414 = vunpack.c.l.b16 %v2382
        %v2415 = vunpack.c.l.b16 %v2383
        %v2416 = vunpack.c.l.b16 %v2384
        %v2417 = vunpack.c.l.b16 %v2385
        %v2418 = vunpack.c.l.b16 %v2386
        %v2419 = vunpack.c.l.b16 %v2387
        %v2420 = vunpack.c.l.b16 %v2388
        %v2421 = vunpack.c.l.b16 %v2389
        %v2422 = vunpack.c.l.b16 %v2390
        %v2423 = vunpack.c.l.b16 %v2391
        %v2424 = vunpack.c.l.b16 %v2392
        %v2425 = vunpack.c.l.b16 %v2393
        %v2426 = vunpack.c.l.b16 %v2394
        %v2427 = vunpack.c.l.b16 %v2395
        %v2428 = vpack.c.b16 %v2413, %v2412
        %v2429 = vpack.c.b16 %v2415, %v2414
        %v2430 = vpack.c.b16 %v2417, %v2416
        %v2431 = vpack.c.b16 %v2419, %v2418
        %v2432 = vpack.c.b16 %v2421, %v2420
        %v2433 = vpack.c.b16 %v2423, %v2422
        %v2434 = vpack.c.b16 %v2425, %v2424
        %v2435 = vpack.c.b16 %v2427, %v2426
        %2444 = vmatprep.subr.bf16.mxu0 0
        %2445 = vmatpush1.bf16.msra.mxu0 %v2435
        %2446 = vmatprep.subr.bf16.mxu0 0
        %2447 = vmatpush1.bf16.msra.mxu0 %v2434
        %2448 = vmatprep.subr.bf16.mxu0 0
        %2449 = vmatpush1.bf16.msra.mxu0 %v2433
        %2450 = vmatprep.subr.bf16.mxu0 0
        %2451 = vmatpush1.bf16.msra.mxu0 %v2432
        %2452 = vmatprep.subr.bf16.mxu0 0
        %2453 = vmatpush1.bf16.msra.mxu0 %v2431
        %2454 = vmatprep.subr.bf16.mxu0 0
        %2455 = vmatpush1.bf16.msra.mxu0 %v2430
        %2456 = vmatprep.subr.bf16.mxu0 0
        %2457 = vmatpush1.bf16.msra.mxu0 %v2429
        %2458 = vmatprep.subr.bf16.mxu0 0
        %2459 = vmatpush1.bf16.msra.mxu0 %v2428
        %2460 = vmatprep.subr.bf16.mxu0 0
        %2461 = vmatpush2.bf16.msra.mxu0 0
        %2462 = vmatprep.subr.bf16.mxu0 0
        %2463 = vmatpush2.bf16.msra.mxu0 0
        %2464 = vmatprep.subr.bf16.mxu0 0
        %2465 = vmatpush2.bf16.msra.mxu0 0
        %2466 = vmatprep.subr.bf16.mxu0 0
        %2467 = vmatpush2.bf16.msra.mxu0 0
        %2468 = vmatprep.subr.bf16.mxu0 0
        %2469 = vmatpush2.bf16.msra.mxu0 0
        %2470 = vmatprep.subr.bf16.mxu0 0
        %2471 = vmatpush2.bf16.msra.mxu0 0
        %2472 = vmatprep.subr.bf16.mxu0 0
        %2473 = vmatpush2.bf16.msra.mxu0 0
        %2474 = vmatprep.subr.bf16.mxu0 0
        %2475 = vmatpush2.bf16.msra.mxu0 0
        %2476 = vmatprep.mubr.bf16.mxu0 0
        %2477 = vmatmul.mubr.bf16.gmra.mxu0 %v2379
        %v2478 = vpop.f32.mrf.mxu0
        %v2479 = vadd.f32 0.0, %v2478
        %v2480 = vpop.f32.mrf.mxu0
        %v2481 = vpop.f32.mrf.mxu0
        %v2482 = vadd.f32 0.0, %v2481
        %v2483 = vpop.f32.mrf.mxu0
        %2484 = vdwg.mxu0
        %v2485 = vadd.f32 %v607, %v2479
        %v2486 = vadd.f32 %v608, %v2482
        %v2487 = vmul.f32 %v2485, %v2485
        %v2488 = vmul.f32 %v2486, %v2486
        %2489 = vadd.xlane.f32.xlu0 %v2487
        %v2490 = vpop.xlane.xlu0 %2489
        %2491 = vadd.xlane.f32.xlu0 %v2488
        %v2492 = vpop.xlane.xlu0 %2491
        %v2493 = vmul.f32 %v2490, %v615
        %v2494 = vmul.f32 %v2492, %v615
        %v2495 = vadd.f32 %v2493, 1e-06
        %v2496 = vadd.f32 %v2494, 1e-06
        %v2497 = vrsqrt.pop %v2495
        %v2498 = vrsqrt.pop %v2496
        %v2499 = vmul.f32 %v2485, %v2497
        %v2500 = vmul.f32 %v2486, %v2498
        %v2501 = vld [vmem:[%s595] sm:$0x1]
        %v2502 = vunpack.c.l.bf16 %v2501
        %v2503 = vlaneseq
        %v2504 = vshrl.u32 %v2503, 7
        %v2505 = vsub.s32 0, %v2504
        %v2506 = vrot.slane %v2502, %v2505
        %v2507 = vmul.f32 %v2499, %v2506
        %v2508 = vmul.f32 %v2500, %v2506
        %v2509 = vpack.c.bf16 %v2508, %v2507
        %v2510 = vld [vmem:[%s511] sm:$0xff]
        %v2511 = vld [vmem:[%s511 + $0x8] sm:$0xff]
        %v2512 = vld [vmem:[%s511 + $0x10] sm:$0xff]
        %v2513 = vld [vmem:[%s511 + $0x18] sm:$0xff]
        %v2514 = vld [vmem:[%s511 + $0x20] sm:$0xff]
        %v2515 = vld [vmem:[%s511 + $0x28] sm:$0xff]
        %v2516 = vld [vmem:[%s511 + $0x30] sm:$0xff]
        %v2517 = vld [vmem:[%s511 + $0x38] sm:$0xff]
        %v2518 = vld [vmem:[%s511 + $0x40] sm:$0xff]
        %v2519 = vld [vmem:[%s511 + $0x48] sm:$0xff]
        %v2520 = vld [vmem:[%s511 + $0x50] sm:$0xff]
        %v2521 = vld [vmem:[%s511 + $0x58] sm:$0xff]
        %v2522 = vld [vmem:[%s511 + $0x60] sm:$0xff]
        %v2523 = vld [vmem:[%s511 + $0x68] sm:$0xff]
        %v2524 = vld [vmem:[%s511 + $0x70] sm:$0xff]
        %v2525 = vld [vmem:[%s511 + $0x78] sm:$0xff]
        %v2526 = vld [vmem:[%s511 + $0x80] sm:$0xff]
        %v2527 = vld [vmem:[%s511 + $0x88] sm:$0xff]
        %v2528 = vld [vmem:[%s511 + $0x90] sm:$0xff]
        %v2529 = vld [vmem:[%s511 + $0x98] sm:$0xff]
        %v2530 = vld [vmem:[%s511 + $0xa0] sm:$0xff]
        %v2531 = vld [vmem:[%s511 + $0xa8] sm:$0xff]
        %v2532 = vld [vmem:[%s511 + $0xb0] sm:$0xff]
        %v2533 = vld [vmem:[%s511 + $0xb8] sm:$0xff]
        %v2534 = vld [vmem:[%s511 + $0xc0] sm:$0xff]
        %v2535 = vld [vmem:[%s511 + $0xc8] sm:$0xff]
        %v2536 = vld [vmem:[%s511 + $0xd0] sm:$0xff]
        %v2537 = vld [vmem:[%s511 + $0xd8] sm:$0xff]
        %v2538 = vld [vmem:[%s511 + $0xe0] sm:$0xff]
        %v2539 = vld [vmem:[%s511 + $0xe8] sm:$0xff]
        %v2540 = vld [vmem:[%s511 + $0xf0] sm:$0xff]
        %v2541 = vld [vmem:[%s511 + $0xf8] sm:$0xff]
        %v2574 = vunpack.c.l.b16 %v2510
        %v2575 = vunpack.c.h.b16 %v2510
        %v2576 = vunpack.c.l.b16 %v2511
        %v2577 = vunpack.c.h.b16 %v2511
        %v2578 = vunpack.c.l.b16 %v2512
        %v2579 = vunpack.c.h.b16 %v2512
        %v2580 = vunpack.c.l.b16 %v2513
        %v2581 = vunpack.c.h.b16 %v2513
        %v2582 = vunpack.c.l.b16 %v2514
        %v2583 = vunpack.c.h.b16 %v2514
        %v2584 = vunpack.c.l.b16 %v2515
        %v2585 = vunpack.c.h.b16 %v2515
        %v2586 = vunpack.c.l.b16 %v2516
        %v2587 = vunpack.c.h.b16 %v2516
        %v2588 = vunpack.c.l.b16 %v2517
        %v2589 = vunpack.c.h.b16 %v2517
        %v2590 = vunpack.c.l.b16 %v2518
        %v2591 = vunpack.c.h.b16 %v2518
        %v2592 = vunpack.c.l.b16 %v2519
        %v2593 = vunpack.c.h.b16 %v2519
        %v2594 = vunpack.c.l.b16 %v2520
        %v2595 = vunpack.c.h.b16 %v2520
        %v2596 = vunpack.c.l.b16 %v2521
        %v2597 = vunpack.c.h.b16 %v2521
        %v2598 = vunpack.c.l.b16 %v2522
        %v2599 = vunpack.c.h.b16 %v2522
        %v2600 = vunpack.c.l.b16 %v2523
        %v2601 = vunpack.c.h.b16 %v2523
        %v2602 = vunpack.c.l.b16 %v2524
        %v2603 = vunpack.c.h.b16 %v2524
        %v2604 = vunpack.c.l.b16 %v2525
        %v2605 = vunpack.c.h.b16 %v2525
        %v2606 = vunpack.c.l.b16 %v2526
        %v2607 = vunpack.c.h.b16 %v2526
        %v2608 = vunpack.c.l.b16 %v2527
        %v2609 = vunpack.c.h.b16 %v2527
        %v2610 = vunpack.c.l.b16 %v2528
        %v2611 = vunpack.c.h.b16 %v2528
        %v2612 = vunpack.c.l.b16 %v2529
        %v2613 = vunpack.c.h.b16 %v2529
        %v2614 = vunpack.c.l.b16 %v2530
        %v2615 = vunpack.c.h.b16 %v2530
        %v2616 = vunpack.c.l.b16 %v2531
        %v2617 = vunpack.c.h.b16 %v2531
        %v2618 = vunpack.c.l.b16 %v2532
        %v2619 = vunpack.c.h.b16 %v2532
        %v2620 = vunpack.c.l.b16 %v2533
        %v2621 = vunpack.c.h.b16 %v2533
        %v2622 = vunpack.c.l.b16 %v2534
        %v2623 = vunpack.c.h.b16 %v2534
        %v2624 = vunpack.c.l.b16 %v2535
        %v2625 = vunpack.c.h.b16 %v2535
        %v2626 = vunpack.c.l.b16 %v2536
        %v2627 = vunpack.c.h.b16 %v2536
        %v2628 = vunpack.c.l.b16 %v2537
        %v2629 = vunpack.c.h.b16 %v2537
        %v2630 = vunpack.c.l.b16 %v2538
        %v2631 = vunpack.c.h.b16 %v2538
        %v2632 = vunpack.c.l.b16 %v2539
        %v2633 = vunpack.c.h.b16 %v2539
        %v2634 = vunpack.c.l.b16 %v2540
        %v2635 = vunpack.c.h.b16 %v2540
        %v2636 = vunpack.c.l.b16 %v2541
        %v2637 = vunpack.c.h.b16 %v2541
        %v2638 = vpack.c.b16 %v2578, %v2574
        %v2639 = vpack.c.b16 %v2579, %v2575
        %v2640 = vpack.c.b16 %v2580, %v2576
        %v2641 = vpack.c.b16 %v2581, %v2577
        %v2642 = vpack.c.b16 %v2586, %v2582
        %v2643 = vpack.c.b16 %v2587, %v2583
        %v2644 = vpack.c.b16 %v2588, %v2584
        %v2645 = vpack.c.b16 %v2589, %v2585
        %v2646 = vpack.c.b16 %v2594, %v2590
        %v2647 = vpack.c.b16 %v2595, %v2591
        %v2648 = vpack.c.b16 %v2596, %v2592
        %v2649 = vpack.c.b16 %v2597, %v2593
        %v2650 = vpack.c.b16 %v2602, %v2598
        %v2651 = vpack.c.b16 %v2603, %v2599
        %v2652 = vpack.c.b16 %v2604, %v2600
        %v2653 = vpack.c.b16 %v2605, %v2601
        %v2654 = vpack.c.b16 %v2610, %v2606
        %v2655 = vpack.c.b16 %v2611, %v2607
        %v2656 = vpack.c.b16 %v2612, %v2608
        %v2657 = vpack.c.b16 %v2613, %v2609
        %v2658 = vpack.c.b16 %v2618, %v2614
        %v2659 = vpack.c.b16 %v2619, %v2615
        %v2660 = vpack.c.b16 %v2620, %v2616
        %v2661 = vpack.c.b16 %v2621, %v2617
        %v2662 = vpack.c.b16 %v2626, %v2622
        %v2663 = vpack.c.b16 %v2627, %v2623
        %v2664 = vpack.c.b16 %v2628, %v2624
        %v2665 = vpack.c.b16 %v2629, %v2625
        %v2666 = vpack.c.b16 %v2634, %v2630
        %v2667 = vpack.c.b16 %v2635, %v2631
        %v2668 = vpack.c.b16 %v2636, %v2632
        %v2669 = vpack.c.b16 %v2637, %v2633
        %2702 = vmatprep.subr.bf16.mxu0 %v2667
        %2703 = vmatpush1.bf16.msra.mxu0 %v2666
        %2704 = vmatprep.subr.bf16.mxu0 %v2663
        %2705 = vmatpush1.bf16.msra.mxu0 %v2662
        %2706 = vmatprep.subr.bf16.mxu0 %v2659
        %2707 = vmatpush1.bf16.msra.mxu0 %v2658
        %2708 = vmatprep.subr.bf16.mxu0 %v2655
        %2709 = vmatpush1.bf16.msra.mxu0 %v2654
        %2710 = vmatprep.subr.bf16.mxu0 %v2651
        %2711 = vmatpush1.bf16.msra.mxu0 %v2650
        %2712 = vmatprep.subr.bf16.mxu0 %v2647
        %2713 = vmatpush1.bf16.msra.mxu0 %v2646
        %2714 = vmatprep.subr.bf16.mxu0 %v2643
        %2715 = vmatpush1.bf16.msra.mxu0 %v2642
        %2716 = vmatprep.subr.bf16.mxu0 %v2639
        %2717 = vmatpush1.bf16.msra.mxu0 %v2638
        %2718 = vmatprep.subr.bf16.mxu0 0
        %2719 = vmatpush2.bf16.msra.mxu0 0
        %2720 = vmatprep.subr.bf16.mxu0 0
        %2721 = vmatpush2.bf16.msra.mxu0 0
        %2722 = vmatprep.subr.bf16.mxu0 0
        %2723 = vmatpush2.bf16.msra.mxu0 0
        %2724 = vmatprep.subr.bf16.mxu0 0
        %2725 = vmatpush2.bf16.msra.mxu0 0
        %2726 = vmatprep.subr.bf16.mxu0 0
        %2727 = vmatpush2.bf16.msra.mxu0 0
        %2728 = vmatprep.subr.bf16.mxu0 0
        %2729 = vmatpush2.bf16.msra.mxu0 0
        %2730 = vmatprep.subr.bf16.mxu0 0
        %2731 = vmatpush2.bf16.msra.mxu0 0
        %2732 = vmatprep.subr.bf16.mxu0 0
        %2733 = vmatpush2.bf16.msra.mxu0 0
        %2734 = vmatprep.mubr.bf16.mxu0 0
        %2735 = vmatmul.mubr.bf16.gmra.mxu0 %v2509
        %v2736 = vpop.f32.mrf.mxu0
        %v2737 = vadd.f32 0.0, %v2736
        %v2738 = vpop.f32.mrf.mxu0
        %v2739 = vadd.f32 0.0, %v2738
        %v2740 = vpop.f32.mrf.mxu0
        %v2741 = vadd.f32 0.0, %v2740
        %v2742 = vpop.f32.mrf.mxu0
        %v2743 = vadd.f32 0.0, %v2742
        %2744 = vdwg.mxu0
        %2745 = vmatprep.subr.bf16.mxu0 %v2669
        %2746 = vmatpush1.bf16.msra.mxu0 %v2668
        %2747 = vmatprep.subr.bf16.mxu0 %v2665
        %2748 = vmatpush1.bf16.msra.mxu0 %v2664
        %2749 = vmatprep.subr.bf16.mxu0 %v2661
        %2750 = vmatpush1.bf16.msra.mxu0 %v2660
        %2751 = vmatprep.subr.bf16.mxu0 %v2657
        %2752 = vmatpush1.bf16.msra.mxu0 %v2656
        %2753 = vmatprep.subr.bf16.mxu0 %v2653
        %2754 = vmatpush1.bf16.msra.mxu0 %v2652
        %2755 = vmatprep.subr.bf16.mxu0 %v2649
        %2756 = vmatpush1.bf16.msra.mxu0 %v2648
        %2757 = vmatprep.subr.bf16.mxu0 %v2645
        %2758 = vmatpush1.bf16.msra.mxu0 %v2644
        %2759 = vmatprep.subr.bf16.mxu0 %v2641
        %2760 = vmatpush1.bf16.msra.mxu0 %v2640
        %2761 = vmatprep.subr.bf16.mxu0 0
        %2762 = vmatpush2.bf16.msra.mxu0 0
        %2763 = vmatprep.subr.bf16.mxu0 0
        %2764 = vmatpush2.bf16.msra.mxu0 0
        %2765 = vmatprep.subr.bf16.mxu0 0
        %2766 = vmatpush2.bf16.msra.mxu0 0
        %2767 = vmatprep.subr.bf16.mxu0 0
        %2768 = vmatpush2.bf16.msra.mxu0 0
        %2769 = vmatprep.subr.bf16.mxu0 0
        %2770 = vmatpush2.bf16.msra.mxu0 0
        %2771 = vmatprep.subr.bf16.mxu0 0
        %2772 = vmatpush2.bf16.msra.mxu0 0
        %2773 = vmatprep.subr.bf16.mxu0 0
        %2774 = vmatpush2.bf16.msra.mxu0 0
        %2775 = vmatprep.subr.bf16.mxu0 0
        %2776 = vmatpush2.bf16.msra.mxu0 0
        %2777 = vmatprep.mubr.bf16.mxu0 0
        %2778 = vmatmul.mubr.bf16.gmra.mxu0 %v2509
        %v2779 = vpop.f32.mrf.mxu0
        %v2780 = vadd.f32 0.0, %v2779
        %v2781 = vpop.f32.mrf.mxu0
        %v2782 = vadd.f32 0.0, %v2781
        %v2783 = vpop.f32.mrf.mxu0
        %v2784 = vadd.f32 0.0, %v2783
        %v2785 = vpop.f32.mrf.mxu0
        %v2786 = vadd.f32 0.0, %v2785
        %2787 = vdwg.mxu0
        %v2788 = vxor.u32 %v2737, 2147483648
        %v2789 = vxor.u32 %v2739, 2147483648
        %v2790 = vxor.u32 %v2741, 2147483648
        %v2791 = vxor.u32 %v2743, 2147483648
        %v2792 = vmul.f32 %v2788, 1.442695
        %v2793 = vpow.pop %v2792
        %v2794 = vmul.f32 %v2789, 1.442695
        %v2795 = vpow.pop %v2794
        %v2796 = vmul.f32 %v2790, 1.442695
        %v2797 = vpow.pop %v2796
        %v2798 = vmul.f32 %v2791, 1.442695
        %v2799 = vpow.pop %v2798
        %v2800 = vadd.f32 %v2793, 1.0
        %v2801 = vadd.f32 %v2795, 1.0
        %v2802 = vadd.f32 %v2797, 1.0
        %v2803 = vadd.f32 %v2799, 1.0
        %v2804 = vrcp.pop %v2800
        %v2805 = vmul.f32 1.0, %v2804
        %v2806 = vrcp.pop %v2801
        %v2807 = vmul.f32 1.0, %v2806
        %v2808 = vrcp.pop %v2802
        %v2809 = vmul.f32 1.0, %v2808
        %v2810 = vrcp.pop %v2803
        %v2811 = vmul.f32 1.0, %v2810
        %v2812 = vmul.f32 %v2737, %v2805
        %v2813 = vmul.f32 %v2739, %v2807
        %v2814 = vmul.f32 %v2741, %v2809
        %v2815 = vmul.f32 %v2743, %v2811
        %v2816 = vmul.f32 %v2812, %v2780
        %v2817 = vmul.f32 %v2813, %v2782
        %v2818 = vmul.f32 %v2814, %v2784
        %v2819 = vmul.f32 %v2815, %v2786
        %v2820 = vpack.c.bf16 %v2818, %v2816
        %v2821 = vpack.c.bf16 %v2819, %v2817
        %v2822 = vld [vmem:[%s520] sm:$0xf]
        %v2823 = vld [vmem:[%s520 + $0x4] sm:$0xf]
        %v2824 = vld [vmem:[%s520 + $0x8] sm:$0xf]
        %v2825 = vld [vmem:[%s520 + $0xc] sm:$0xf]
        %v2826 = vld [vmem:[%s520 + $0x10] sm:$0xf]
        %v2827 = vld [vmem:[%s520 + $0x14] sm:$0xf]
        %v2828 = vld [vmem:[%s520 + $0x18] sm:$0xf]
        %v2829 = vld [vmem:[%s520 + $0x1c] sm:$0xf]
        %v2830 = vld [vmem:[%s520 + $0x20] sm:$0xf]
        %v2831 = vld [vmem:[%s520 + $0x24] sm:$0xf]
        %v2832 = vld [vmem:[%s520 + $0x28] sm:$0xf]
        %v2833 = vld [vmem:[%s520 + $0x2c] sm:$0xf]
        %v2834 = vld [vmem:[%s520 + $0x30] sm:$0xf]
        %v2835 = vld [vmem:[%s520 + $0x34] sm:$0xf]
        %v2836 = vld [vmem:[%s520 + $0x38] sm:$0xf]
        %v2837 = vld [vmem:[%s520 + $0x3c] sm:$0xf]
        %v2838 = vld [vmem:[%s520 + $0x40] sm:$0xf]
        %v2839 = vld [vmem:[%s520 + $0x44] sm:$0xf]
        %v2840 = vld [vmem:[%s520 + $0x48] sm:$0xf]
        %v2841 = vld [vmem:[%s520 + $0x4c] sm:$0xf]
        %v2842 = vld [vmem:[%s520 + $0x50] sm:$0xf]
        %v2843 = vld [vmem:[%s520 + $0x54] sm:$0xf]
        %v2844 = vld [vmem:[%s520 + $0x58] sm:$0xf]
        %v2845 = vld [vmem:[%s520 + $0x5c] sm:$0xf]
        %v2846 = vld [vmem:[%s520 + $0x60] sm:$0xf]
        %v2847 = vld [vmem:[%s520 + $0x64] sm:$0xf]
        %v2848 = vld [vmem:[%s520 + $0x68] sm:$0xf]
        %v2849 = vld [vmem:[%s520 + $0x6c] sm:$0xf]
        %v2850 = vld [vmem:[%s520 + $0x70] sm:$0xf]
        %v2851 = vld [vmem:[%s520 + $0x74] sm:$0xf]
        %v2852 = vld [vmem:[%s520 + $0x78] sm:$0xf]
        %v2853 = vld [vmem:[%s520 + $0x7c] sm:$0xf]
        %v2886 = vunpack.c.l.b16 %v2822
        %v2887 = vunpack.c.l.b16 %v2823
        %v2888 = vunpack.c.l.b16 %v2824
        %v2889 = vunpack.c.l.b16 %v2825
        %v2890 = vunpack.c.l.b16 %v2826
        %v2891 = vunpack.c.l.b16 %v2827
        %v2892 = vunpack.c.l.b16 %v2828
        %v2893 = vunpack.c.l.b16 %v2829
        %v2894 = vunpack.c.l.b16 %v2830
        %v2895 = vunpack.c.l.b16 %v2831
        %v2896 = vunpack.c.l.b16 %v2832
        %v2897 = vunpack.c.l.b16 %v2833
        %v2898 = vunpack.c.l.b16 %v2834
        %v2899 = vunpack.c.l.b16 %v2835
        %v2900 = vunpack.c.l.b16 %v2836
        %v2901 = vunpack.c.l.b16 %v2837
        %v2902 = vunpack.c.l.b16 %v2838
        %v2903 = vunpack.c.l.b16 %v2839
        %v2904 = vunpack.c.l.b16 %v2840
        %v2905 = vunpack.c.l.b16 %v2841
        %v2906 = vunpack.c.l.b16 %v2842
        %v2907 = vunpack.c.l.b16 %v2843
        %v2908 = vunpack.c.l.b16 %v2844
        %v2909 = vunpack.c.l.b16 %v2845
        %v2910 = vunpack.c.l.b16 %v2846
        %v2911 = vunpack.c.l.b16 %v2847
        %v2912 = vunpack.c.l.b16 %v2848
        %v2913 = vunpack.c.l.b16 %v2849
        %v2914 = vunpack.c.l.b16 %v2850
        %v2915 = vunpack.c.l.b16 %v2851
        %v2916 = vunpack.c.l.b16 %v2852
        %v2917 = vunpack.c.l.b16 %v2853
        %v2918 = vpack.c.b16 %v2887, %v2886
        %v2919 = vpack.c.b16 %v2889, %v2888
        %v2920 = vpack.c.b16 %v2891, %v2890
        %v2921 = vpack.c.b16 %v2893, %v2892
        %v2922 = vpack.c.b16 %v2895, %v2894
        %v2923 = vpack.c.b16 %v2897, %v2896
        %v2924 = vpack.c.b16 %v2899, %v2898
        %v2925 = vpack.c.b16 %v2901, %v2900
        %v2926 = vpack.c.b16 %v2903, %v2902
        %v2927 = vpack.c.b16 %v2905, %v2904
        %v2928 = vpack.c.b16 %v2907, %v2906
        %v2929 = vpack.c.b16 %v2909, %v2908
        %v2930 = vpack.c.b16 %v2911, %v2910
        %v2931 = vpack.c.b16 %v2913, %v2912
        %v2932 = vpack.c.b16 %v2915, %v2914
        %v2933 = vpack.c.b16 %v2917, %v2916
        %2950 = vmatprep.subr.bf16.mxu0 0
        %2951 = vmatpush1.bf16.msra.mxu0 %v2925
        %2952 = vmatprep.subr.bf16.mxu0 0
        %2953 = vmatpush1.bf16.msra.mxu0 %v2924
        %2954 = vmatprep.subr.bf16.mxu0 0
        %2955 = vmatpush1.bf16.msra.mxu0 %v2923
        %2956 = vmatprep.subr.bf16.mxu0 0
        %2957 = vmatpush1.bf16.msra.mxu0 %v2922
        %2958 = vmatprep.subr.bf16.mxu0 0
        %2959 = vmatpush1.bf16.msra.mxu0 %v2921
        %2960 = vmatprep.subr.bf16.mxu0 0
        %2961 = vmatpush1.bf16.msra.mxu0 %v2920
        %2962 = vmatprep.subr.bf16.mxu0 0
        %2963 = vmatpush1.bf16.msra.mxu0 %v2919
        %2964 = vmatprep.subr.bf16.mxu0 0
        %2965 = vmatpush1.bf16.msra.mxu0 %v2918
        %2966 = vmatprep.subr.bf16.mxu0 0
        %2967 = vmatpush2.bf16.msra.mxu0 %v2933
        %2968 = vmatprep.subr.bf16.mxu0 0
        %2969 = vmatpush2.bf16.msra.mxu0 %v2932
        %2970 = vmatprep.subr.bf16.mxu0 0
        %2971 = vmatpush2.bf16.msra.mxu0 %v2931
        %2972 = vmatprep.subr.bf16.mxu0 0
        %2973 = vmatpush2.bf16.msra.mxu0 %v2930
        %2974 = vmatprep.subr.bf16.mxu0 0
        %2975 = vmatpush2.bf16.msra.mxu0 %v2929
        %2976 = vmatprep.subr.bf16.mxu0 0
        %2977 = vmatpush2.bf16.msra.mxu0 %v2928
        %2978 = vmatprep.subr.bf16.mxu0 0
        %2979 = vmatpush2.bf16.msra.mxu0 %v2927
        %2980 = vmatprep.subr.bf16.mxu0 0
        %2981 = vmatpush2.bf16.msra.mxu0 %v2926
        %2982 = vmatprep.mubr.bf16.mxu0 %v2821
        %2983 = vmatmul.mubr.bf16.gmra.mxu0 %v2820
        %v2984 = vpop.f32.mrf.mxu0
        %v2985 = vadd.f32 0.0, %v2984
        %v2986 = vpop.f32.mrf.mxu0
        %v2987 = vpop.f32.mrf.mxu0
        %v2988 = vadd.f32 0.0, %v2987
        %v2989 = vpop.f32.mrf.mxu0
        %2990 = vdwg.mxu0
        %v2991 = vadd.f32 %v2485, %v2985
        %v2992 = vadd.f32 %v2486, %v2988
        %2993 = vst [vmem:[#allocation2] sm:$0xff] %v2991
        %2994 = vst [vmem:[#allocation2 + $0x8] sm:$0xff] %v2992
        %p2995 = scmp.eq.s32.totalorder %s27, 1
        // Predicated region
        $region101: #{forward.1} parent=67 // pred_check
          %p2996 = pneg %p2995
        $region102: #{forward.1} parent=67 // pred_check_branch
          %2998 = sbr.rel (%p2996) target = $region104
        $region103: #{forward.1} parent=67 // pred_region
          %v2999 = vmul.f32 %v2991, %v2991
          %v3000 = vmul.f32 %v2992, %v2992
          %3001 = vadd.xlane.f32.xlu0 %v2999
          %v3002 = vpop.xlane.xlu0 %3001
          %3003 = vadd.xlane.f32.xlu0 %v3000
          %v3004 = vpop.xlane.xlu0 %3003
          %v3005 = vmul.f32 %v3002, %v615
          %v3006 = vmul.f32 %v3004, %v615
          %v3007 = vadd.f32 %v3005, 1e-06
          %v3008 = vadd.f32 %v3006, 1e-06
          %v3009 = vrsqrt.pop %v3007
          %v3010 = vrsqrt.pop %v3008
          %v3011 = vmul.f32 %v2991, %v3009
          %v3012 = vmul.f32 %v2992, %v3010
          %v3013 = vld [vmem:[#allocation11] sm:$0x1]
          %v3014 = vunpack.c.l.bf16 %v3013
          %v3015 = vlaneseq
          %v3016 = vshrl.u32 %v3015, 7
          %v3017 = vsub.s32 0, %v3016
          %v3018 = vrot.slane %v3014, %v3017
          %v3019 = vmul.f32 %v3011, %v3018
          %v3020 = vmul.f32 %v3012, %v3018
          %v3021 = vpack.c.bf16 %v3020, %v3019
          %v3022 = vld [vmem:[#allocation12] sm:$0xff]
          %v3023 = vld [vmem:[#allocation12 + $0x8] sm:$0xff]
          %v3024 = vld [vmem:[#allocation12 + $0x10] sm:$0xff]
          %v3025 = vld [vmem:[#allocation12 + $0x18] sm:$0xff]
          %v3026 = vld [vmem:[#allocation12 + $0x20] sm:$0xff]
          %v3027 = vld [vmem:[#allocation12 + $0x28] sm:$0xff]
          %v3028 = vld [vmem:[#allocation12 + $0x30] sm:$0xff]
          %v3029 = vld [vmem:[#allocation12 + $0x38] sm:$0xff]
          %v3030 = vld [vmem:[#allocation12 + $0x40] sm:$0xff]
          %v3031 = vld [vmem:[#allocation12 + $0x48] sm:$0xff]
          %v3032 = vld [vmem:[#allocation12 + $0x50] sm:$0xff]
          %v3033 = vld [vmem:[#allocation12 + $0x58] sm:$0xff]
          %v3034 = vld [vmem:[#allocation12 + $0x60] sm:$0xff]
          %v3035 = vld [vmem:[#allocation12 + $0x68] sm:$0xff]
          %v3036 = vld [vmem:[#allocation12 + $0x70] sm:$0xff]
          %v3037 = vld [vmem:[#allocation12 + $0x78] sm:$0xff]
          %v3054 = vunpack.c.l.b16 %v3022
          %v3055 = vunpack.c.h.b16 %v3022
          %v3056 = vunpack.c.l.b16 %v3023
          %v3057 = vunpack.c.h.b16 %v3023
          %v3058 = vunpack.c.l.b16 %v3024
          %v3059 = vunpack.c.h.b16 %v3024
          %v3060 = vunpack.c.l.b16 %v3025
          %v3061 = vunpack.c.h.b16 %v3025
          %v3062 = vunpack.c.l.b16 %v3026
          %v3063 = vunpack.c.h.b16 %v3026
          %v3064 = vunpack.c.l.b16 %v3027
          %v3065 = vunpack.c.h.b16 %v3027
          %v3066 = vunpack.c.l.b16 %v3028
          %v3067 = vunpack.c.h.b16 %v3028
          %v3068 = vunpack.c.l.b16 %v3029
          %v3069 = vunpack.c.h.b16 %v3029
          %v3070 = vunpack.c.l.b16 %v3030
          %v3071 = vunpack.c.h.b16 %v3030
          %v3072 = vunpack.c.l.b16 %v3031
          %v3073 = vunpack.c.h.b16 %v3031
          %v3074 = vunpack.c.l.b16 %v3032
          %v3075 = vunpack.c.h.b16 %v3032
          %v3076 = vunpack.c.l.b16 %v3033
          %v3077 = vunpack.c.h.b16 %v3033
          %v3078 = vunpack.c.l.b16 %v3034
          %v3079 = vunpack.c.h.b16 %v3034
          %v3080 = vunpack.c.l.b16 %v3035
          %v3081 = vunpack.c.h.b16 %v3035
          %v3082 = vunpack.c.l.b16 %v3036
          %v3083 = vunpack.c.h.b16 %v3036
          %v3084 = vunpack.c.l.b16 %v3037
          %v3085 = vunpack.c.h.b16 %v3037
          %v3086 = vpack.c.b16 %v3056, %v3054
          %v3087 = vpack.c.b16 %v3057, %v3055
          %v3088 = vpack.c.b16 %v3060, %v3058
          %v3089 = vpack.c.b16 %v3061, %v3059
          %v3090 = vpack.c.b16 %v3064, %v3062
          %v3091 = vpack.c.b16 %v3065, %v3063
          %v3092 = vpack.c.b16 %v3068, %v3066
          %v3093 = vpack.c.b16 %v3069, %v3067
          %v3094 = vpack.c.b16 %v3072, %v3070
          %v3095 = vpack.c.b16 %v3073, %v3071
          %v3096 = vpack.c.b16 %v3076, %v3074
          %v3097 = vpack.c.b16 %v3077, %v3075
          %v3098 = vpack.c.b16 %v3080, %v3078
          %v3099 = vpack.c.b16 %v3081, %v3079
          %v3100 = vpack.c.b16 %v3084, %v3082
          %v3101 = vpack.c.b16 %v3085, %v3083
          %3118 = vmatprep.subr.bf16.mxu0 %v3101
          %3119 = vmatpush1.bf16.msra.mxu0 %v3100
          %3120 = vmatprep.subr.bf16.mxu0 %v3099
          %3121 = vmatpush1.bf16.msra.mxu0 %v3098
          %3122 = vmatprep.subr.bf16.mxu0 %v3097
          %3123 = vmatpush1.bf16.msra.mxu0 %v3096
          %3124 = vmatprep.subr.bf16.mxu0 %v3095
          %3125 = vmatpush1.bf16.msra.mxu0 %v3094
          %3126 = vmatprep.subr.bf16.mxu0 %v3093
          %3127 = vmatpush1.bf16.msra.mxu0 %v3092
          %3128 = vmatprep.subr.bf16.mxu0 %v3091
          %3129 = vmatpush1.bf16.msra.mxu0 %v3090
          %3130 = vmatprep.subr.bf16.mxu0 %v3089
          %3131 = vmatpush1.bf16.msra.mxu0 %v3088
          %3132 = vmatprep.subr.bf16.mxu0 %v3087
          %3133 = vmatpush1.bf16.msra.mxu0 %v3086
          %3134 = vmatprep.subr.bf16.mxu0 0
          %3135 = vmatpush2.bf16.msra.mxu0 0
          %3136 = vmatprep.subr.bf16.mxu0 0
          %3137 = vmatpush2.bf16.msra.mxu0 0
          %3138 = vmatprep.subr.bf16.mxu0 0
          %3139 = vmatpush2.bf16.msra.mxu0 0
          %3140 = vmatprep.subr.bf16.mxu0 0
          %3141 = vmatpush2.bf16.msra.mxu0 0
          %3142 = vmatprep.subr.bf16.mxu0 0
          %3143 = vmatpush2.bf16.msra.mxu0 0
          %3144 = vmatprep.subr.bf16.mxu0 0
          %3145 = vmatpush2.bf16.msra.mxu0 0
          %3146 = vmatprep.subr.bf16.mxu0 0
          %3147 = vmatpush2.bf16.msra.mxu0 0
          %3148 = vmatprep.subr.bf16.mxu0 0
          %3149 = vmatpush2.bf16.msra.mxu0 0
          %3150 = vmatprep.mubr.bf16.mxu0 0
          %3151 = vmatmul.mubr.bf16.gmra.mxu0 %v3021
          %v3152 = vpop.f32.mrf.mxu0
          %v3153 = vadd.f32 0.0, %v3152
          %v3154 = vpop.f32.mrf.mxu0
          %v3155 = vadd.f32 0.0, %v3154
          %v3156 = vpop.f32.mrf.mxu0
          %v3157 = vadd.f32 0.0, %v3156
          %v3158 = vpop.f32.mrf.mxu0
          %v3159 = vadd.f32 0.0, %v3158
          %3160 = vdwg.mxu0
          %3161 = vst [vmem:[#allocation14] sm:$0xff] %v3153
          %3162 = vst [vmem:[#allocation14 + $0x8] sm:$0xff] %v3155
          %3163 = vst [vmem:[#allocation14 + $0x10] sm:$0xff] %v3157
          %3164 = vst [vmem:[#allocation14 + $0x18] sm:$0xff] %v3159
        $region104: #{forward.1} parent=67 // pred_fallthru
          _
        // Predicated region
        $region105: #{forward.1} parent=67 // pred_check
          %p3165 = pneg %p322
        $region106: #{forward.1} parent=67 // pred_check_branch
          %3167 = sbr.rel (%p3165) target = $region108
        $region107: #{forward.1} parent=67 // pred_region
          %s3169 = ssub.s32 512, 512
          %3170 = vsyncadd [#allocation5], %s3169
          %s3171 = sshll.u32 [#allocation14], 4
          %s3172 = int_to_ptr.vmem [resolvable:$true] %s3171
          %3177 = dma.vmem_to_hbm [thread:$0]  %s3172, 512, %s12, [#allocation5], 256, 256, 16
        $region108: #{forward.1} parent=67 // pred_fallthru
          _
        // Predicated region
        $region109: #{forward.1} parent=67 // pred_check
          %p3178 = pneg %p322
        $region110: #{forward.1} parent=67 // pred_check_branch
          %3180 = sbr.rel (%p3178) target = $region112
        $region111: #{forward.1} parent=67 // pred_region
          %3181 = dma.done [#allocation5], 512
        $region112: #{forward.1} parent=67 // pred_fallthru
          _
      $region68: #{forward.1} parent=5 // pred_fallthru
        _
      %p3182 = scmp.le.s32.totalorder 2, %s22
      // Predicated region
      $region113: #{forward.1} parent=5 // pred_check
        %p3183 = pneg %p3182
      $region114: #{forward.1} parent=5 // pred_check_branch
        %3185 = sbr.rel (%p3183) target = $region116
      $region115: #{forward.1} parent=5 // pred_region
        %s3186 = ssub.s32 %s22, 2
      $region116: #{forward.1} parent=5 // pred_fallthru
        _
    $region6: #{forward.1} parent=1 // loop_footer
      %s26 = sadd.s32 1, %s22
    $region7: #{forward.1} parent=1 // loop_footer_branch
      %21 = sbr.rel target = $region3
    $region8: #{forward.1} parent=1 // loop_exit
      _
    %3187 = vsyncpa [#allocation4], 1
    %s3188 = scalar_lea.sflag [#allocation4], 1
    %3189 = vsyncpa %s3188, 1
    %3190 = vsyncpa [#allocation7], 1
    %3191 = vsyncpa [#allocation13], 1
    %3192 = vsyncpa [#allocation5], 1
    %s3193 = scalar_lea.sflag [#allocation5], 1
    %3194 = vsyncpa %s3193, 1

</llo_original>
